<compile_context>
chip_gen: v7x
topology: tpu7x:2x2x1
jax: 0.10.0
libtpu: 0.0.40
codegen_flags: <defaults>
</compile_context>

<pallas_src>
import functools
import math

import jax
import jax.numpy as jnp
import numpy as np
from jax.experimental import pallas as pl
from jax.experimental.pallas import tpu as pltpu


# ----------------------------------------------------------------------------
# Whole-model fused kernel (gridless, everything resident in VMEM)
# ----------------------------------------------------------------------------

def _dyneformer_kernel(enc_ref, dec_ref, tf_ref, tft_ref, sc_ref,
                       f_ref, b_ref, o_ref, *, lay_f, lay_b, n_enc, n_dec):
    f32 = jnp.float32
    bf16 = jnp.bfloat16

    # static-slice views into the packed slabs
    def gf(name):
        r0, r, c = lay_f[name]
        return f_ref[r0:r0 + r, 0:c]

    def gb(name):
        r0, r, c = lay_b[name]
        return b_ref[r0:r0 + r, 0:c]

    def mm(a, w):
        return jnp.dot(a.astype(bf16), w.astype(bf16),
                       preferred_element_type=f32)

    def mm_t(a, b):
        # a @ b.T without materializing a transpose.
        return jax.lax.dot_general(a.astype(bf16), b.astype(bf16),
                                   (((1,), (1,)), ((), ())),
                                   preferred_element_type=f32)

    def lin(x, wn, bn):
        return mm(x, gb(wn)) + gf(bn)

    def softmax_last(x):
        m = jnp.max(x, axis=-1, keepdims=True)
        e = jnp.exp(x - m)
        return e * pl.reciprocal(jnp.sum(e, axis=-1, keepdims=True), approx=True)

    def layernorm(x, gn, bn):
        mu = jnp.mean(x, axis=-1, keepdims=True)
        var = jnp.mean(jnp.square(x - mu), axis=-1, keepdims=True)
        return (x - mu) * jax.lax.rsqrt(var + 1e-5) * gf(gn) + gf(bn)

    enc_x = enc_ref[...]          # (B*Se, Fi)
    dec_x = dec_ref[...]          # (B*Sd, Fi)
    tf = tf_ref[...]              # (Se, Tf)
    tft = tft_ref[...]            # (B*Se, Tf)  time feature tiled per batch
    sc = sc_ref[...]              # (B, Ds)

    mask_enc = gf('mask_enc')
    mask_dec = gf('mask_dec')
    mask_cross = gf('mask_cross')

    def attention(xq, xkv, mask, wqk_n, wvo_n):
        # fused weights: s = xq @ (Wq Wk^T * scale) @ xkv^T ; out = p @ (xkv @ Wv Wo)
        s = mm_t(mm(xq, gb(wqk_n)), xkv) + mask
        p = softmax_last(s)
        return mm(p, mm(xkv, gb(wvo_n)))

    def sa_layer(src, expand_n):
        key = softmax_last(lin(src, 'sa_fs_w', 'sa_fs_b'))
        v = lin(sc, 'sa_se_w', 'sa_se_b')            # (B, Dw)
        fuse = key * mm(gb(expand_n), v)             # broadcast v[b] over its rows
        return layernorm(src + fuse, 'sa_n_g', 'sa_n_b')

    def encoder_layer(x, i):
        p = f'enc{i}_'
        a = attention(x, x, mask_enc, p + 'wqk', p + 'wvo')
        x = layernorm(x + a, p + 'n1_g', p + 'n1_b')
        h = jnp.maximum(lin(x, p + 'w1', p + 'b1'), 0.0)
        a = lin(h, p + 'w2', p + 'b2')
        return layernorm(x + a, p + 'n2_g', p + 'n2_b')

    def decoder_layer(x, enc, i):
        p = f'dec{i}_'
        a = attention(x, x, mask_dec, p + 'a1_wqk', p + 'a1_wvo')
        x = layernorm(x + a, p + 'n1_g', p + 'n1_b')
        a = attention(x, enc, mask_cross, p + 'a2_wqk', p + 'a2_wvo')
        x = layernorm(x + a, p + 'n2_g', p + 'n2_b')
        h = jnp.maximum(lin(x, p + 'w1', p + 'b1'), 0.0)
        a = lin(h, p + 'w2', p + 'b2')
        return layernorm(x + a, p + 'n3_g', p + 'n3_b')

    def gp_layer(src):
        # fused half-select + per-batch flatten(1) operator (D, Se*half)
        flat = mm(src, gb('sel_tile')) * gf('gp_block_mask')
        row_logits = mm(flat, gb('gp_fs_w'))                 # (B*Se, Tf)
        logits = mm(gb('batch_sum'), row_logits) + gf('gp_fs_b')   # (B, Tf)
        key = softmax_last(logits)
        fuse = mm(gb('expand_enc'), key) * tft               # key[b,t] * tf[s,t]
        rec = mm(fuse, gb('gp_rec_w')) + gf('gp_rec_b')
        new_src = src * gf('lo_mask') + mm(rec, gb('place_hi'))
        return key, new_src

    # ---------------- encoder side ----------------
    e = lin(enc_x, 'enc_in_w', 'enc_in_b') + gf('pe')
    e = sa_layer(e, 'expand_enc')
    e = encoder_layer(e, 0)
    key, e = gp_layer(e)
    for i in range(1, n_enc):
        e = encoder_layer(e, i)
        key, e = gp_layer(e)

    # global padding: key @ timeFeature.T  -> (B, Se)
    gpad = mm_t(key, tf)

    # ---------------- decoder side ----------------
    # dec_input[:, -osl:, 0] = gpad[:, -osl:] folded into the input projection
    # via linearity: delta_row = (new_col0 - old_col0) * dec_in_w[0, :]
    v_pad = jnp.sum(mm(gb('expand_dec'), gpad) * gf('pad_col_sel'),
                    axis=-1, keepdims=True)
    delta = gf('pad_row_mask') * (v_pad - dec_x[:, 0:1])
    d = lin(dec_x, 'dec_in_w', 'dec_in_b') + delta * gf('w_row0')

    d = sa_layer(d, 'expand_dec')
    d = decoder_layer(d, e, 0)
    for i in range(1, n_dec):
        d = decoder_layer(d, e, i)

    # out_fc as a lane-dense (1, B*Sd) row (out_w stored pre-transposed (1, D)).
    o_ref[...] = mm_t(gb('out_w_t'), d) + gf('out_b')


# ----------------------------------------------------------------------------
# Wrapper: one gridless pallas_call for the whole forward pass
# ----------------------------------------------------------------------------

def dyneformer_forward(slab_f32, slab_bf16, lay_f, lay_b,
                       x, time_feature, static_context, cfg):
    B, T, Fi = x.shape
    esl = cfg['enc_seq_len']
    Sd = cfg['dec_seq_len'] + cfg['out_seq_len']
    osl = cfg['out_seq_len']

    enc2d = x[:, :esl, :].reshape(B * esl, Fi)
    dec2d = x[:, T - Sd:, :].reshape(B * Sd, Fi)
    tf_tiled = jnp.tile(time_feature, (B, 1))

    inputs = [enc2d, dec2d, time_feature, tf_tiled, static_context,
              slab_f32, slab_bf16]

    kernel = functools.partial(
        _dyneformer_kernel, lay_f=lay_f, lay_b=lay_b,
        n_enc=cfg['n_encoder_layers'], n_dec=cfg['n_decoder_layers'])

    out_row = pl.pallas_call(
        kernel,
        out_shape=jax.ShapeDtypeStruct((1, B * Sd), jnp.float32),
        in_specs=[pl.BlockSpec(memory_space=pltpu.MemorySpace.VMEM)
                  for _ in inputs],
        out_specs=pl.BlockSpec(memory_space=pltpu.MemorySpace.VMEM),
    )(*inputs)

    return out_row.reshape(B, Sd)[:, -osl:]


# ----------------------------------------------------------------------------
# Host-side packing: all params & constants -> two contiguous VMEM slabs
# ----------------------------------------------------------------------------

def _pack_slab(leaves, dtype, sub, lane=128):
    """Stack (name, 2-D array) leaves along sublanes, pad lanes to 128, align
    each leaf's start row to `sub` (8 for f32, 16 for bf16)."""
    blocks, layout, row = [], {}, 0
    for name, arr in leaves:
        a = np.asarray(arr, np.float32)
        if a.ndim == 1:
            a = a[None, :]
        r, c = a.shape
        assert c <= lane, (name, a.shape)
        buf = np.zeros((r, lane), np.float32)
        buf[:, :c] = a
        layout[name] = (row, r, c)
        blocks.append(buf)
        row += r
        pad = (-row) % sub
        if pad:
            blocks.append(np.zeros((pad, lane), np.float32))
            row += pad
    slab = np.concatenate(blocks, axis=0)
    return jnp.asarray(slab, dtype=dtype), layout


def pack_model(params, cfg, B):
    D = cfg['dim_val']; half = D // 2
    Se = cfg['enc_seq_len']; dsl = cfg['dec_seq_len']; osl = cfg['out_seq_len']
    Sd = dsl + osl
    scale = 1.0 / math.sqrt(float(cfg['dim_attn']))
    NEG = -1e30
    A = lambda t: np.asarray(t, np.float32)

    # ---- constant operator matrices ----
    be = np.repeat(np.arange(B), Se)
    bd = np.repeat(np.arange(B), Sd)
    mask_enc = np.where(be[:, None] == be[None, :], 0.0, NEG).astype(np.float32)
    mask_dec = np.where(bd[:, None] == bd[None, :], 0.0, NEG).astype(np.float32)
    mask_cross = np.where(bd[:, None] == be[None, :], 0.0, NEG).astype(np.float32)
    expand_enc = (be[:, None] == np.arange(B)[None, :]).astype(np.float32)
    expand_dec = (bd[:, None] == np.arange(B)[None, :]).astype(np.float32)
    batch_sum = np.ascontiguousarray(expand_enc.T)          # (B, B*Se)

    sel_hi = np.zeros((D, half), np.float32)
    sel_hi[half:, :] = np.eye(half, dtype=np.float32)
    tile_half = np.tile(np.eye(half, dtype=np.float32), (1, Se))
    sel_tile = sel_hi @ tile_half                           # (D, Se*half), fused

    place_hi = np.zeros((half, D), np.float32)
    place_hi[:, half:] = np.eye(half, dtype=np.float32)
    lo_mask = np.zeros((1, D), np.float32)
    lo_mask[0, :half] = 1.0

    seq_of_rows = np.tile(np.arange(Se), B)
    block_of_cols = np.repeat(np.arange(Se), half)
    gp_block_mask = (seq_of_rows[:, None] ==
                     block_of_cols[None, :]).astype(np.float32)   # (B*Se, Se*half)

    pad_col_sel = np.zeros((B * Sd, Se), np.float32)
    pad_row_mask = np.zeros((B * Sd, 1), np.float32)
    for b in range(B):
        for j in range(osl):
            r = b * Sd + dsl + j
            pad_col_sel[r, Se - osl + j] = 1.0
            pad_row_mask[r, 0] = 1.0

    # ---- bf16 slab: every matmul operand (weights pre-fused) ----
    bleaves = [
        ('enc_in_w', A(params['enc_in_w'])),
        ('dec_in_w', A(params['dec_in_w'])),
        ('out_w_t', A(params['out_w_t'])),
        ('sa_fs_w', A(params['sa']['fs_w'])),
        ('sa_se_w', A(params['sa']['se_w'])),
        ('gp_fs_w', A(params['gp']['fs_w'])),
        ('gp_rec_w', A(params['gp']['rec_w'])),
        ('sel_tile', sel_tile), ('place_hi', place_hi),
        ('expand_enc', expand_enc), ('expand_dec', expand_dec),
        ('batch_sum', batch_sum),
    ]
    for i, lp in enumerate(params['encs']):
        wqk = A(lp['wq']) @ A(lp['wk']).T * scale
        wvo = A(lp['wv']) @ A(lp['wo'])
        bleaves += [(f'enc{i}_wqk', wqk), (f'enc{i}_wvo', wvo),
                    (f'enc{i}_w1', A(lp['w1'])), (f'enc{i}_w2', A(lp['w2']))]
    for i, lp in enumerate(params['decs']):
        for a in ('a1', 'a2'):
            wqk = A(lp[a + '_wq']) @ A(lp[a + '_wk']).T * scale
            wvo = A(lp[a + '_wv']) @ A(lp[a + '_wo'])
            bleaves += [(f'dec{i}_{a}_wqk', wqk), (f'dec{i}_{a}_wvo', wvo)]
        bleaves += [(f'dec{i}_w1', A(lp['w1'])), (f'dec{i}_w2', A(lp['w2']))]

    # ---- f32 slab: biases, layernorms, masks, elementwise constants ----
    fleaves = [
        ('pe', np.tile(A(params['pe']), (B, 1))),
        ('enc_in_b', A(params['enc_in_b'])),
        ('dec_in_b', A(params['dec_in_b'])),
        ('w_row0', A(params['dec_in_w'])[0:1, :]),
        ('out_b', A(params['out_b'])),
        ('sa_fs_b', A(params['sa']['fs_b'])), ('sa_se_b', A(params['sa']['se_b'])),
        ('sa_n_g', A(params['sa']['n_g'])), ('sa_n_b', A(params['sa']['n_b'])),
        ('gp_fs_b', A(params['gp']['fs_b'])), ('gp_rec_b', A(params['gp']['rec_b'])),
        ('mask_enc', mask_enc), ('mask_dec', mask_dec), ('mask_cross', mask_cross),
        ('lo_mask', lo_mask), ('gp_block_mask', gp_block_mask),
        ('pad_col_sel', pad_col_sel), ('pad_row_mask', pad_row_mask),
    ]
    for i, lp in enumerate(params['encs']):
        for n in ('b1', 'b2', 'n1_g', 'n1_b', 'n2_g', 'n2_b'):
            fleaves.append((f'enc{i}_{n}', A(lp[n])))
    for i, lp in enumerate(params['decs']):
        for n in ('b1', 'b2', 'n1_g', 'n1_b', 'n2_g', 'n2_b', 'n3_g', 'n3_b'):
            fleaves.append((f'dec{i}_{n}', A(lp[n])))

    slab_f32, lay_f = _pack_slab(fleaves, np.float32, sub=8)
    slab_bf16, lay_b = _pack_slab(bleaves, jnp.bfloat16, sub=16)
    return slab_f32, slab_bf16, lay_f, lay_b


# ----------------------------------------------------------------------------
# Deterministic parameter init (raw, unfused; fusion happens in pack_model)
# ----------------------------------------------------------------------------

def positional_encoding(max_len, d_model):
    pos = jnp.arange(max_len, dtype=jnp.float32)[:, None]
    div = jnp.exp(jnp.arange(0, d_model, 2, dtype=jnp.float32)
                  * (-math.log(10000.0) / d_model))
    ang = pos * div
    return jnp.stack([jnp.sin(ang), jnp.cos(ang)], axis=-1).reshape(max_len, d_model)


def init_params(key, cfg):
    D = cfg['dim_val']; Da = cfg['dim_attn']; Ff = cfg['dim_feedforward']
    Fi = cfg['input_size']; esl = cfg['enc_seq_len']
    Tf = cfg['time_feature_len']; Ds = cfg['dim_static']
    half = D // 2

    keys = list(jax.random.split(key, 256))
    kidx = [0]

    def nrm(shape, scale=0.08):
        k = keys[kidx[0]]; kidx[0] += 1
        return scale * jax.random.normal(k, shape, dtype=jnp.float32)

    def ones(n): return jnp.ones((1, n), jnp.float32)
    def zeros(n): return jnp.zeros((1, n), jnp.float32)

    def enc_layer_params():
        return dict(wq=nrm((D, Da)), wk=nrm((D, Da)), wv=nrm((D, D)), wo=nrm((D, D)),
                    w1=nrm((D, Ff)), b1=nrm((1, Ff), 0.02),
                    w2=nrm((Ff, D)), b2=nrm((1, D), 0.02),
                    n1_g=ones(D), n1_b=zeros(D),
                    n2_g=ones(D), n2_b=zeros(D))

    def dec_layer_params():
        return dict(a1_wq=nrm((D, Da)), a1_wk=nrm((D, Da)), a1_wv=nrm((D, D)), a1_wo=nrm((D, D)),
                    a2_wq=nrm((D, Da)), a2_wk=nrm((D, Da)), a2_wv=nrm((D, D)), a2_wo=nrm((D, D)),
                    w1=nrm((D, Ff)), b1=nrm((1, Ff), 0.02),
                    w2=nrm((Ff, D)), b2=nrm((1, D), 0.02),
                    n1_g=ones(D), n1_b=zeros(D),
                    n2_g=ones(D), n2_b=zeros(D),
                    n3_g=ones(D), n3_b=zeros(D))

    params = dict(
        enc_in_w=nrm((Fi, D)), enc_in_b=nrm((1, D), 0.02),
        dec_in_w=nrm((Fi, D)), dec_in_b=nrm((1, D), 0.02),
        out_w_t=nrm((1, D)), out_b=nrm((1, 1), 0.02),
        pe=positional_encoding(esl, D),
        sa=dict(fs_w=nrm((D, D)), fs_b=nrm((1, D), 0.02),
                se_w=nrm((Ds, D)), se_b=nrm((1, D), 0.02),
                n_g=ones(D), n_b=zeros(D)),
        gp=dict(fs_w=nrm((esl * half, Tf)), fs_b=nrm((1, Tf), 0.02),
                rec_w=nrm((Tf, half)), rec_b=nrm((1, half), 0.02)),
        encs=[enc_layer_params() for _ in range(cfg['n_encoder_layers'])],
        decs=[dec_layer_params() for _ in range(cfg['n_decoder_layers'])],
    )
    return params


# ----------------------------------------------------------------------------
# Main
# ----------------------------------------------------------------------------

if __name__ == "__main__":
    cfg = dict(dim_val=32, dim_attn=32, dim_feedforward=64, input_size=4,
               enc_seq_len=8, dec_seq_len=4, out_seq_len=2,
               n_encoder_layers=2, n_decoder_layers=1, n_heads=1,
               time_feature_len=16, dim_static=12)

    key = jax.random.PRNGKey(0)
    kx, ktf, ksc, kp = jax.random.split(key, 4)

    B, T = 2, 12     # T >= enc_seq_len and T >= dec_seq_len + out_seq_len
    x = jax.random.normal(kx, (B, T, cfg['input_size']), dtype=jnp.float32)
    time_feature = jax.random.normal(
        ktf, (cfg['enc_seq_len'], cfg['time_feature_len']), dtype=jnp.float32)
    static_context = jax.random.normal(
        ksc, (B, cfg['dim_static']), dtype=jnp.float32)

    params = init_params(kp, cfg)
    slab_f32, slab_bf16, lay_f, lay_b = pack_model(params, cfg, B)

    fwd = jax.jit(lambda sf, sb, a, tf, sc: dyneformer_forward(
        sf, sb, lay_f, lay_b, a, tf, sc, cfg))
    out = fwd(slab_f32, slab_bf16, x, time_feature, static_context)
    jax.block_until_ready(out)

    assert out.shape == (B, cfg['out_seq_len']), out.shape
    assert bool(jnp.all(jnp.isfinite(out)))
    print("KERNEL_OK")
</pallas_src>

<mosaic_0001>
module attributes {stable_mosaic.version = 11 : i64} {
  func.func @_dyneformer_kernel(%arg0: memref<16x4xf32, #tpu.memory_space<vmem>>, %arg1: memref<12x4xf32, #tpu.memory_space<vmem>>, %arg2: memref<8x16xf32, #tpu.memory_space<vmem>>, %arg3: memref<16x16xf32, #tpu.memory_space<vmem>>, %arg4: memref<2x12xf32, #tpu.memory_space<vmem>>, %arg5: memref<360x128xf32, #tpu.memory_space<vmem>>, %arg6: memref<880x128xbf16, #tpu.memory_space<vmem>>, %arg7: memref<1x12xf32, #tpu.memory_space<vmem>>) attributes {dimension_semantics = [], scalar_prefetch = 0 : i64, scratch_operands = 0 : i64, tpu.core_type = #tpu.core_type<tc>} {
    %c0 = arith.constant 0 : index
    %c0_0 = arith.constant 0 : index
    %0 = vector.load %arg0[%c0, %c0_0] : memref<16x4xf32, #tpu.memory_space<vmem>>, vector<16x4xf32>
    %c0_1 = arith.constant 0 : index
    %c0_2 = arith.constant 0 : index
    %1 = vector.load %arg1[%c0_1, %c0_2] : memref<12x4xf32, #tpu.memory_space<vmem>>, vector<12x4xf32>
    %c0_3 = arith.constant 0 : index
    %c0_4 = arith.constant 0 : index
    %2 = vector.load %arg2[%c0_3, %c0_4] : memref<8x16xf32, #tpu.memory_space<vmem>>, vector<8x16xf32>
    %c0_5 = arith.constant 0 : index
    %c0_6 = arith.constant 0 : index
    %3 = vector.load %arg3[%c0_5, %c0_6] : memref<16x16xf32, #tpu.memory_space<vmem>>, vector<16x16xf32>
    %c0_7 = arith.constant 0 : index
    %c0_8 = arith.constant 0 : index
    %4 = vector.load %arg4[%c0_7, %c0_8] : memref<2x12xf32, #tpu.memory_space<vmem>>, vector<2x12xf32>
    %c96 = arith.constant 96 : index
    %c0_9 = arith.constant 0 : index
    %5 = vector.load %arg5[%c96, %c0_9] : memref<360x128xf32, #tpu.memory_space<vmem>>, vector<16x16xf32>
    %c112 = arith.constant 112 : index
    %c0_10 = arith.constant 0 : index
    %6 = vector.load %arg5[%c112, %c0_10] : memref<360x128xf32, #tpu.memory_space<vmem>>, vector<12x12xf32>
    %c128 = arith.constant 128 : index
    %c0_11 = arith.constant 0 : index
    %7 = vector.load %arg5[%c128, %c0_11] : memref<360x128xf32, #tpu.memory_space<vmem>>, vector<12x16xf32>
    %c0_12 = arith.constant 0 : index
    %c0_13 = arith.constant 0 : index
    %8 = vector.load %arg6[%c0_12, %c0_13] : memref<880x128xbf16, #tpu.memory_space<vmem>>, vector<4x32xbf16>
    %9 = arith.truncf %0 : vector<16x4xf32> to vector<16x4xbf16>
    %cst = arith.constant dense<0.000000e+00> : vector<16x32xf32>
    %10 = tpu.matmul %9, %8, %cst {dimension_numbers = #tpu.dot_dimension_numbers<[1], [0], [0], [1], [0, 0, 1, 1], [], []>} : vector<16x4xbf16>, vector<4x32xbf16>, vector<16x32xf32> -> vector<16x32xf32>
    %c16 = arith.constant 16 : index
    %c0_14 = arith.constant 0 : index
    %11 = vector.load %arg5[%c16, %c0_14] : memref<360x128xf32, #tpu.memory_space<vmem>>, vector<1x32xf32>
    %12 = vector.broadcast %11 : vector<1x32xf32> to vector<16x32xf32>
    %13 = arith.addf %10, %12 : vector<16x32xf32>
    %c0_15 = arith.constant 0 : index
    %c0_16 = arith.constant 0 : index
    %14 = vector.load %arg5[%c0_15, %c0_16] : memref<360x128xf32, #tpu.memory_space<vmem>>, vector<16x32xf32>
    %15 = arith.addf %13, %14 : vector<16x32xf32>
    %c48 = arith.constant 48 : index
    %c0_17 = arith.constant 0 : index
    %16 = vector.load %arg6[%c48, %c0_17] : memref<880x128xbf16, #tpu.memory_space<vmem>>, vector<32x32xbf16>
    %17 = arith.truncf %15 : vector<16x32xf32> to vector<16x32xbf16>
    %cst_18 = arith.constant dense<0.000000e+00> : vector<16x32xf32>
    %18 = tpu.matmul %17, %16, %cst_18 {dimension_numbers = #tpu.dot_dimension_numbers<[1], [0], [0], [1], [0, 0, 1, 1], [], []>} : vector<16x32xbf16>, vector<32x32xbf16>, vector<16x32xf32> -> vector<16x32xf32>
    %c48_19 = arith.constant 48 : index
    %c0_20 = arith.constant 0 : index
    %19 = vector.load %arg5[%c48_19, %c0_20] : memref<360x128xf32, #tpu.memory_space<vmem>>, vector<1x32xf32>
    %20 = vector.broadcast %19 : vector<1x32xf32> to vector<16x32xf32>
    %21 = arith.addf %18, %20 : vector<16x32xf32>
    %cst_21 = arith.constant dense<0xFF800000> : vector<16xf32>
    %22 = vector.multi_reduction <maximumf>, %21, %cst_21 [1] : vector<16x32xf32> to vector<16xf32>
    %23 = vector.shape_cast %22 : vector<16xf32> to vector<16x1xf32>
    %24 = vector.broadcast %23 : vector<16x1xf32> to vector<16x32xf32>
    %25 = arith.subf %21, %24 : vector<16x32xf32>
    %26 = math.exp %25 : vector<16x32xf32>
    %cst_22 = arith.constant dense<0.000000e+00> : vector<16xf32>
    %27 = vector.multi_reduction <add>, %26, %cst_22 [1] : vector<16x32xf32> to vector<16xf32>
    %28 = vector.shape_cast %27 : vector<16xf32> to vector<16x1xf32>
    %29 = tpu.reciprocal %28 {approx = true} : vector<16x1xf32> -> vector<16x1xf32>
    %30 = vector.broadcast %29 : vector<16x1xf32> to vector<16x32xf32>
    %31 = arith.mulf %26, %30 : vector<16x32xf32>
    %c80 = arith.constant 80 : index
    %c0_23 = arith.constant 0 : index
    %32 = vector.load %arg6[%c80, %c0_23] : memref<880x128xbf16, #tpu.memory_space<vmem>>, vector<12x32xbf16>
    %33 = arith.truncf %4 : vector<2x12xf32> to vector<2x12xbf16>
    %cst_24 = arith.constant dense<0.000000e+00> : vector<2x32xf32>
    %34 = tpu.matmul %33, %32, %cst_24 {dimension_numbers = #tpu.dot_dimension_numbers<[1], [0], [0], [1], [0, 0, 1, 1], [], []>} : vector<2x12xbf16>, vector<12x32xbf16>, vector<2x32xf32> -> vector<2x32xf32>
    %c56 = arith.constant 56 : index
    %c0_25 = arith.constant 0 : index
    %35 = vector.load %arg5[%c56, %c0_25] : memref<360x128xf32, #tpu.memory_space<vmem>>, vector<1x32xf32>
    %36 = vector.broadcast %35 : vector<1x32xf32> to vector<2x32xf32>
    %37 = arith.addf %34, %36 : vector<2x32xf32>
    %c288 = arith.constant 288 : index
    %c0_26 = arith.constant 0 : index
    %38 = vector.load %arg6[%c288, %c0_26] : memref<880x128xbf16, #tpu.memory_space<vmem>>, vector<16x2xbf16>
    %39 = arith.truncf %37 : vector<2x32xf32> to vector<2x32xbf16>
    %cst_27 = arith.constant dense<0.000000e+00> : vector<16x32xf32>
    %40 = tpu.matmul %38, %39, %cst_27 {dimension_numbers = #tpu.dot_dimension_numbers<[1], [0], [0], [1], [0, 0, 1, 1], [], []>} : vector<16x2xbf16>, vector<2x32xbf16>, vector<16x32xf32> -> vector<16x32xf32>
    %41 = arith.mulf %31, %40 : vector<16x32xf32>
    %42 = arith.addf %15, %41 : vector<16x32xf32>
    %cst_28 = arith.constant dense<0.000000e+00> : vector<16xf32>
    %43 = vector.multi_reduction <add>, %42, %cst_28 [1] : vector<16x32xf32> to vector<16xf32>
    %44 = vector.shape_cast %43 : vector<16xf32> to vector<16x1xf32>
    %cst_29 = arith.constant 3.200000e+01 : f32
    %45 = vector.broadcast %cst_29 : f32 to vector<16x1xf32>
    %46 = arith.divf %44, %45 : vector<16x1xf32>
    %47 = vector.broadcast %46 : vector<16x1xf32> to vector<16x32xf32>
    %48 = arith.subf %42, %47 : vector<16x32xf32>
    %49 = arith.mulf %48, %48 : vector<16x32xf32>
    %cst_30 = arith.constant dense<0.000000e+00> : vector<16xf32>
    %50 = vector.multi_reduction <add>, %49, %cst_30 [1] : vector<16x32xf32> to vector<16xf32>
    %51 = vector.shape_cast %50 : vector<16xf32> to vector<16x1xf32>
    %cst_31 = arith.constant 3.200000e+01 : f32
    %52 = vector.broadcast %cst_31 : f32 to vector<16x1xf32>
    %53 = arith.divf %51, %52 : vector<16x1xf32>
    %54 = vector.broadcast %46 : vector<16x1xf32> to vector<16x32xf32>
    %55 = arith.subf %42, %54 : vector<16x32xf32>
    %cst_32 = arith.constant 9.99999974E-6 : f32
    %56 = vector.broadcast %cst_32 : f32 to vector<16x1xf32>
    %57 = arith.addf %53, %56 : vector<16x1xf32>
    %58 = math.rsqrt %57 : vector<16x1xf32>
    %59 = vector.broadcast %58 : vector<16x1xf32> to vector<16x32xf32>
    %60 = arith.mulf %55, %59 : vector<16x32xf32>
    %c64 = arith.constant 64 : index
    %c0_33 = arith.constant 0 : index
    %61 = vector.load %arg5[%c64, %c0_33] : memref<360x128xf32, #tpu.memory_space<vmem>>, vector<1x32xf32>
    %62 = vector.broadcast %61 : vector<1x32xf32> to vector<16x32xf32>
    %63 = arith.mulf %60, %62 : vector<16x32xf32>
    %c72 = arith.constant 72 : index
    %c0_34 = arith.constant 0 : index
    %64 = vector.load %arg5[%c72, %c0_34] : memref<360x128xf32, #tpu.memory_space<vmem>>, vector<1x32xf32>
    %65 = vector.broadcast %64 : vector<1x32xf32> to vector<16x32xf32>
    %66 = arith.addf %63, %65 : vector<16x32xf32>
    %c336 = arith.constant 336 : index
    %c0_35 = arith.constant 0 : index
    %67 = vector.load %arg6[%c336, %c0_35] : memref<880x128xbf16, #tpu.memory_space<vmem>>, vector<32x32xbf16>
    %68 = arith.truncf %66 : vector<16x32xf32> to vector<16x32xbf16>
    %cst_36 = arith.constant dense<0.000000e+00> : vector<16x32xf32>
    %69 = tpu.matmul %68, %67, %cst_36 {dimension_numbers = #tpu.dot_dimension_numbers<[1], [0], [0], [1], [0, 0, 1, 1], [], []>} : vector<16x32xbf16>, vector<32x32xbf16>, vector<16x32xf32> -> vector<16x32xf32>
    %70 = arith.truncf %69 : vector<16x32xf32> to vector<16x32xbf16>
    %71 = arith.truncf %66 : vector<16x32xf32> to vector<16x32xbf16>
    %cst_37 = arith.constant dense<0.000000e+00> : vector<16x16xf32>
    %72 = tpu.matmul %70, %71, %cst_37 {dimension_numbers = #tpu.dot_dimension_numbers<[1], [1], [0], [0], [0, 0, 1, 0], [], []>} : vector<16x32xbf16>, vector<16x32xbf16>, vector<16x16xf32> -> vector<16x16xf32>
    %73 = arith.addf %72, %5 : vector<16x16xf32>
    %cst_38 = arith.constant dense<0xFF800000> : vector<16xf32>
    %74 = vector.multi_reduction <maximumf>, %73, %cst_38 [1] : vector<16x16xf32> to vector<16xf32>
    %75 = vector.shape_cast %74 : vector<16xf32> to vector<16x1xf32>
    %76 = vector.broadcast %75 : vector<16x1xf32> to vector<16x16xf32>
    %77 = arith.subf %73, %76 : vector<16x16xf32>
    %78 = math.exp %77 : vector<16x16xf32>
    %cst_39 = arith.constant dense<0.000000e+00> : vector<16xf32>
    %79 = vector.multi_reduction <add>, %78, %cst_39 [1] : vector<16x16xf32> to vector<16xf32>
    %80 = vector.shape_cast %79 : vector<16xf32> to vector<16x1xf32>
    %81 = tpu.reciprocal %80 {approx = true} : vector<16x1xf32> -> vector<16x1xf32>
    %82 = vector.broadcast %81 : vector<16x1xf32> to vector<16x16xf32>
    %83 = arith.mulf %78, %82 : vector<16x16xf32>
    %c368 = arith.constant 368 : index
    %c0_40 = arith.constant 0 : index
    %84 = vector.load %arg6[%c368, %c0_40] : memref<880x128xbf16, #tpu.memory_space<vmem>>, vector<32x32xbf16>
    %85 = arith.truncf %66 : vector<16x32xf32> to vector<16x32xbf16>
    %cst_41 = arith.constant dense<0.000000e+00> : vector<16x32xf32>
    %86 = tpu.matmul %85, %84, %cst_41 {dimension_numbers = #tpu.dot_dimension_numbers<[1], [0], [0], [1], [0, 0, 1, 1], [], []>} : vector<16x32xbf16>, vector<32x32xbf16>, vector<16x32xf32> -> vector<16x32xf32>
    %87 = arith.truncf %83 : vector<16x16xf32> to vector<16x16xbf16>
    %88 = arith.truncf %86 : vector<16x32xf32> to vector<16x32xbf16>
    %cst_42 = arith.constant dense<0.000000e+00> : vector<16x32xf32>
    %89 = tpu.matmul %87, %88, %cst_42 {dimension_numbers = #tpu.dot_dimension_numbers<[1], [0], [0], [1], [0, 0, 1, 1], [], []>} : vector<16x16xbf16>, vector<16x32xbf16>, vector<16x32xf32> -> vector<16x32xf32>
    %90 = arith.addf %66, %89 : vector<16x32xf32>
    %cst_43 = arith.constant dense<0.000000e+00> : vector<16xf32>
    %91 = vector.multi_reduction <add>, %90, %cst_43 [1] : vector<16x32xf32> to vector<16xf32>
    %92 = vector.shape_cast %91 : vector<16xf32> to vector<16x1xf32>
    %cst_44 = arith.constant 3.200000e+01 : f32
    %93 = vector.broadcast %cst_44 : f32 to vector<16x1xf32>
    %94 = arith.divf %92, %93 : vector<16x1xf32>
    %95 = vector.broadcast %94 : vector<16x1xf32> to vector<16x32xf32>
    %96 = arith.subf %90, %95 : vector<16x32xf32>
    %97 = arith.mulf %96, %96 : vector<16x32xf32>
    %cst_45 = arith.constant dense<0.000000e+00> : vector<16xf32>
    %98 = vector.multi_reduction <add>, %97, %cst_45 [1] : vector<16x32xf32> to vector<16xf32>
    %99 = vector.shape_cast %98 : vector<16xf32> to vector<16x1xf32>
    %cst_46 = arith.constant 3.200000e+01 : f32
    %100 = vector.broadcast %cst_46 : f32 to vector<16x1xf32>
    %101 = arith.divf %99, %100 : vector<16x1xf32>
    %102 = vector.broadcast %94 : vector<16x1xf32> to vector<16x32xf32>
    %103 = arith.subf %90, %102 : vector<16x32xf32>
    %cst_47 = arith.constant 9.99999974E-6 : f32
    %104 = vector.broadcast %cst_47 : f32 to vector<16x1xf32>
    %105 = arith.addf %101, %104 : vector<16x1xf32>
    %106 = math.rsqrt %105 : vector<16x1xf32>
    %107 = vector.broadcast %106 : vector<16x1xf32> to vector<16x32xf32>
    %108 = arith.mulf %103, %107 : vector<16x32xf32>
    %c216 = arith.constant 216 : index
    %c0_48 = arith.constant 0 : index
    %109 = vector.load %arg5[%c216, %c0_48] : memref<360x128xf32, #tpu.memory_space<vmem>>, vector<1x32xf32>
    %110 = vector.broadcast %109 : vector<1x32xf32> to vector<16x32xf32>
    %111 = arith.mulf %108, %110 : vector<16x32xf32>
    %c224 = arith.constant 224 : index
    %c0_49 = arith.constant 0 : index
    %112 = vector.load %arg5[%c224, %c0_49] : memref<360x128xf32, #tpu.memory_space<vmem>>, vector<1x32xf32>
    %113 = vector.broadcast %112 : vector<1x32xf32> to vector<16x32xf32>
    %114 = arith.addf %111, %113 : vector<16x32xf32>
    %c400 = arith.constant 400 : index
    %c0_50 = arith.constant 0 : index
    %115 = vector.load %arg6[%c400, %c0_50] : memref<880x128xbf16, #tpu.memory_space<vmem>>, vector<32x64xbf16>
    %116 = arith.truncf %114 : vector<16x32xf32> to vector<16x32xbf16>
    %cst_51 = arith.constant dense<0.000000e+00> : vector<16x64xf32>
    %117 = tpu.matmul %116, %115, %cst_51 {dimension_numbers = #tpu.dot_dimension_numbers<[1], [0], [0], [1], [0, 0, 1, 1], [], []>} : vector<16x32xbf16>, vector<32x64xbf16>, vector<16x64xf32> -> vector<16x64xf32>
    %c200 = arith.constant 200 : index
    %c0_52 = arith.constant 0 : index
    %118 = vector.load %arg5[%c200, %c0_52] : memref<360x128xf32, #tpu.memory_space<vmem>>, vector<1x64xf32>
    %119 = vector.broadcast %118 : vector<1x64xf32> to vector<16x64xf32>
    %120 = arith.addf %117, %119 : vector<16x64xf32>
    %cst_53 = arith.constant 0.000000e+00 : f32
    %121 = vector.broadcast %cst_53 : f32 to vector<16x64xf32>
    %122 = arith.maximumf %120, %121 : vector<16x64xf32>
    %c432 = arith.constant 432 : index
    %c0_54 = arith.constant 0 : index
    %123 = vector.load %arg6[%c432, %c0_54] : memref<880x128xbf16, #tpu.memory_space<vmem>>, vector<64x32xbf16>
    %124 = arith.truncf %122 : vector<16x64xf32> to vector<16x64xbf16>
    %cst_55 = arith.constant dense<0.000000e+00> : vector<16x32xf32>
    %125 = tpu.matmul %124, %123, %cst_55 {dimension_numbers = #tpu.dot_dimension_numbers<[1], [0], [0], [1], [0, 0, 1, 1], [], []>} : vector<16x64xbf16>, vector<64x32xbf16>, vector<16x32xf32> -> vector<16x32xf32>
    %c208 = arith.constant 208 : index
    %c0_56 = arith.constant 0 : index
    %126 = vector.load %arg5[%c208, %c0_56] : memref<360x128xf32, #tpu.memory_space<vmem>>, vector<1x32xf32>
    %127 = vector.broadcast %126 : vector<1x32xf32> to vector<16x32xf32>
    %128 = arith.addf %125, %127 : vector<16x32xf32>
    %129 = arith.addf %114, %128 : vector<16x32xf32>
    %cst_57 = arith.constant dense<0.000000e+00> : vector<16xf32>
    %130 = vector.multi_reduction <add>, %129, %cst_57 [1] : vector<16x32xf32> to vector<16xf32>
    %131 = vector.shape_cast %130 : vector<16xf32> to vector<16x1xf32>
    %cst_58 = arith.constant 3.200000e+01 : f32
    %132 = vector.broadcast %cst_58 : f32 to vector<16x1xf32>
    %133 = arith.divf %131, %132 : vector<16x1xf32>
    %134 = vector.broadcast %133 : vector<16x1xf32> to vector<16x32xf32>
    %135 = arith.subf %129, %134 : vector<16x32xf32>
    %136 = arith.mulf %135, %135 : vector<16x32xf32>
    %cst_59 = arith.constant dense<0.000000e+00> : vector<16xf32>
    %137 = vector.multi_reduction <add>, %136, %cst_59 [1] : vector<16x32xf32> to vector<16xf32>
    %138 = vector.shape_cast %137 : vector<16xf32> to vector<16x1xf32>
    %cst_60 = arith.constant 3.200000e+01 : f32
    %139 = vector.broadcast %cst_60 : f32 to vector<16x1xf32>
    %140 = arith.divf %138, %139 : vector<16x1xf32>
    %141 = vector.broadcast %133 : vector<16x1xf32> to vector<16x32xf32>
    %142 = arith.subf %129, %141 : vector<16x32xf32>
    %cst_61 = arith.constant 9.99999974E-6 : f32
    %143 = vector.broadcast %cst_61 : f32 to vector<16x1xf32>
    %144 = arith.addf %140, %143 : vector<16x1xf32>
    %145 = math.rsqrt %144 : vector<16x1xf32>
    %146 = vector.broadcast %145 : vector<16x1xf32> to vector<16x32xf32>
    %147 = arith.mulf %142, %146 : vector<16x32xf32>
    %c232 = arith.constant 232 : index
    %c0_62 = arith.constant 0 : index
    %148 = vector.load %arg5[%c232, %c0_62] : memref<360x128xf32, #tpu.memory_space<vmem>>, vector<1x32xf32>
    %149 = vector.broadcast %148 : vector<1x32xf32> to vector<16x32xf32>
    %150 = arith.mulf %147, %149 : vector<16x32xf32>
    %c240 = arith.constant 240 : index
    %c0_63 = arith.constant 0 : index
    %151 = vector.load %arg5[%c240, %c0_63] : memref<360x128xf32, #tpu.memory_space<vmem>>, vector<1x32xf32>
    %152 = vector.broadcast %151 : vector<1x32xf32> to vector<16x32xf32>
    %153 = arith.addf %150, %152 : vector<16x32xf32>
    %c240_64 = arith.constant 240 : index
    %c0_65 = arith.constant 0 : index
    %154 = vector.load %arg6[%c240_64, %c0_65] : memref<880x128xbf16, #tpu.memory_space<vmem>>, vector<32x128xbf16>
    %155 = arith.truncf %153 : vector<16x32xf32> to vector<16x32xbf16>
    %cst_66 = arith.constant dense<0.000000e+00> : vector<16x128xf32>
    %156 = tpu.matmul %155, %154, %cst_66 {dimension_numbers = #tpu.dot_dimension_numbers<[1], [0], [0], [1], [0, 0, 1, 1], [], []>} : vector<16x32xbf16>, vector<32x128xbf16>, vector<16x128xf32> -> vector<16x128xf32>
    %c152 = arith.constant 152 : index
    %c0_67 = arith.constant 0 : index
    %157 = vector.load %arg5[%c152, %c0_67] : memref<360x128xf32, #tpu.memory_space<vmem>>, vector<16x128xf32>
    %158 = arith.mulf %156, %157 : vector<16x128xf32>
    %c96_68 = arith.constant 96 : index
    %c0_69 = arith.constant 0 : index
    %159 = vector.load %arg6[%c96_68, %c0_69] : memref<880x128xbf16, #tpu.memory_space<vmem>>, vector<128x16xbf16>
    %160 = arith.truncf %158 : vector<16x128xf32> to vector<16x128xbf16>
    %cst_70 = arith.constant dense<0.000000e+00> : vector<16x16xf32>
    %161 = tpu.matmul %160, %159, %cst_70 {dimension_numbers = #tpu.dot_dimension_numbers<[1], [0], [0], [1], [0, 0, 1, 1], [], []>} : vector<16x128xbf16>, vector<128x16xbf16>, vector<16x16xf32> -> vector<16x16xf32>
    %c320 = arith.constant 320 : index
    %c0_71 = arith.constant 0 : index
    %162 = vector.load %arg6[%c320, %c0_71] : memref<880x128xbf16, #tpu.memory_space<vmem>>, vector<2x16xbf16>
    %163 = arith.truncf %161 : vector<16x16xf32> to vector<16x16xbf16>
    %cst_72 = arith.constant dense<0.000000e+00> : vector<2x16xf32>
    %164 = tpu.matmul %162, %163, %cst_72 {dimension_numbers = #tpu.dot_dimension_numbers<[1], [0], [0], [1], [0, 0, 1, 1], [], []>} : vector<2x16xbf16>, vector<16x16xbf16>, vector<2x16xf32> -> vector<2x16xf32>
    %c80_73 = arith.constant 80 : index
    %c0_74 = arith.constant 0 : index
    %165 = vector.load %arg5[%c80_73, %c0_74] : memref<360x128xf32, #tpu.memory_space<vmem>>, vector<1x16xf32>
    %166 = vector.broadcast %165 : vector<1x16xf32> to vector<2x16xf32>
    %167 = arith.addf %164, %166 : vector<2x16xf32>
    %cst_75 = arith.constant dense<0xFF800000> : vector<2xf32>
    %168 = vector.multi_reduction <maximumf>, %167, %cst_75 [1] : vector<2x16xf32> to vector<2xf32>
    %169 = vector.shape_cast %168 : vector<2xf32> to vector<2x1xf32>
    %170 = vector.broadcast %169 : vector<2x1xf32> to vector<2x16xf32>
    %171 = arith.subf %167, %170 : vector<2x16xf32>
    %172 = math.exp %171 : vector<2x16xf32>
    %cst_76 = arith.constant dense<0.000000e+00> : vector<2xf32>
    %173 = vector.multi_reduction <add>, %172, %cst_76 [1] : vector<2x16xf32> to vector<2xf32>
    %174 = vector.shape_cast %173 : vector<2xf32> to vector<2x1xf32>
    %175 = tpu.reciprocal %174 {approx = true} : vector<2x1xf32> -> vector<2x1xf32>
    %176 = vector.broadcast %175 : vector<2x1xf32> to vector<2x16xf32>
    %177 = arith.mulf %172, %176 : vector<2x16xf32>
    %c288_77 = arith.constant 288 : index
    %c0_78 = arith.constant 0 : index
    %178 = vector.load %arg6[%c288_77, %c0_78] : memref<880x128xbf16, #tpu.memory_space<vmem>>, vector<16x2xbf16>
    %179 = arith.truncf %177 : vector<2x16xf32> to vector<2x16xbf16>
    %cst_79 = arith.constant dense<0.000000e+00> : vector<16x16xf32>
    %180 = tpu.matmul %178, %179, %cst_79 {dimension_numbers = #tpu.dot_dimension_numbers<[1], [0], [0], [1], [0, 0, 1, 1], [], []>} : vector<16x2xbf16>, vector<2x16xbf16>, vector<16x16xf32> -> vector<16x16xf32>
    %181 = arith.mulf %180, %3 : vector<16x16xf32>
    %c224_80 = arith.constant 224 : index
    %c0_81 = arith.constant 0 : index
    %182 = vector.load %arg6[%c224_80, %c0_81] : memref<880x128xbf16, #tpu.memory_space<vmem>>, vector<16x16xbf16>
    %183 = arith.truncf %181 : vector<16x16xf32> to vector<16x16xbf16>
    %cst_82 = arith.constant dense<0.000000e+00> : vector<16x16xf32>
    %184 = tpu.matmul %183, %182, %cst_82 {dimension_numbers = #tpu.dot_dimension_numbers<[1], [0], [0], [1], [0, 0, 1, 1], [], []>} : vector<16x16xbf16>, vector<16x16xbf16>, vector<16x16xf32> -> vector<16x16xf32>
    %c88 = arith.constant 88 : index
    %c0_83 = arith.constant 0 : index
    %185 = vector.load %arg5[%c88, %c0_83] : memref<360x128xf32, #tpu.memory_space<vmem>>, vector<1x16xf32>
    %186 = vector.broadcast %185 : vector<1x16xf32> to vector<16x16xf32>
    %187 = arith.addf %184, %186 : vector<16x16xf32>
    %c144 = arith.constant 144 : index
    %c0_84 = arith.constant 0 : index
    %188 = vector.load %arg5[%c144, %c0_84] : memref<360x128xf32, #tpu.memory_space<vmem>>, vector<1x32xf32>
    %189 = vector.broadcast %188 : vector<1x32xf32> to vector<16x32xf32>
    %190 = arith.mulf %153, %189 : vector<16x32xf32>
    %c272 = arith.constant 272 : index
    %c0_85 = arith.constant 0 : index
    %191 = vector.load %arg6[%c272, %c0_85] : memref<880x128xbf16, #tpu.memory_space<vmem>>, vector<16x32xbf16>
    %192 = arith.truncf %187 : vector<16x16xf32> to vector<16x16xbf16>
    %cst_86 = arith.constant dense<0.000000e+00> : vector<16x32xf32>
    %193 = tpu.matmul %192, %191, %cst_86 {dimension_numbers = #tpu.dot_dimension_numbers<[1], [0], [0], [1], [0, 0, 1, 1], [], []>} : vector<16x16xbf16>, vector<16x32xbf16>, vector<16x32xf32> -> vector<16x32xf32>
    %194 = arith.addf %190, %193 : vector<16x32xf32>
    %c496 = arith.constant 496 : index
    %c0_87 = arith.constant 0 : index
    %195 = vector.load %arg6[%c496, %c0_87] : memref<880x128xbf16, #tpu.memory_space<vmem>>, vector<32x32xbf16>
    %196 = arith.truncf %194 : vector<16x32xf32> to vector<16x32xbf16>
    %cst_88 = arith.constant dense<0.000000e+00> : vector<16x32xf32>
    %197 = tpu.matmul %196, %195, %cst_88 {dimension_numbers = #tpu.dot_dimension_numbers<[1], [0], [0], [1], [0, 0, 1, 1], [], []>} : vector<16x32xbf16>, vector<32x32xbf16>, vector<16x32xf32> -> vector<16x32xf32>
    %198 = arith.truncf %197 : vector<16x32xf32> to vector<16x32xbf16>
    %199 = arith.truncf %194 : vector<16x32xf32> to vector<16x32xbf16>
    %cst_89 = arith.constant dense<0.000000e+00> : vector<16x16xf32>
    %200 = tpu.matmul %198, %199, %cst_89 {dimension_numbers = #tpu.dot_dimension_numbers<[1], [1], [0], [0], [0, 0, 1, 0], [], []>} : vector<16x32xbf16>, vector<16x32xbf16>, vector<16x16xf32> -> vector<16x16xf32>
    %201 = arith.addf %200, %5 : vector<16x16xf32>
    %cst_90 = arith.constant dense<0xFF800000> : vector<16xf32>
    %202 = vector.multi_reduction <maximumf>, %201, %cst_90 [1] : vector<16x16xf32> to vector<16xf32>
    %203 = vector.shape_cast %202 : vector<16xf32> to vector<16x1xf32>
    %204 = vector.broadcast %203 : vector<16x1xf32> to vector<16x16xf32>
    %205 = arith.subf %201, %204 : vector<16x16xf32>
    %206 = math.exp %205 : vector<16x16xf32>
    %cst_91 = arith.constant dense<0.000000e+00> : vector<16xf32>
    %207 = vector.multi_reduction <add>, %206, %cst_91 [1] : vector<16x16xf32> to vector<16xf32>
    %208 = vector.shape_cast %207 : vector<16xf32> to vector<16x1xf32>
    %209 = tpu.reciprocal %208 {approx = true} : vector<16x1xf32> -> vector<16x1xf32>
    %210 = vector.broadcast %209 : vector<16x1xf32> to vector<16x16xf32>
    %211 = arith.mulf %206, %210 : vector<16x16xf32>
    %c528 = arith.constant 528 : index
    %c0_92 = arith.constant 0 : index
    %212 = vector.load %arg6[%c528, %c0_92] : memref<880x128xbf16, #tpu.memory_space<vmem>>, vector<32x32xbf16>
    %213 = arith.truncf %194 : vector<16x32xf32> to vector<16x32xbf16>
    %cst_93 = arith.constant dense<0.000000e+00> : vector<16x32xf32>
    %214 = tpu.matmul %213, %212, %cst_93 {dimension_numbers = #tpu.dot_dimension_numbers<[1], [0], [0], [1], [0, 0, 1, 1], [], []>} : vector<16x32xbf16>, vector<32x32xbf16>, vector<16x32xf32> -> vector<16x32xf32>
    %215 = arith.truncf %211 : vector<16x16xf32> to vector<16x16xbf16>
    %216 = arith.truncf %214 : vector<16x32xf32> to vector<16x32xbf16>
    %cst_94 = arith.constant dense<0.000000e+00> : vector<16x32xf32>
    %217 = tpu.matmul %215, %216, %cst_94 {dimension_numbers = #tpu.dot_dimension_numbers<[1], [0], [0], [1], [0, 0, 1, 1], [], []>} : vector<16x16xbf16>, vector<16x32xbf16>, vector<16x32xf32> -> vector<16x32xf32>
    %218 = arith.addf %194, %217 : vector<16x32xf32>
    %cst_95 = arith.constant dense<0.000000e+00> : vector<16xf32>
    %219 = vector.multi_reduction <add>, %218, %cst_95 [1] : vector<16x32xf32> to vector<16xf32>
    %220 = vector.shape_cast %219 : vector<16xf32> to vector<16x1xf32>
    %cst_96 = arith.constant 3.200000e+01 : f32
    %221 = vector.broadcast %cst_96 : f32 to vector<16x1xf32>
    %222 = arith.divf %220, %221 : vector<16x1xf32>
    %223 = vector.broadcast %222 : vector<16x1xf32> to vector<16x32xf32>
    %224 = arith.subf %218, %223 : vector<16x32xf32>
    %225 = arith.mulf %224, %224 : vector<16x32xf32>
    %cst_97 = arith.constant dense<0.000000e+00> : vector<16xf32>
    %226 = vector.multi_reduction <add>, %225, %cst_97 [1] : vector<16x32xf32> to vector<16xf32>
    %227 = vector.shape_cast %226 : vector<16xf32> to vector<16x1xf32>
    %cst_98 = arith.constant 3.200000e+01 : f32
    %228 = vector.broadcast %cst_98 : f32 to vector<16x1xf32>
    %229 = arith.divf %227, %228 : vector<16x1xf32>
    %230 = vector.broadcast %222 : vector<16x1xf32> to vector<16x32xf32>
    %231 = arith.subf %218, %230 : vector<16x32xf32>
    %cst_99 = arith.constant 9.99999974E-6 : f32
    %232 = vector.broadcast %cst_99 : f32 to vector<16x1xf32>
    %233 = arith.addf %229, %232 : vector<16x1xf32>
    %234 = math.rsqrt %233 : vector<16x1xf32>
    %235 = vector.broadcast %234 : vector<16x1xf32> to vector<16x32xf32>
    %236 = arith.mulf %231, %235 : vector<16x32xf32>
    %c264 = arith.constant 264 : index
    %c0_100 = arith.constant 0 : index
    %237 = vector.load %arg5[%c264, %c0_100] : memref<360x128xf32, #tpu.memory_space<vmem>>, vector<1x32xf32>
    %238 = vector.broadcast %237 : vector<1x32xf32> to vector<16x32xf32>
    %239 = arith.mulf %236, %238 : vector<16x32xf32>
    %c272_101 = arith.constant 272 : index
    %c0_102 = arith.constant 0 : index
    %240 = vector.load %arg5[%c272_101, %c0_102] : memref<360x128xf32, #tpu.memory_space<vmem>>, vector<1x32xf32>
    %241 = vector.broadcast %240 : vector<1x32xf32> to vector<16x32xf32>
    %242 = arith.addf %239, %241 : vector<16x32xf32>
    %c560 = arith.constant 560 : index
    %c0_103 = arith.constant 0 : index
    %243 = vector.load %arg6[%c560, %c0_103] : memref<880x128xbf16, #tpu.memory_space<vmem>>, vector<32x64xbf16>
    %244 = arith.truncf %242 : vector<16x32xf32> to vector<16x32xbf16>
    %cst_104 = arith.constant dense<0.000000e+00> : vector<16x64xf32>
    %245 = tpu.matmul %244, %243, %cst_104 {dimension_numbers = #tpu.dot_dimension_numbers<[1], [0], [0], [1], [0, 0, 1, 1], [], []>} : vector<16x32xbf16>, vector<32x64xbf16>, vector<16x64xf32> -> vector<16x64xf32>
    %c248 = arith.constant 248 : index
    %c0_105 = arith.constant 0 : index
    %246 = vector.load %arg5[%c248, %c0_105] : memref<360x128xf32, #tpu.memory_space<vmem>>, vector<1x64xf32>
    %247 = vector.broadcast %246 : vector<1x64xf32> to vector<16x64xf32>
    %248 = arith.addf %245, %247 : vector<16x64xf32>
    %cst_106 = arith.constant 0.000000e+00 : f32
    %249 = vector.broadcast %cst_106 : f32 to vector<16x64xf32>
    %250 = arith.maximumf %248, %249 : vector<16x64xf32>
    %c592 = arith.constant 592 : index
    %c0_107 = arith.constant 0 : index
    %251 = vector.load %arg6[%c592, %c0_107] : memref<880x128xbf16, #tpu.memory_space<vmem>>, vector<64x32xbf16>
    %252 = arith.truncf %250 : vector<16x64xf32> to vector<16x64xbf16>
    %cst_108 = arith.constant dense<0.000000e+00> : vector<16x32xf32>
    %253 = tpu.matmul %252, %251, %cst_108 {dimension_numbers = #tpu.dot_dimension_numbers<[1], [0], [0], [1], [0, 0, 1, 1], [], []>} : vector<16x64xbf16>, vector<64x32xbf16>, vector<16x32xf32> -> vector<16x32xf32>
    %c256 = arith.constant 256 : index
    %c0_109 = arith.constant 0 : index
    %254 = vector.load %arg5[%c256, %c0_109] : memref<360x128xf32, #tpu.memory_space<vmem>>, vector<1x32xf32>
    %255 = vector.broadcast %254 : vector<1x32xf32> to vector<16x32xf32>
    %256 = arith.addf %253, %255 : vector<16x32xf32>
    %257 = arith.addf %242, %256 : vector<16x32xf32>
    %cst_110 = arith.constant dense<0.000000e+00> : vector<16xf32>
    %258 = vector.multi_reduction <add>, %257, %cst_110 [1] : vector<16x32xf32> to vector<16xf32>
    %259 = vector.shape_cast %258 : vector<16xf32> to vector<16x1xf32>
    %cst_111 = arith.constant 3.200000e+01 : f32
    %260 = vector.broadcast %cst_111 : f32 to vector<16x1xf32>
    %261 = arith.divf %259, %260 : vector<16x1xf32>
    %262 = vector.broadcast %261 : vector<16x1xf32> to vector<16x32xf32>
    %263 = arith.subf %257, %262 : vector<16x32xf32>
    %264 = arith.mulf %263, %263 : vector<16x32xf32>
    %cst_112 = arith.constant dense<0.000000e+00> : vector<16xf32>
    %265 = vector.multi_reduction <add>, %264, %cst_112 [1] : vector<16x32xf32> to vector<16xf32>
    %266 = vector.shape_cast %265 : vector<16xf32> to vector<16x1xf32>
    %cst_113 = arith.constant 3.200000e+01 : f32
    %267 = vector.broadcast %cst_113 : f32 to vector<16x1xf32>
    %268 = arith.divf %266, %267 : vector<16x1xf32>
    %269 = vector.broadcast %261 : vector<16x1xf32> to vector<16x32xf32>
    %270 = arith.subf %257, %269 : vector<16x32xf32>
    %cst_114 = arith.constant 9.99999974E-6 : f32
    %271 = vector.broadcast %cst_114 : f32 to vector<16x1xf32>
    %272 = arith.addf %268, %271 : vector<16x1xf32>
    %273 = math.rsqrt %272 : vector<16x1xf32>
    %274 = vector.broadcast %273 : vector<16x1xf32> to vector<16x32xf32>
    %275 = arith.mulf %270, %274 : vector<16x32xf32>
    %c280 = arith.constant 280 : index
    %c0_115 = arith.constant 0 : index
    %276 = vector.load %arg5[%c280, %c0_115] : memref<360x128xf32, #tpu.memory_space<vmem>>, vector<1x32xf32>
    %277 = vector.broadcast %276 : vector<1x32xf32> to vector<16x32xf32>
    %278 = arith.mulf %275, %277 : vector<16x32xf32>
    %c288_116 = arith.constant 288 : index
    %c0_117 = arith.constant 0 : index
    %279 = vector.load %arg5[%c288_116, %c0_117] : memref<360x128xf32, #tpu.memory_space<vmem>>, vector<1x32xf32>
    %280 = vector.broadcast %279 : vector<1x32xf32> to vector<16x32xf32>
    %281 = arith.addf %278, %280 : vector<16x32xf32>
    %c240_118 = arith.constant 240 : index
    %c0_119 = arith.constant 0 : index
    %282 = vector.load %arg6[%c240_118, %c0_119] : memref<880x128xbf16, #tpu.memory_space<vmem>>, vector<32x128xbf16>
    %283 = arith.truncf %281 : vector<16x32xf32> to vector<16x32xbf16>
    %cst_120 = arith.constant dense<0.000000e+00> : vector<16x128xf32>
    %284 = tpu.matmul %283, %282, %cst_120 {dimension_numbers = #tpu.dot_dimension_numbers<[1], [0], [0], [1], [0, 0, 1, 1], [], []>} : vector<16x32xbf16>, vector<32x128xbf16>, vector<16x128xf32> -> vector<16x128xf32>
    %c152_121 = arith.constant 152 : index
    %c0_122 = arith.constant 0 : index
    %285 = vector.load %arg5[%c152_121, %c0_122] : memref<360x128xf32, #tpu.memory_space<vmem>>, vector<16x128xf32>
    %286 = arith.mulf %284, %285 : vector<16x128xf32>
    %c96_123 = arith.constant 96 : index
    %c0_124 = arith.constant 0 : index
    %287 = vector.load %arg6[%c96_123, %c0_124] : memref<880x128xbf16, #tpu.memory_space<vmem>>, vector<128x16xbf16>
    %288 = arith.truncf %286 : vector<16x128xf32> to vector<16x128xbf16>
    %cst_125 = arith.constant dense<0.000000e+00> : vector<16x16xf32>
    %289 = tpu.matmul %288, %287, %cst_125 {dimension_numbers = #tpu.dot_dimension_numbers<[1], [0], [0], [1], [0, 0, 1, 1], [], []>} : vector<16x128xbf16>, vector<128x16xbf16>, vector<16x16xf32> -> vector<16x16xf32>
    %c320_126 = arith.constant 320 : index
    %c0_127 = arith.constant 0 : index
    %290 = vector.load %arg6[%c320_126, %c0_127] : memref<880x128xbf16, #tpu.memory_space<vmem>>, vector<2x16xbf16>
    %291 = arith.truncf %289 : vector<16x16xf32> to vector<16x16xbf16>
    %cst_128 = arith.constant dense<0.000000e+00> : vector<2x16xf32>
    %292 = tpu.matmul %290, %291, %cst_128 {dimension_numbers = #tpu.dot_dimension_numbers<[1], [0], [0], [1], [0, 0, 1, 1], [], []>} : vector<2x16xbf16>, vector<16x16xbf16>, vector<2x16xf32> -> vector<2x16xf32>
    %c80_129 = arith.constant 80 : index
    %c0_130 = arith.constant 0 : index
    %293 = vector.load %arg5[%c80_129, %c0_130] : memref<360x128xf32, #tpu.memory_space<vmem>>, vector<1x16xf32>
    %294 = vector.broadcast %293 : vector<1x16xf32> to vector<2x16xf32>
    %295 = arith.addf %292, %294 : vector<2x16xf32>
    %cst_131 = arith.constant dense<0xFF800000> : vector<2xf32>
    %296 = vector.multi_reduction <maximumf>, %295, %cst_131 [1] : vector<2x16xf32> to vector<2xf32>
    %297 = vector.shape_cast %296 : vector<2xf32> to vector<2x1xf32>
    %298 = vector.broadcast %297 : vector<2x1xf32> to vector<2x16xf32>
    %299 = arith.subf %295, %298 : vector<2x16xf32>
    %300 = math.exp %299 : vector<2x16xf32>
    %cst_132 = arith.constant dense<0.000000e+00> : vector<2xf32>
    %301 = vector.multi_reduction <add>, %300, %cst_132 [1] : vector<2x16xf32> to vector<2xf32>
    %302 = vector.shape_cast %301 : vector<2xf32> to vector<2x1xf32>
    %303 = tpu.reciprocal %302 {approx = true} : vector<2x1xf32> -> vector<2x1xf32>
    %304 = vector.broadcast %303 : vector<2x1xf32> to vector<2x16xf32>
    %305 = arith.mulf %300, %304 : vector<2x16xf32>
    %c288_133 = arith.constant 288 : index
    %c0_134 = arith.constant 0 : index
    %306 = vector.load %arg6[%c288_133, %c0_134] : memref<880x128xbf16, #tpu.memory_space<vmem>>, vector<16x2xbf16>
    %307 = arith.truncf %305 : vector<2x16xf32> to vector<2x16xbf16>
    %cst_135 = arith.constant dense<0.000000e+00> : vector<16x16xf32>
    %308 = tpu.matmul %306, %307, %cst_135 {dimension_numbers = #tpu.dot_dimension_numbers<[1], [0], [0], [1], [0, 0, 1, 1], [], []>} : vector<16x2xbf16>, vector<2x16xbf16>, vector<16x16xf32> -> vector<16x16xf32>
    %309 = arith.mulf %308, %3 : vector<16x16xf32>
    %c224_136 = arith.constant 224 : index
    %c0_137 = arith.constant 0 : index
    %310 = vector.load %arg6[%c224_136, %c0_137] : memref<880x128xbf16, #tpu.memory_space<vmem>>, vector<16x16xbf16>
    %311 = arith.truncf %309 : vector<16x16xf32> to vector<16x16xbf16>
    %cst_138 = arith.constant dense<0.000000e+00> : vector<16x16xf32>
    %312 = tpu.matmul %311, %310, %cst_138 {dimension_numbers = #tpu.dot_dimension_numbers<[1], [0], [0], [1], [0, 0, 1, 1], [], []>} : vector<16x16xbf16>, vector<16x16xbf16>, vector<16x16xf32> -> vector<16x16xf32>
    %c88_139 = arith.constant 88 : index
    %c0_140 = arith.constant 0 : index
    %313 = vector.load %arg5[%c88_139, %c0_140] : memref<360x128xf32, #tpu.memory_space<vmem>>, vector<1x16xf32>
    %314 = vector.broadcast %313 : vector<1x16xf32> to vector<16x16xf32>
    %315 = arith.addf %312, %314 : vector<16x16xf32>
    %c144_141 = arith.constant 144 : index
    %c0_142 = arith.constant 0 : index
    %316 = vector.load %arg5[%c144_141, %c0_142] : memref<360x128xf32, #tpu.memory_space<vmem>>, vector<1x32xf32>
    %317 = vector.broadcast %316 : vector<1x32xf32> to vector<16x32xf32>
    %318 = arith.mulf %281, %317 : vector<16x32xf32>
    %c272_143 = arith.constant 272 : index
    %c0_144 = arith.constant 0 : index
    %319 = vector.load %arg6[%c272_143, %c0_144] : memref<880x128xbf16, #tpu.memory_space<vmem>>, vector<16x32xbf16>
    %320 = arith.truncf %315 : vector<16x16xf32> to vector<16x16xbf16>
    %cst_145 = arith.constant dense<0.000000e+00> : vector<16x32xf32>
    %321 = tpu.matmul %320, %319, %cst_145 {dimension_numbers = #tpu.dot_dimension_numbers<[1], [0], [0], [1], [0, 0, 1, 1], [], []>} : vector<16x16xbf16>, vector<16x32xbf16>, vector<16x32xf32> -> vector<16x32xf32>
    %322 = arith.addf %318, %321 : vector<16x32xf32>
    %323 = arith.truncf %305 : vector<2x16xf32> to vector<2x16xbf16>
    %324 = arith.truncf %2 : vector<8x16xf32> to vector<8x16xbf16>
    %cst_146 = arith.constant dense<0.000000e+00> : vector<2x8xf32>
    %325 = tpu.matmul %323, %324, %cst_146 {dimension_numbers = #tpu.dot_dimension_numbers<[1], [1], [0], [0], [0, 0, 1, 0], [], []>} : vector<2x16xbf16>, vector<8x16xbf16>, vector<2x8xf32> -> vector<2x8xf32>
    %c304 = arith.constant 304 : index
    %c0_147 = arith.constant 0 : index
    %326 = vector.load %arg6[%c304, %c0_147] : memref<880x128xbf16, #tpu.memory_space<vmem>>, vector<12x2xbf16>
    %327 = arith.truncf %325 : vector<2x8xf32> to vector<2x8xbf16>
    %cst_148 = arith.constant dense<0.000000e+00> : vector<12x8xf32>
    %328 = tpu.matmul %326, %327, %cst_148 {dimension_numbers = #tpu.dot_dimension_numbers<[1], [0], [0], [1], [0, 0, 1, 1], [], []>} : vector<12x2xbf16>, vector<2x8xbf16>, vector<12x8xf32> -> vector<12x8xf32>
    %c168 = arith.constant 168 : index
    %c0_149 = arith.constant 0 : index
    %329 = vector.load %arg5[%c168, %c0_149] : memref<360x128xf32, #tpu.memory_space<vmem>>, vector<12x8xf32>
    %330 = arith.mulf %328, %329 : vector<12x8xf32>
    %cst_150 = arith.constant dense<0.000000e+00> : vector<12xf32>
    %331 = vector.multi_reduction <add>, %330, %cst_150 [1] : vector<12x8xf32> to vector<12xf32>
    %332 = vector.shape_cast %331 : vector<12xf32> to vector<12x1xf32>
    %c184 = arith.constant 184 : index
    %c0_151 = arith.constant 0 : index
    %333 = vector.load %arg5[%c184, %c0_151] : memref<360x128xf32, #tpu.memory_space<vmem>>, vector<12x1xf32>
    %334 = vector.extract_strided_slice %1 {offsets = [0, 0], sizes = [12, 1], strides = [1, 1]} : vector<12x4xf32> to vector<12x1xf32>
    %335 = arith.subf %332, %334 : vector<12x1xf32>
    %336 = arith.mulf %333, %335 : vector<12x1xf32>
    %c16_152 = arith.constant 16 : index
    %c0_153 = arith.constant 0 : index
    %337 = vector.load %arg6[%c16_152, %c0_153] : memref<880x128xbf16, #tpu.memory_space<vmem>>, vector<4x32xbf16>
    %338 = arith.truncf %1 : vector<12x4xf32> to vector<12x4xbf16>
    %cst_154 = arith.constant dense<0.000000e+00> : vector<12x32xf32>
    %339 = tpu.matmul %338, %337, %cst_154 {dimension_numbers = #tpu.dot_dimension_numbers<[1], [0], [0], [1], [0, 0, 1, 1], [], []>} : vector<12x4xbf16>, vector<4x32xbf16>, vector<12x32xf32> -> vector<12x32xf32>
    %c24 = arith.constant 24 : index
    %c0_155 = arith.constant 0 : index
    %340 = vector.load %arg5[%c24, %c0_155] : memref<360x128xf32, #tpu.memory_space<vmem>>, vector<1x32xf32>
    %341 = vector.broadcast %340 : vector<1x32xf32> to vector<12x32xf32>
    %342 = arith.addf %339, %341 : vector<12x32xf32>
    %c32 = arith.constant 32 : index
    %c0_156 = arith.constant 0 : index
    %343 = vector.load %arg5[%c32, %c0_156] : memref<360x128xf32, #tpu.memory_space<vmem>>, vector<1x32xf32>
    %344 = vector.broadcast %336 : vector<12x1xf32> to vector<12x32xf32>
    %345 = vector.broadcast %343 : vector<1x32xf32> to vector<12x32xf32>
    %346 = arith.mulf %344, %345 : vector<12x32xf32>
    %347 = arith.addf %342, %346 : vector<12x32xf32>
    %c48_157 = arith.constant 48 : index
    %c0_158 = arith.constant 0 : index
    %348 = vector.load %arg6[%c48_157, %c0_158] : memref<880x128xbf16, #tpu.memory_space<vmem>>, vector<32x32xbf16>
    %349 = arith.truncf %347 : vector<12x32xf32> to vector<12x32xbf16>
    %cst_159 = arith.constant dense<0.000000e+00> : vector<12x32xf32>
    %350 = tpu.matmul %349, %348, %cst_159 {dimension_numbers = #tpu.dot_dimension_numbers<[1], [0], [0], [1], [0, 0, 1, 1], [], []>} : vector<12x32xbf16>, vector<32x32xbf16>, vector<12x32xf32> -> vector<12x32xf32>
    %c48_160 = arith.constant 48 : index
    %c0_161 = arith.constant 0 : index
    %351 = vector.load %arg5[%c48_160, %c0_161] : memref<360x128xf32, #tpu.memory_space<vmem>>, vector<1x32xf32>
    %352 = vector.broadcast %351 : vector<1x32xf32> to vector<12x32xf32>
    %353 = arith.addf %350, %352 : vector<12x32xf32>
    %cst_162 = arith.constant dense<0xFF800000> : vector<12xf32>
    %354 = vector.multi_reduction <maximumf>, %353, %cst_162 [1] : vector<12x32xf32> to vector<12xf32>
    %355 = vector.shape_cast %354 : vector<12xf32> to vector<12x1xf32>
    %356 = vector.broadcast %355 : vector<12x1xf32> to vector<12x32xf32>
    %357 = arith.subf %353, %356 : vector<12x32xf32>
    %358 = math.exp %357 : vector<12x32xf32>
    %cst_163 = arith.constant dense<0.000000e+00> : vector<12xf32>
    %359 = vector.multi_reduction <add>, %358, %cst_163 [1] : vector<12x32xf32> to vector<12xf32>
    %360 = vector.shape_cast %359 : vector<12xf32> to vector<12x1xf32>
    %361 = tpu.reciprocal %360 {approx = true} : vector<12x1xf32> -> vector<12x1xf32>
    %362 = vector.broadcast %361 : vector<12x1xf32> to vector<12x32xf32>
    %363 = arith.mulf %358, %362 : vector<12x32xf32>
    %c80_164 = arith.constant 80 : index
    %c0_165 = arith.constant 0 : index
    %364 = vector.load %arg6[%c80_164, %c0_165] : memref<880x128xbf16, #tpu.memory_space<vmem>>, vector<12x32xbf16>
    %365 = arith.truncf %4 : vector<2x12xf32> to vector<2x12xbf16>
    %cst_166 = arith.constant dense<0.000000e+00> : vector<2x32xf32>
    %366 = tpu.matmul %365, %364, %cst_166 {dimension_numbers = #tpu.dot_dimension_numbers<[1], [0], [0], [1], [0, 0, 1, 1], [], []>} : vector<2x12xbf16>, vector<12x32xbf16>, vector<2x32xf32> -> vector<2x32xf32>
    %c56_167 = arith.constant 56 : index
    %c0_168 = arith.constant 0 : index
    %367 = vector.load %arg5[%c56_167, %c0_168] : memref<360x128xf32, #tpu.memory_space<vmem>>, vector<1x32xf32>
    %368 = vector.broadcast %367 : vector<1x32xf32> to vector<2x32xf32>
    %369 = arith.addf %366, %368 : vector<2x32xf32>
    %c304_169 = arith.constant 304 : index
    %c0_170 = arith.constant 0 : index
    %370 = vector.load %arg6[%c304_169, %c0_170] : memref<880x128xbf16, #tpu.memory_space<vmem>>, vector<12x2xbf16>
    %371 = arith.truncf %369 : vector<2x32xf32> to vector<2x32xbf16>
    %cst_171 = arith.constant dense<0.000000e+00> : vector<12x32xf32>
    %372 = tpu.matmul %370, %371, %cst_171 {dimension_numbers = #tpu.dot_dimension_numbers<[1], [0], [0], [1], [0, 0, 1, 1], [], []>} : vector<12x2xbf16>, vector<2x32xbf16>, vector<12x32xf32> -> vector<12x32xf32>
    %373 = arith.mulf %363, %372 : vector<12x32xf32>
    %374 = arith.addf %347, %373 : vector<12x32xf32>
    %cst_172 = arith.constant dense<0.000000e+00> : vector<12xf32>
    %375 = vector.multi_reduction <add>, %374, %cst_172 [1] : vector<12x32xf32> to vector<12xf32>
    %376 = vector.shape_cast %375 : vector<12xf32> to vector<12x1xf32>
    %cst_173 = arith.constant 3.200000e+01 : f32
    %377 = vector.broadcast %cst_173 : f32 to vector<12x1xf32>
    %378 = arith.divf %376, %377 : vector<12x1xf32>
    %379 = vector.broadcast %378 : vector<12x1xf32> to vector<12x32xf32>
    %380 = arith.subf %374, %379 : vector<12x32xf32>
    %381 = arith.mulf %380, %380 : vector<12x32xf32>
    %cst_174 = arith.constant dense<0.000000e+00> : vector<12xf32>
    %382 = vector.multi_reduction <add>, %381, %cst_174 [1] : vector<12x32xf32> to vector<12xf32>
    %383 = vector.shape_cast %382 : vector<12xf32> to vector<12x1xf32>
    %cst_175 = arith.constant 3.200000e+01 : f32
    %384 = vector.broadcast %cst_175 : f32 to vector<12x1xf32>
    %385 = arith.divf %383, %384 : vector<12x1xf32>
    %386 = vector.broadcast %378 : vector<12x1xf32> to vector<12x32xf32>
    %387 = arith.subf %374, %386 : vector<12x32xf32>
    %cst_176 = arith.constant 9.99999974E-6 : f32
    %388 = vector.broadcast %cst_176 : f32 to vector<12x1xf32>
    %389 = arith.addf %385, %388 : vector<12x1xf32>
    %390 = math.rsqrt %389 : vector<12x1xf32>
    %391 = vector.broadcast %390 : vector<12x1xf32> to vector<12x32xf32>
    %392 = arith.mulf %387, %391 : vector<12x32xf32>
    %c64_177 = arith.constant 64 : index
    %c0_178 = arith.constant 0 : index
    %393 = vector.load %arg5[%c64_177, %c0_178] : memref<360x128xf32, #tpu.memory_space<vmem>>, vector<1x32xf32>
    %394 = vector.broadcast %393 : vector<1x32xf32> to vector<12x32xf32>
    %395 = arith.mulf %392, %394 : vector<12x32xf32>
    %c72_179 = arith.constant 72 : index
    %c0_180 = arith.constant 0 : index
    %396 = vector.load %arg5[%c72_179, %c0_180] : memref<360x128xf32, #tpu.memory_space<vmem>>, vector<1x32xf32>
    %397 = vector.broadcast %396 : vector<1x32xf32> to vector<12x32xf32>
    %398 = arith.addf %395, %397 : vector<12x32xf32>
    %c656 = arith.constant 656 : index
    %c0_181 = arith.constant 0 : index
    %399 = vector.load %arg6[%c656, %c0_181] : memref<880x128xbf16, #tpu.memory_space<vmem>>, vector<32x32xbf16>
    %400 = arith.truncf %398 : vector<12x32xf32> to vector<12x32xbf16>
    %cst_182 = arith.constant dense<0.000000e+00> : vector<12x32xf32>
    %401 = tpu.matmul %400, %399, %cst_182 {dimension_numbers = #tpu.dot_dimension_numbers<[1], [0], [0], [1], [0, 0, 1, 1], [], []>} : vector<12x32xbf16>, vector<32x32xbf16>, vector<12x32xf32> -> vector<12x32xf32>
    %402 = arith.truncf %401 : vector<12x32xf32> to vector<12x32xbf16>
    %403 = arith.truncf %398 : vector<12x32xf32> to vector<12x32xbf16>
    %cst_183 = arith.constant dense<0.000000e+00> : vector<12x12xf32>
    %404 = tpu.matmul %402, %403, %cst_183 {dimension_numbers = #tpu.dot_dimension_numbers<[1], [1], [0], [0], [0, 0, 1, 0], [], []>} : vector<12x32xbf16>, vector<12x32xbf16>, vector<12x12xf32> -> vector<12x12xf32>
    %405 = arith.addf %404, %6 : vector<12x12xf32>
    %cst_184 = arith.constant dense<0xFF800000> : vector<12xf32>
    %406 = vector.multi_reduction <maximumf>, %405, %cst_184 [1] : vector<12x12xf32> to vector<12xf32>
    %407 = vector.shape_cast %406 : vector<12xf32> to vector<12x1xf32>
    %408 = vector.broadcast %407 : vector<12x1xf32> to vector<12x12xf32>
    %409 = arith.subf %405, %408 : vector<12x12xf32>
    %410 = math.exp %409 : vector<12x12xf32>
    %cst_185 = arith.constant dense<0.000000e+00> : vector<12xf32>
    %411 = vector.multi_reduction <add>, %410, %cst_185 [1] : vector<12x12xf32> to vector<12xf32>
    %412 = vector.shape_cast %411 : vector<12xf32> to vector<12x1xf32>
    %413 = tpu.reciprocal %412 {approx = true} : vector<12x1xf32> -> vector<12x1xf32>
    %414 = vector.broadcast %413 : vector<12x1xf32> to vector<12x12xf32>
    %415 = arith.mulf %410, %414 : vector<12x12xf32>
    %c688 = arith.constant 688 : index
    %c0_186 = arith.constant 0 : index
    %416 = vector.load %arg6[%c688, %c0_186] : memref<880x128xbf16, #tpu.memory_space<vmem>>, vector<32x32xbf16>
    %417 = arith.truncf %398 : vector<12x32xf32> to vector<12x32xbf16>
    %cst_187 = arith.constant dense<0.000000e+00> : vector<12x32xf32>
    %418 = tpu.matmul %417, %416, %cst_187 {dimension_numbers = #tpu.dot_dimension_numbers<[1], [0], [0], [1], [0, 0, 1, 1], [], []>} : vector<12x32xbf16>, vector<32x32xbf16>, vector<12x32xf32> -> vector<12x32xf32>
    %419 = arith.truncf %415 : vector<12x12xf32> to vector<12x12xbf16>
    %420 = arith.truncf %418 : vector<12x32xf32> to vector<12x32xbf16>
    %cst_188 = arith.constant dense<0.000000e+00> : vector<12x32xf32>
    %421 = tpu.matmul %419, %420, %cst_188 {dimension_numbers = #tpu.dot_dimension_numbers<[1], [0], [0], [1], [0, 0, 1, 1], [], []>} : vector<12x12xbf16>, vector<12x32xbf16>, vector<12x32xf32> -> vector<12x32xf32>
    %422 = arith.addf %398, %421 : vector<12x32xf32>
    %cst_189 = arith.constant dense<0.000000e+00> : vector<12xf32>
    %423 = vector.multi_reduction <add>, %422, %cst_189 [1] : vector<12x32xf32> to vector<12xf32>
    %424 = vector.shape_cast %423 : vector<12xf32> to vector<12x1xf32>
    %cst_190 = arith.constant 3.200000e+01 : f32
    %425 = vector.broadcast %cst_190 : f32 to vector<12x1xf32>
    %426 = arith.divf %424, %425 : vector<12x1xf32>
    %427 = vector.broadcast %426 : vector<12x1xf32> to vector<12x32xf32>
    %428 = arith.subf %422, %427 : vector<12x32xf32>
    %429 = arith.mulf %428, %428 : vector<12x32xf32>
    %cst_191 = arith.constant dense<0.000000e+00> : vector<12xf32>
    %430 = vector.multi_reduction <add>, %429, %cst_191 [1] : vector<12x32xf32> to vector<12xf32>
    %431 = vector.shape_cast %430 : vector<12xf32> to vector<12x1xf32>
    %cst_192 = arith.constant 3.200000e+01 : f32
    %432 = vector.broadcast %cst_192 : f32 to vector<12x1xf32>
    %433 = arith.divf %431, %432 : vector<12x1xf32>
    %434 = vector.broadcast %426 : vector<12x1xf32> to vector<12x32xf32>
    %435 = arith.subf %422, %434 : vector<12x32xf32>
    %cst_193 = arith.constant 9.99999974E-6 : f32
    %436 = vector.broadcast %cst_193 : f32 to vector<12x1xf32>
    %437 = arith.addf %433, %436 : vector<12x1xf32>
    %438 = math.rsqrt %437 : vector<12x1xf32>
    %439 = vector.broadcast %438 : vector<12x1xf32> to vector<12x32xf32>
    %440 = arith.mulf %435, %439 : vector<12x32xf32>
    %c312 = arith.constant 312 : index
    %c0_194 = arith.constant 0 : index
    %441 = vector.load %arg5[%c312, %c0_194] : memref<360x128xf32, #tpu.memory_space<vmem>>, vector<1x32xf32>
    %442 = vector.broadcast %441 : vector<1x32xf32> to vector<12x32xf32>
    %443 = arith.mulf %440, %442 : vector<12x32xf32>
    %c320_195 = arith.constant 320 : index
    %c0_196 = arith.constant 0 : index
    %444 = vector.load %arg5[%c320_195, %c0_196] : memref<360x128xf32, #tpu.memory_space<vmem>>, vector<1x32xf32>
    %445 = vector.broadcast %444 : vector<1x32xf32> to vector<12x32xf32>
    %446 = arith.addf %443, %445 : vector<12x32xf32>
    %c720 = arith.constant 720 : index
    %c0_197 = arith.constant 0 : index
    %447 = vector.load %arg6[%c720, %c0_197] : memref<880x128xbf16, #tpu.memory_space<vmem>>, vector<32x32xbf16>
    %448 = arith.truncf %446 : vector<12x32xf32> to vector<12x32xbf16>
    %cst_198 = arith.constant dense<0.000000e+00> : vector<12x32xf32>
    %449 = tpu.matmul %448, %447, %cst_198 {dimension_numbers = #tpu.dot_dimension_numbers<[1], [0], [0], [1], [0, 0, 1, 1], [], []>} : vector<12x32xbf16>, vector<32x32xbf16>, vector<12x32xf32> -> vector<12x32xf32>
    %450 = arith.truncf %449 : vector<12x32xf32> to vector<12x32xbf16>
    %451 = arith.truncf %322 : vector<16x32xf32> to vector<16x32xbf16>
    %cst_199 = arith.constant dense<0.000000e+00> : vector<12x16xf32>
    %452 = tpu.matmul %450, %451, %cst_199 {dimension_numbers = #tpu.dot_dimension_numbers<[1], [1], [0], [0], [0, 0, 1, 0], [], []>} : vector<12x32xbf16>, vector<16x32xbf16>, vector<12x16xf32> -> vector<12x16xf32>
    %453 = arith.addf %452, %7 : vector<12x16xf32>
    %cst_200 = arith.constant dense<0xFF800000> : vector<12xf32>
    %454 = vector.multi_reduction <maximumf>, %453, %cst_200 [1] : vector<12x16xf32> to vector<12xf32>
    %455 = vector.shape_cast %454 : vector<12xf32> to vector<12x1xf32>
    %456 = vector.broadcast %455 : vector<12x1xf32> to vector<12x16xf32>
    %457 = arith.subf %453, %456 : vector<12x16xf32>
    %458 = math.exp %457 : vector<12x16xf32>
    %cst_201 = arith.constant dense<0.000000e+00> : vector<12xf32>
    %459 = vector.multi_reduction <add>, %458, %cst_201 [1] : vector<12x16xf32> to vector<12xf32>
    %460 = vector.shape_cast %459 : vector<12xf32> to vector<12x1xf32>
    %461 = tpu.reciprocal %460 {approx = true} : vector<12x1xf32> -> vector<12x1xf32>
    %462 = vector.broadcast %461 : vector<12x1xf32> to vector<12x16xf32>
    %463 = arith.mulf %458, %462 : vector<12x16xf32>
    %c752 = arith.constant 752 : index
    %c0_202 = arith.constant 0 : index
    %464 = vector.load %arg6[%c752, %c0_202] : memref<880x128xbf16, #tpu.memory_space<vmem>>, vector<32x32xbf16>
    %465 = arith.truncf %322 : vector<16x32xf32> to vector<16x32xbf16>
    %cst_203 = arith.constant dense<0.000000e+00> : vector<16x32xf32>
    %466 = tpu.matmul %465, %464, %cst_203 {dimension_numbers = #tpu.dot_dimension_numbers<[1], [0], [0], [1], [0, 0, 1, 1], [], []>} : vector<16x32xbf16>, vector<32x32xbf16>, vector<16x32xf32> -> vector<16x32xf32>
    %467 = arith.truncf %463 : vector<12x16xf32> to vector<12x16xbf16>
    %468 = arith.truncf %466 : vector<16x32xf32> to vector<16x32xbf16>
    %cst_204 = arith.constant dense<0.000000e+00> : vector<12x32xf32>
    %469 = tpu.matmul %467, %468, %cst_204 {dimension_numbers = #tpu.dot_dimension_numbers<[1], [0], [0], [1], [0, 0, 1, 1], [], []>} : vector<12x16xbf16>, vector<16x32xbf16>, vector<12x32xf32> -> vector<12x32xf32>
    %470 = arith.addf %446, %469 : vector<12x32xf32>
    %cst_205 = arith.constant dense<0.000000e+00> : vector<12xf32>
    %471 = vector.multi_reduction <add>, %470, %cst_205 [1] : vector<12x32xf32> to vector<12xf32>
    %472 = vector.shape_cast %471 : vector<12xf32> to vector<12x1xf32>
    %cst_206 = arith.constant 3.200000e+01 : f32
    %473 = vector.broadcast %cst_206 : f32 to vector<12x1xf32>
    %474 = arith.divf %472, %473 : vector<12x1xf32>
    %475 = vector.broadcast %474 : vector<12x1xf32> to vector<12x32xf32>
    %476 = arith.subf %470, %475 : vector<12x32xf32>
    %477 = arith.mulf %476, %476 : vector<12x32xf32>
    %cst_207 = arith.constant dense<0.000000e+00> : vector<12xf32>
    %478 = vector.multi_reduction <add>, %477, %cst_207 [1] : vector<12x32xf32> to vector<12xf32>
    %479 = vector.shape_cast %478 : vector<12xf32> to vector<12x1xf32>
    %cst_208 = arith.constant 3.200000e+01 : f32
    %480 = vector.broadcast %cst_208 : f32 to vector<12x1xf32>
    %481 = arith.divf %479, %480 : vector<12x1xf32>
    %482 = vector.broadcast %474 : vector<12x1xf32> to vector<12x32xf32>
    %483 = arith.subf %470, %482 : vector<12x32xf32>
    %cst_209 = arith.constant 9.99999974E-6 : f32
    %484 = vector.broadcast %cst_209 : f32 to vector<12x1xf32>
    %485 = arith.addf %481, %484 : vector<12x1xf32>
    %486 = math.rsqrt %485 : vector<12x1xf32>
    %487 = vector.broadcast %486 : vector<12x1xf32> to vector<12x32xf32>
    %488 = arith.mulf %483, %487 : vector<12x32xf32>
    %c328 = arith.constant 328 : index
    %c0_210 = arith.constant 0 : index
    %489 = vector.load %arg5[%c328, %c0_210] : memref<360x128xf32, #tpu.memory_space<vmem>>, vector<1x32xf32>
    %490 = vector.broadcast %489 : vector<1x32xf32> to vector<12x32xf32>
    %491 = arith.mulf %488, %490 : vector<12x32xf32>
    %c336_211 = arith.constant 336 : index
    %c0_212 = arith.constant 0 : index
    %492 = vector.load %arg5[%c336_211, %c0_212] : memref<360x128xf32, #tpu.memory_space<vmem>>, vector<1x32xf32>
    %493 = vector.broadcast %492 : vector<1x32xf32> to vector<12x32xf32>
    %494 = arith.addf %491, %493 : vector<12x32xf32>
    %c784 = arith.constant 784 : index
    %c0_213 = arith.constant 0 : index
    %495 = vector.load %arg6[%c784, %c0_213] : memref<880x128xbf16, #tpu.memory_space<vmem>>, vector<32x64xbf16>
    %496 = arith.truncf %494 : vector<12x32xf32> to vector<12x32xbf16>
    %cst_214 = arith.constant dense<0.000000e+00> : vector<12x64xf32>
    %497 = tpu.matmul %496, %495, %cst_214 {dimension_numbers = #tpu.dot_dimension_numbers<[1], [0], [0], [1], [0, 0, 1, 1], [], []>} : vector<12x32xbf16>, vector<32x64xbf16>, vector<12x64xf32> -> vector<12x64xf32>
    %c296 = arith.constant 296 : index
    %c0_215 = arith.constant 0 : index
    %498 = vector.load %arg5[%c296, %c0_215] : memref<360x128xf32, #tpu.memory_space<vmem>>, vector<1x64xf32>
    %499 = vector.broadcast %498 : vector<1x64xf32> to vector<12x64xf32>
    %500 = arith.addf %497, %499 : vector<12x64xf32>
    %cst_216 = arith.constant 0.000000e+00 : f32
    %501 = vector.broadcast %cst_216 : f32 to vector<12x64xf32>
    %502 = arith.maximumf %500, %501 : vector<12x64xf32>
    %c816 = arith.constant 816 : index
    %c0_217 = arith.constant 0 : index
    %503 = vector.load %arg6[%c816, %c0_217] : memref<880x128xbf16, #tpu.memory_space<vmem>>, vector<64x32xbf16>
    %504 = arith.truncf %502 : vector<12x64xf32> to vector<12x64xbf16>
    %cst_218 = arith.constant dense<0.000000e+00> : vector<12x32xf32>
    %505 = tpu.matmul %504, %503, %cst_218 {dimension_numbers = #tpu.dot_dimension_numbers<[1], [0], [0], [1], [0, 0, 1, 1], [], []>} : vector<12x64xbf16>, vector<64x32xbf16>, vector<12x32xf32> -> vector<12x32xf32>
    %c304_219 = arith.constant 304 : index
    %c0_220 = arith.constant 0 : index
    %506 = vector.load %arg5[%c304_219, %c0_220] : memref<360x128xf32, #tpu.memory_space<vmem>>, vector<1x32xf32>
    %507 = vector.broadcast %506 : vector<1x32xf32> to vector<12x32xf32>
    %508 = arith.addf %505, %507 : vector<12x32xf32>
    %509 = arith.addf %494, %508 : vector<12x32xf32>
    %cst_221 = arith.constant dense<0.000000e+00> : vector<12xf32>
    %510 = vector.multi_reduction <add>, %509, %cst_221 [1] : vector<12x32xf32> to vector<12xf32>
    %511 = vector.shape_cast %510 : vector<12xf32> to vector<12x1xf32>
    %cst_222 = arith.constant 3.200000e+01 : f32
    %512 = vector.broadcast %cst_222 : f32 to vector<12x1xf32>
    %513 = arith.divf %511, %512 : vector<12x1xf32>
    %514 = vector.broadcast %513 : vector<12x1xf32> to vector<12x32xf32>
    %515 = arith.subf %509, %514 : vector<12x32xf32>
    %516 = arith.mulf %515, %515 : vector<12x32xf32>
    %cst_223 = arith.constant dense<0.000000e+00> : vector<12xf32>
    %517 = vector.multi_reduction <add>, %516, %cst_223 [1] : vector<12x32xf32> to vector<12xf32>
    %518 = vector.shape_cast %517 : vector<12xf32> to vector<12x1xf32>
    %cst_224 = arith.constant 3.200000e+01 : f32
    %519 = vector.broadcast %cst_224 : f32 to vector<12x1xf32>
    %520 = arith.divf %518, %519 : vector<12x1xf32>
    %521 = vector.broadcast %513 : vector<12x1xf32> to vector<12x32xf32>
    %522 = arith.subf %509, %521 : vector<12x32xf32>
    %cst_225 = arith.constant 9.99999974E-6 : f32
    %523 = vector.broadcast %cst_225 : f32 to vector<12x1xf32>
    %524 = arith.addf %520, %523 : vector<12x1xf32>
    %525 = math.rsqrt %524 : vector<12x1xf32>
    %526 = vector.broadcast %525 : vector<12x1xf32> to vector<12x32xf32>
    %527 = arith.mulf %522, %526 : vector<12x32xf32>
    %c344 = arith.constant 344 : index
    %c0_226 = arith.constant 0 : index
    %528 = vector.load %arg5[%c344, %c0_226] : memref<360x128xf32, #tpu.memory_space<vmem>>, vector<1x32xf32>
    %529 = vector.broadcast %528 : vector<1x32xf32> to vector<12x32xf32>
    %530 = arith.mulf %527, %529 : vector<12x32xf32>
    %c352 = arith.constant 352 : index
    %c0_227 = arith.constant 0 : index
    %531 = vector.load %arg5[%c352, %c0_227] : memref<360x128xf32, #tpu.memory_space<vmem>>, vector<1x32xf32>
    %532 = vector.broadcast %531 : vector<1x32xf32> to vector<12x32xf32>
    %533 = arith.addf %530, %532 : vector<12x32xf32>
    %c32_228 = arith.constant 32 : index
    %c0_229 = arith.constant 0 : index
    %534 = vector.load %arg6[%c32_228, %c0_229] : memref<880x128xbf16, #tpu.memory_space<vmem>>, vector<1x32xbf16>
    %535 = arith.truncf %533 : vector<12x32xf32> to vector<12x32xbf16>
    %cst_230 = arith.constant dense<0.000000e+00> : vector<1x12xf32>
    %536 = tpu.matmul %534, %535, %cst_230 {dimension_numbers = #tpu.dot_dimension_numbers<[1], [1], [0], [0], [0, 0, 1, 0], [], []>} : vector<1x32xbf16>, vector<12x32xbf16>, vector<1x12xf32> -> vector<1x12xf32>
    %c40 = arith.constant 40 : index
    %c0_231 = arith.constant 0 : index
    %537 = vector.load %arg5[%c40, %c0_231] : memref<360x128xf32, #tpu.memory_space<vmem>>, vector<1x1xf32>
    %538 = vector.broadcast %537 : vector<1x1xf32> to vector<1x12xf32>
    %539 = arith.addf %536, %538 : vector<1x12xf32>
    %c0_232 = arith.constant 0 : index
    %c0_233 = arith.constant 0 : index
    %540 = vector.load %arg7[%c0_232, %c0_233] : memref<1x12xf32, #tpu.memory_space<vmem>>, vector<1x12xf32>
    tpu.vector_store %arg7[%c0_232, %c0_233], %539 {strides = array<i32>} : memref<1x12xf32, #tpu.memory_space<vmem>>, vector<1x12xf32>,
    return
  }
}

</mosaic_0001>

<llo_original>
// kernel: _lambda_.1
$region0: #{_lambda_.1}
  #allocation0 [shape = 'u32[]', space=smem, size = 0x4, offset = 0x4, fixed_abs, tag = 'smem constant byte address 0x4 - core index']
  #allocation1 [shape = 'u32[144,128]{1,0:T(1,128)}', space=vmem, size = 0x12000, scoped, tag = 'internal scratch']
  %s0 = inlined_call_operand.vmem [shape: f32[16,4], index: 0, kind: input, shape index: {}]
  %s1 = inlined_call_operand.vmem [shape: f32[12,4], index: 1, kind: input, shape index: {}]
  %s2 = inlined_call_operand.vmem [shape: f32[8,16], index: 2, kind: input, shape index: {}]
  %s3 = inlined_call_operand.vmem [shape: f32[16,16], index: 3, kind: input, shape index: {}]
  %s4 = inlined_call_operand.vmem [shape: f32[2,12], index: 4, kind: input, shape index: {}]
  %s5 = inlined_call_operand.hbm [shape: f32[360,128], index: 5, kind: input, shape index: {}]
  %s6 = inlined_call_operand.hbm [shape: bf16[880,128], index: 6, kind: input, shape index: {}]
  %s7 = inlined_call_operand.vmem [shape: f32[1,12], index: 7, kind: output, shape index: {}]
  %s8 = sld [smem:[#allocation0]]
  $region46: #{_lambda_.1} parent=0
    _
  %s10 = ssub.s32 1, %s8
  %s11 = scalar_select 0, %s10, %s8
  $region1: #{_lambda_.1} parent=0
    #allocation2 [shape = 'u8[184320]{0}', space=vmem, size = 0x2d000, scoped, tag = 'input window, operand 5, single buffered']
    #allocation3 [shape = 's32[1]{0}', space=sflag, size = 0x4, scoped, tag = 'scoped memory for _lambda_.1']
    #allocation4 [shape = 'u8[225280]{0}', space=vmem, size = 0x37000, scoped, tag = 'input window, operand 6, single buffered']
    #allocation5 [shape = 's32[1]{0}', space=sflag, size = 0x4, scoped, tag = 'scoped memory for _lambda_.1']
    %12 = vsyncpa [#allocation3], 0
    %13 = vsyncpa [#allocation5], 0
    // Predicated region
    $region2: #{_lambda_.1} parent=1 // pred_check
      _
    $region3: #{_lambda_.1} parent=1 // pred_check_branch
      %15 = sbr.rel (0) target = $region5
    $region4: #{_lambda_.1} parent=1 // pred_region
      _
    $region5: #{_lambda_.1} parent=1 // pred_fallthru
      _
    // Predicated region
    $region6: #{_lambda_.1} parent=1 // pred_check
      _
    $region7: #{_lambda_.1} parent=1 // pred_check_branch
      %17 = sbr.rel (0) target = $region9
    $region8: #{_lambda_.1} parent=1 // pred_region
      _
    $region9: #{_lambda_.1} parent=1 // pred_fallthru
      _
    // Predicated region
    $region10: #{_lambda_.1} parent=1 // pred_check
      _
    $region11: #{_lambda_.1} parent=1 // pred_check_branch
      %19 = sbr.rel (0) target = $region13
    $region12: #{_lambda_.1} parent=1 // pred_region
      _
    $region13: #{_lambda_.1} parent=1 // pred_fallthru
      _
    // Predicated region
    $region14: #{_lambda_.1} parent=1 // pred_check
      _
    $region15: #{_lambda_.1} parent=1 // pred_check_branch
      %21 = sbr.rel (0) target = $region17
    $region16: #{_lambda_.1} parent=1 // pred_region
      _
    $region17: #{_lambda_.1} parent=1 // pred_fallthru
      _
    // Predicated region
    $region18: #{_lambda_.1} parent=1 // pred_check
      _
    $region19: #{_lambda_.1} parent=1 // pred_check_branch
      %23 = sbr.rel (0) target = $region21
    $region20: #{_lambda_.1} parent=1 // pred_region
      _
    $region21: #{_lambda_.1} parent=1 // pred_fallthru
      _
    // Predicated region
    $region22: #{_lambda_.1} parent=1 // pred_check
      _
    $region23: #{_lambda_.1} parent=1 // pred_check_branch
      %25 = sbr.rel (0) target = $region25
    $region24: #{_lambda_.1} parent=1 // pred_region
      %s27 = ssub.s32 5760, 5760
      %28 = vsyncadd [#allocation3], %s27
      %s29 = sshll.u32 [#allocation2], 4
      %s30 = int_to_ptr.vmem [resolvable:$true] %s29
      %35 = dma.hbm_to_vmem [thread:$0]  %s5, 5760, %s30, [#allocation3], 128, 128, 8
    $region25: #{_lambda_.1} parent=1 // pred_fallthru
      _
    // Predicated region
    $region26: #{_lambda_.1} parent=1 // pred_check
      _
    $region27: #{_lambda_.1} parent=1 // pred_check_branch
      %37 = sbr.rel (0) target = $region29
    $region28: #{_lambda_.1} parent=1 // pred_region
      %s39 = ssub.s32 7040, 7040
      %40 = vsyncadd [#allocation5], %s39
      %s41 = sshll.u32 [#allocation4], 4
      %s42 = int_to_ptr.vmem [resolvable:$true] %s41
      %47 = dma.hbm_to_vmem [thread:$0]  %s6, 7040, %s42, [#allocation5], 64, 64, 4
    $region29: #{_lambda_.1} parent=1 // pred_fallthru
      _
    // Predicated region
    $region30: #{_lambda_.1} parent=1 // pred_check
      _
    $region31: #{_lambda_.1} parent=1 // pred_check_branch
      %49 = sbr.rel (0) target = $region33
    $region32: #{_lambda_.1} parent=1 // pred_region
      %50 = dma.done [#allocation3], 5760
    $region33: #{_lambda_.1} parent=1 // pred_fallthru
      _
    // Predicated region
    $region34: #{_lambda_.1} parent=1 // pred_check
      _
    $region35: #{_lambda_.1} parent=1 // pred_check_branch
      %52 = sbr.rel (0) target = $region37
    $region36: #{_lambda_.1} parent=1 // pred_region
      %53 = dma.done [#allocation5], 7040
    $region37: #{_lambda_.1} parent=1 // pred_fallthru
      _
    %v55 = vld [vmem:[%s0] sm:$0xff]
    %v56 = vld [vmem:[%s0 + $0x8] sm:$0xff]
    %v57 = vld [vmem:[%s1] sm:$0xff]
    %v58 = vld [vmem:[%s1 + $0x8] sm:$0xf]
    %v59 = vld [vmem:[%s2] sm:$0xff]
    %v60 = vld [vmem:[%s3] sm:$0xff]
    %v61 = vld [vmem:[%s3 + $0x8] sm:$0xff]
    %v62 = vld [vmem:[%s4] sm:$0x3]
    %v63 = vld [vmem:[#allocation2 + $0x60] sm:$0xff]
    %v64 = vld [vmem:[#allocation2 + $0x68] sm:$0xff]
    %v65 = vld [vmem:[#allocation2 + $0x70] sm:$0xff]
    %v66 = vld [vmem:[#allocation2 + $0x78] sm:$0xf]
    %v67 = vld [vmem:[#allocation2 + $0x80] sm:$0xff]
    %v68 = vld [vmem:[#allocation2 + $0x88] sm:$0xf]
    %v69 = vld [vmem:[#allocation4] sm:$0x3]
    %v70 = vpack.c.bf16 %v56, %v55
    %v71 = vld [vmem:[#allocation2 + $0x10] sm:$0x1]
    %v72 = vlaneseq
    %v73 = vshrl.u32 %v72, 7
    %v74 = vsub.s32 0, %v73
    %v75 = vrot.slane %v71, %v74
    %vm76 = vcmask 31744
    %v78 = vsel %vm76, %v70, 0
    %vm80 = vcmask 1041408
    %v82 = vsel %vm80, %v69, 0
    %84 = vmatprep.subr.bf16.mxu0 0
    %85 = vmatpush1.bf16.msra.mxu0 %v82
    %86 = vmatprep.subr.bf16.mxu0 0
    %87 = vmatpush1.bf16.msra.mxu0 0
    %88 = vmatprep.subr.bf16.mxu0 0
    %89 = vmatpush1.bf16.msra.mxu0 0
    %90 = vmatprep.subr.bf16.mxu0 0
    %91 = vmatpush1.bf16.msra.mxu0 0
    %92 = vmatprep.subr.bf16.mxu0 0
    %93 = vmatpush1.bf16.msra.mxu0 0
    %94 = vmatprep.subr.bf16.mxu0 0
    %95 = vmatpush1.bf16.msra.mxu0 0
    %96 = vmatprep.subr.bf16.mxu0 0
    %97 = vmatpush1.bf16.msra.mxu0 0
    %98 = vmatprep.subr.bf16.mxu0 0
    %99 = vmatpush1.bf16.msra.mxu0 0
    %100 = vmatprep.subr.bf16.mxu0 0
    %101 = vmatpush1.bf16.msra.mxu0 0
    %102 = vmatprep.subr.bf16.mxu0 0
    %103 = vmatpush1.bf16.msra.mxu0 0
    %104 = vmatprep.subr.bf16.mxu0 0
    %105 = vmatpush1.bf16.msra.mxu0 0
    %106 = vmatprep.subr.bf16.mxu0 0
    %107 = vmatpush1.bf16.msra.mxu0 0
    %108 = vmatprep.subr.bf16.mxu0 0
    %109 = vmatpush1.bf16.msra.mxu0 0
    %110 = vmatprep.subr.bf16.mxu0 0
    %111 = vmatpush1.bf16.msra.mxu0 0
    %112 = vmatprep.subr.bf16.mxu0 0
    %113 = vmatpush1.bf16.msra.mxu0 0
    %114 = vmatprep.subr.bf16.mxu0 0
    %115 = vmatpush1.bf16.msra.mxu0 0
    %116 = vmatprep.mubr.bf16.mxu0 0
    %117 = vmatmul.mubr.bf16.gmra.mrb[0].mxu0 %v78
    %v118 = vpop.f32.mrb[0].mxu0
    %v119 = vadd.f32 %v75, %v118
    %v120 = vpop.f32.mrb[0].mxu0
    %v121 = vpop.f32.mrb[0].mxu0
    %v122 = vadd.f32 %v75, %v121
    %v123 = vpop.f32.mrb[0].mxu0
    %124 = vdwg.mxu0
    %v125 = vld [vmem:[#allocation2] sm:$0xff]
    %v126 = vld [vmem:[#allocation2 + $0x8] sm:$0xff]
    %v127 = vadd.f32 %v119, %v125
    %v128 = vadd.f32 %v122, %v126
    %v129 = vld [vmem:[#allocation4 + $0x18] sm:$0xf]
    %v130 = vld [vmem:[#allocation4 + $0x1c] sm:$0xf]
    %v131 = vld [vmem:[#allocation4 + $0x20] sm:$0xf]
    %v132 = vld [vmem:[#allocation4 + $0x24] sm:$0xf]
    %v133 = vpack.c.bf16 %v128, %v127
    %v134 = vld [vmem:[#allocation2 + $0x30] sm:$0x1]
    %v135 = vlaneseq
    %v136 = vshrl.u32 %v135, 7
    %v137 = vsub.s32 0, %v136
    %v138 = vrot.slane %v134, %v137
    %v143 = vunpack.c.l.b16 %v129
    %v144 = vunpack.c.l.b16 %v130
    %v145 = vunpack.c.l.b16 %v131
    %v146 = vunpack.c.l.b16 %v132
    %v147 = vpack.c.b16 %v144, %v143
    %v148 = vpack.c.b16 %v146, %v145
    %vm151 = vcmask 261120
    %v153 = vsel %vm151, %v133, 0
    %155 = vmatprep.subr.bf16.mxu0 0
    %156 = vmatpush1.bf16.msra.mxu0 %v147
    %157 = vmatprep.subr.bf16.mxu0 0
    %158 = vmatpush1.bf16.msra.mxu0 %v148
    %159 = vmatprep.subr.bf16.mxu0 0
    %160 = vmatpush1.bf16.msra.mxu0 0
    %161 = vmatprep.subr.bf16.mxu0 0
    %162 = vmatpush1.bf16.msra.mxu0 0
    %163 = vmatprep.subr.bf16.mxu0 0
    %164 = vmatpush1.bf16.msra.mxu0 0
    %165 = vmatprep.subr.bf16.mxu0 0
    %166 = vmatpush1.bf16.msra.mxu0 0
    %167 = vmatprep.subr.bf16.mxu0 0
    %168 = vmatpush1.bf16.msra.mxu0 0
    %169 = vmatprep.subr.bf16.mxu0 0
    %170 = vmatpush1.bf16.msra.mxu0 0
    %171 = vmatprep.subr.bf16.mxu0 0
    %172 = vmatpush1.bf16.msra.mxu0 0
    %173 = vmatprep.subr.bf16.mxu0 0
    %174 = vmatpush1.bf16.msra.mxu0 0
    %175 = vmatprep.subr.bf16.mxu0 0
    %176 = vmatpush1.bf16.msra.mxu0 0
    %177 = vmatprep.subr.bf16.mxu0 0
    %178 = vmatpush1.bf16.msra.mxu0 0
    %179 = vmatprep.subr.bf16.mxu0 0
    %180 = vmatpush1.bf16.msra.mxu0 0
    %181 = vmatprep.subr.bf16.mxu0 0
    %182 = vmatpush1.bf16.msra.mxu0 0
    %183 = vmatprep.subr.bf16.mxu0 0
    %184 = vmatpush1.bf16.msra.mxu0 0
    %185 = vmatprep.subr.bf16.mxu0 0
    %186 = vmatpush1.bf16.msra.mxu0 0
    %187 = vmatprep.mubr.bf16.mxu0 0
    %188 = vmatmul.mubr.bf16.gmra.mrb[0].mxu0 %v153
    %v189 = vpop.f32.mrb[0].mxu0
    %v190 = vadd.f32 %v138, %v189
    %v191 = vpop.f32.mrb[0].mxu0
    %v192 = vpop.f32.mrb[0].mxu0
    %v193 = vadd.f32 %v138, %v192
    %v194 = vpop.f32.mrb[0].mxu0
    %195 = vdwg.mxu0
    %v196 = vsel %vm151, %v190, -inf
    %197 = vmax.xlane.f32.xlu0 %v196
    %v198 = vpop.xlane.xlu0 %197
    %v199 = vsel %vm151, %v193, -inf
    %200 = vmax.xlane.f32.xlu0 %v199
    %v201 = vpop.xlane.xlu0 %200
    %v202 = vsub.f32 %v190, %v198
    %v203 = vsub.f32 %v193, %v201
    %v204 = vmul.f32 %v202, 1.442695
    %v205 = vpow.pop %v204
    %v206 = vmul.f32 %v203, 1.442695
    %v207 = vpow.pop %v206
    %v208 = vsel %vm151, %v205, 0.0
    %209 = vadd.xlane.f32.xlu0 %v208
    %v210 = vpop.xlane.xlu0 %209
    %v211 = vsel %vm151, %v207, 0.0
    %212 = vadd.xlane.f32.xlu0 %v211
    %v213 = vpop.xlane.xlu0 %212
    %v214 = vrcp.pop %v210
    %v215 = vrcp.pop %v213
    %v216 = vmul.f32 %v205, %v214
    %v217 = vmul.f32 %v207, %v215
    %v218 = vld [vmem:[#allocation4 + $0x28] sm:$0xf]
    %v219 = vld [vmem:[#allocation4 + $0x2c] sm:$0x3]
    %v220 = vpack.c.bf16 %v62, %v62
    %v221 = vld [vmem:[#allocation2 + $0x38] sm:$0x1]
    %v222 = vlaneseq
    %v223 = vshrl.u32 %v222, 7
    %v224 = vsub.s32 0, %v223
    %v225 = vrot.slane %v221, %v224
    %v228 = vunpack.c.l.b16 %v218
    %v229 = vunpack.c.l.b16 %v219
    %v230 = vpack.c.b16 %v229, %v228
    %vm231 = vcmask 97280
    %v233 = vsel %vm231, %v220, 0
    %vm235 = vcmask 1045504
    %v237 = vsel %vm235, %v230, 0
    %239 = vmatprep.subr.bf16.mxu0 0
    %240 = vmatpush1.bf16.msra.mxu0 %v237
    %241 = vmatprep.subr.bf16.mxu0 0
    %242 = vmatpush1.bf16.msra.mxu0 0
    %243 = vmatprep.subr.bf16.mxu0 0
    %244 = vmatpush1.bf16.msra.mxu0 0
    %245 = vmatprep.subr.bf16.mxu0 0
    %246 = vmatpush1.bf16.msra.mxu0 0
    %247 = vmatprep.subr.bf16.mxu0 0
    %248 = vmatpush1.bf16.msra.mxu0 0
    %249 = vmatprep.subr.bf16.mxu0 0
    %250 = vmatpush1.bf16.msra.mxu0 0
    %251 = vmatprep.subr.bf16.mxu0 0
    %252 = vmatpush1.bf16.msra.mxu0 0
    %253 = vmatprep.subr.bf16.mxu0 0
    %254 = vmatpush1.bf16.msra.mxu0 0
    %255 = vmatprep.subr.bf16.mxu0 0
    %256 = vmatpush1.bf16.msra.mxu0 0
    %257 = vmatprep.subr.bf16.mxu0 0
    %258 = vmatpush1.bf16.msra.mxu0 0
    %259 = vmatprep.subr.bf16.mxu0 0
    %260 = vmatpush1.bf16.msra.mxu0 0
    %261 = vmatprep.subr.bf16.mxu0 0
    %262 = vmatpush1.bf16.msra.mxu0 0
    %263 = vmatprep.subr.bf16.mxu0 0
    %264 = vmatpush1.bf16.msra.mxu0 0
    %265 = vmatprep.subr.bf16.mxu0 0
    %266 = vmatpush1.bf16.msra.mxu0 0
    %267 = vmatprep.subr.bf16.mxu0 0
    %268 = vmatpush1.bf16.msra.mxu0 0
    %269 = vmatprep.subr.bf16.mxu0 0
    %270 = vmatpush1.bf16.msra.mxu0 0
    %271 = vmatprep.mubr.bf16.mxu0 0
    %272 = vmatmul.mubr.bf16.gmra.mrb[0].mxu0 %v233
    %v273 = vpop.f32.mrb[0].mxu0
    %v274 = vadd.f32 %v225, %v273
    %v275 = vpop.f32.mrb[0].mxu0
    %v276 = vpop.f32.mrb[0].mxu0
    %v277 = vpop.f32.mrb[0].mxu0
    %278 = vdwg.mxu0
    %v279 = vld [vmem:[#allocation4 + $0x90] sm:$0xf]
    %v280 = vld [vmem:[#allocation4 + $0x94] sm:$0xf]
    %v281 = vpack.c.bf16 %v274, %v274
    %v284 = vunpack.c.l.b16 %v279
    %v285 = vunpack.c.l.b16 %v280
    %v286 = vpack.c.b16 %v285, %v284
    %vm287 = vcmask 15360
    %v289 = vsel %vm287, %v286, 0
    %vm291 = vcmask 1040384
    %v293 = vsel %vm291, %v281, 0
    %295 = vmatprep.subr.bf16.mxu0 0
    %296 = vmatpush1.bf16.msra.mxu0 %v293
    %297 = vmatprep.subr.bf16.mxu0 0
    %298 = vmatpush1.bf16.msra.mxu0 0
    %299 = vmatprep.subr.bf16.mxu0 0
    %300 = vmatpush1.bf16.msra.mxu0 0
    %301 = vmatprep.subr.bf16.mxu0 0
    %302 = vmatpush1.bf16.msra.mxu0 0
    %303 = vmatprep.subr.bf16.mxu0 0
    %304 = vmatpush1.bf16.msra.mxu0 0
    %305 = vmatprep.subr.bf16.mxu0 0
    %306 = vmatpush1.bf16.msra.mxu0 0
    %307 = vmatprep.subr.bf16.mxu0 0
    %308 = vmatpush1.bf16.msra.mxu0 0
    %309 = vmatprep.subr.bf16.mxu0 0
    %310 = vmatpush1.bf16.msra.mxu0 0
    %311 = vmatprep.subr.bf16.mxu0 0
    %312 = vmatpush1.bf16.msra.mxu0 0
    %313 = vmatprep.subr.bf16.mxu0 0
    %314 = vmatpush1.bf16.msra.mxu0 0
    %315 = vmatprep.subr.bf16.mxu0 0
    %316 = vmatpush1.bf16.msra.mxu0 0
    %317 = vmatprep.subr.bf16.mxu0 0
    %318 = vmatpush1.bf16.msra.mxu0 0
    %319 = vmatprep.subr.bf16.mxu0 0
    %320 = vmatpush1.bf16.msra.mxu0 0
    %321 = vmatprep.subr.bf16.mxu0 0
    %322 = vmatpush1.bf16.msra.mxu0 0
    %323 = vmatprep.subr.bf16.mxu0 0
    %324 = vmatpush1.bf16.msra.mxu0 0
    %325 = vmatprep.subr.bf16.mxu0 0
    %326 = vmatpush1.bf16.msra.mxu0 0
    %327 = vmatprep.mubr.bf16.mxu0 0
    %328 = vmatmul.mubr.bf16.gmra.mrb[0].mxu0 %v289
    %v329 = vpop.f32.mrb[0].mxu0
    %v330 = vadd.f32 0.0, %v329
    %v331 = vpop.f32.mrb[0].mxu0
    %v332 = vpop.f32.mrb[0].mxu0
    %v333 = vadd.f32 0.0, %v332
    %v334 = vpop.f32.mrb[0].mxu0
    %335 = vdwg.mxu0
    %v336 = vmul.f32 %v216, %v330
    %v337 = vmul.f32 %v217, %v333
    %v338 = vadd.f32 %v127, %v336
    %v339 = vadd.f32 %v128, %v337
    %v340 = vsel %vm151, %v338, 0.0
    %341 = vadd.xlane.f32.xlu0 %v340
    %v342 = vpop.xlane.xlu0 %341
    %v343 = vsel %vm151, %v339, 0.0
    %344 = vadd.xlane.f32.xlu0 %v343
    %v345 = vpop.xlane.xlu0 %344
    %v346 = vrcp.pop 32.0
    %v347 = vmul.f32 %v342, %v346
    %v348 = vmul.f32 %v345, %v346
    %v349 = vsub.f32 %v338, %v347
    %v350 = vsub.f32 %v339, %v348
    %v351 = vmul.f32 %v349, %v349
    %v352 = vmul.f32 %v350, %v350
    %v353 = vsel %vm151, %v351, 0.0
    %354 = vadd.xlane.f32.xlu0 %v353
    %v355 = vpop.xlane.xlu0 %354
    %v356 = vsel %vm151, %v352, 0.0
    %357 = vadd.xlane.f32.xlu0 %v356
    %v358 = vpop.xlane.xlu0 %357
    %v359 = vmul.f32 %v355, %v346
    %v360 = vmul.f32 %v358, %v346
    %v361 = vadd.f32 %v359, 1e-05
    %v362 = vadd.f32 %v360, 1e-05
    %v363 = vrsqrt.pop %v361
    %v364 = vrsqrt.pop %v362
    %v365 = vmul.f32 %v349, %v363
    %v366 = vmul.f32 %v350, %v364
    %v367 = vld [vmem:[#allocation2 + $0x40] sm:$0x1]
    %v368 = vlaneseq
    %v369 = vshrl.u32 %v368, 7
    %v370 = vsub.s32 0, %v369
    %v371 = vrot.slane %v367, %v370
    %v372 = vmul.f32 %v365, %v371
    %v373 = vmul.f32 %v366, %v371
    %v374 = vld [vmem:[#allocation2 + $0x48] sm:$0x1]
    %v375 = vlaneseq
    %v376 = vshrl.u32 %v375, 7
    %v377 = vsub.s32 0, %v376
    %v378 = vrot.slane %v374, %v377
    %v379 = vadd.f32 %v372, %v378
    %v380 = vadd.f32 %v373, %v378
    %v381 = vld [vmem:[#allocation4 + $0xa8] sm:$0xf]
    %v382 = vld [vmem:[#allocation4 + $0xac] sm:$0xf]
    %v383 = vld [vmem:[#allocation4 + $0xb0] sm:$0xf]
    %v384 = vld [vmem:[#allocation4 + $0xb4] sm:$0xf]
    %v385 = vpack.c.bf16 %v380, %v379
    %v390 = vunpack.c.l.b16 %v381
    %v391 = vunpack.c.l.b16 %v382
    %v392 = vunpack.c.l.b16 %v383
    %v393 = vunpack.c.l.b16 %v384
    %v394 = vpack.c.b16 %v391, %v390
    %v395 = vpack.c.b16 %v393, %v392
    %v399 = vsel %vm151, %v385, 0
    %401 = vmatprep.subr.bf16.mxu0 0
    %402 = vmatpush1.bf16.msra.mxu0 %v394
    %403 = vmatprep.subr.bf16.mxu0 0
    %404 = vmatpush1.bf16.msra.mxu0 %v395
    %405 = vmatprep.subr.bf16.mxu0 0
    %406 = vmatpush1.bf16.msra.mxu0 0
    %407 = vmatprep.subr.bf16.mxu0 0
    %408 = vmatpush1.bf16.msra.mxu0 0
    %409 = vmatprep.subr.bf16.mxu0 0
    %410 = vmatpush1.bf16.msra.mxu0 0
    %411 = vmatprep.subr.bf16.mxu0 0
    %412 = vmatpush1.bf16.msra.mxu0 0
    %413 = vmatprep.subr.bf16.mxu0 0
    %414 = vmatpush1.bf16.msra.mxu0 0
    %415 = vmatprep.subr.bf16.mxu0 0
    %416 = vmatpush1.bf16.msra.mxu0 0
    %417 = vmatprep.subr.bf16.mxu0 0
    %418 = vmatpush1.bf16.msra.mxu0 0
    %419 = vmatprep.subr.bf16.mxu0 0
    %420 = vmatpush1.bf16.msra.mxu0 0
    %421 = vmatprep.subr.bf16.mxu0 0
    %422 = vmatpush1.bf16.msra.mxu0 0
    %423 = vmatprep.subr.bf16.mxu0 0
    %424 = vmatpush1.bf16.msra.mxu0 0
    %425 = vmatprep.subr.bf16.mxu0 0
    %426 = vmatpush1.bf16.msra.mxu0 0
    %427 = vmatprep.subr.bf16.mxu0 0
    %428 = vmatpush1.bf16.msra.mxu0 0
    %429 = vmatprep.subr.bf16.mxu0 0
    %430 = vmatpush1.bf16.msra.mxu0 0
    %431 = vmatprep.subr.bf16.mxu0 0
    %432 = vmatpush1.bf16.msra.mxu0 0
    %433 = vmatprep.mubr.bf16.mxu0 0
    %434 = vmatmul.mubr.bf16.gmra.mrb[0].mxu0 %v399
    %v435 = vpop.f32.mrb[0].mxu0
    %v436 = vadd.f32 0.0, %v435
    %v437 = vpop.f32.mrb[0].mxu0
    %v438 = vpop.f32.mrb[0].mxu0
    %v439 = vadd.f32 0.0, %v438
    %v440 = vpop.f32.mrb[0].mxu0
    %441 = vdwg.mxu0
    %v442 = vpack.c.bf16 %v439, %v436
    %v444 = vsel %vm151, %v442, 0
    %446 = vmatprep.subr.bf16.mxu0 0
    %447 = vmatpush1.bf16.xpose.msra.mxu0 %v399
    %448 = vmatprep.subr.bf16.mxu0 0
    %449 = vmatpush1.bf16.xpose.msra.mxu0 0
    %450 = vmatprep.subr.bf16.mxu0 0
    %451 = vmatpush1.bf16.xpose.msra.mxu0 0
    %452 = vmatprep.subr.bf16.mxu0 0
    %453 = vmatpush1.bf16.xpose.msra.mxu0 0
    %454 = vmatprep.subr.bf16.mxu0 0
    %455 = vmatpush1.bf16.xpose.msra.mxu0 0
    %456 = vmatprep.subr.bf16.mxu0 0
    %457 = vmatpush1.bf16.xpose.msra.mxu0 0
    %458 = vmatprep.subr.bf16.mxu0 0
    %459 = vmatpush1.bf16.xpose.msra.mxu0 0
    %460 = vmatprep.subr.bf16.mxu0 0
    %461 = vmatpush1.bf16.xpose.msra.mxu0 0
    %462 = vmatprep.subr.bf16.mxu0 0
    %463 = vmatpush1.bf16.xpose.msra.mxu0 0
    %464 = vmatprep.subr.bf16.mxu0 0
    %465 = vmatpush1.bf16.xpose.msra.mxu0 0
    %466 = vmatprep.subr.bf16.mxu0 0
    %467 = vmatpush1.bf16.xpose.msra.mxu0 0
    %468 = vmatprep.subr.bf16.mxu0 0
    %469 = vmatpush1.bf16.xpose.msra.mxu0 0
    %470 = vmatprep.subr.bf16.mxu0 0
    %471 = vmatpush1.bf16.xpose.msra.mxu0 0
    %472 = vmatprep.subr.bf16.mxu0 0
    %473 = vmatpush1.bf16.xpose.msra.mxu0 0
    %474 = vmatprep.subr.bf16.mxu0 0
    %475 = vmatpush1.bf16.xpose.msra.mxu0 0
    %476 = vmatprep.subr.bf16.mxu0 0
    %477 = vmatpush1.bf16.xpose.msra.mxu0 0
    %478 = vmatprep.mubr.bf16.mxu0 0
    %479 = vmatmul.mubr.bf16.gmra.mrb[0].mxu0 %v444
    %v480 = vpop.f32.mrb[0].mxu0
    %v481 = vadd.f32 %v63, %v480
    %v482 = vpop.f32.mrb[0].mxu0
    %v483 = vpop.f32.mrb[0].mxu0
    %v484 = vadd.f32 %v64, %v483
    %v485 = vpop.f32.mrb[0].mxu0
    %486 = vdwg.mxu0
    %vm487 = vcmask 130048
    %v488 = vsel %vm487, %v481, -inf
    %489 = vmax.xlane.f32.xlu0 %v488
    %v490 = vpop.xlane.xlu0 %489
    %v491 = vsel %vm487, %v484, -inf
    %492 = vmax.xlane.f32.xlu0 %v491
    %v493 = vpop.xlane.xlu0 %492
    %v494 = vsub.f32 %v481, %v490
    %v495 = vsub.f32 %v484, %v493
    %v496 = vmul.f32 %v494, 1.442695
    %v497 = vpow.pop %v496
    %v498 = vmul.f32 %v495, 1.442695
    %v499 = vpow.pop %v498
    %v500 = vsel %vm487, %v497, 0.0
    %501 = vadd.xlane.f32.xlu0 %v500
    %v502 = vpop.xlane.xlu0 %501
    %v503 = vsel %vm487, %v499, 0.0
    %504 = vadd.xlane.f32.xlu0 %v503
    %v505 = vpop.xlane.xlu0 %504
    %v506 = vrcp.pop %v502
    %v507 = vrcp.pop %v505
    %v508 = vmul.f32 %v497, %v506
    %v509 = vmul.f32 %v499, %v507
    %v510 = vld [vmem:[#allocation4 + $0xb8] sm:$0xf]
    %v511 = vld [vmem:[#allocation4 + $0xbc] sm:$0xf]
    %v512 = vld [vmem:[#allocation4 + $0xc0] sm:$0xf]
    %v513 = vld [vmem:[#allocation4 + $0xc4] sm:$0xf]
    %v518 = vunpack.c.l.b16 %v510
    %v519 = vunpack.c.l.b16 %v511
    %v520 = vunpack.c.l.b16 %v512
    %v521 = vunpack.c.l.b16 %v513
    %v522 = vpack.c.b16 %v519, %v518
    %v523 = vpack.c.b16 %v521, %v520
    %526 = vmatprep.subr.bf16.mxu0 0
    %527 = vmatpush1.bf16.msra.mxu0 %v522
    %528 = vmatprep.subr.bf16.mxu0 0
    %529 = vmatpush1.bf16.msra.mxu0 %v523
    %530 = vmatprep.subr.bf16.mxu0 0
    %531 = vmatpush1.bf16.msra.mxu0 0
    %532 = vmatprep.subr.bf16.mxu0 0
    %533 = vmatpush1.bf16.msra.mxu0 0
    %534 = vmatprep.subr.bf16.mxu0 0
    %535 = vmatpush1.bf16.msra.mxu0 0
    %536 = vmatprep.subr.bf16.mxu0 0
    %537 = vmatpush1.bf16.msra.mxu0 0
    %538 = vmatprep.subr.bf16.mxu0 0
    %539 = vmatpush1.bf16.msra.mxu0 0
    %540 = vmatprep.subr.bf16.mxu0 0
    %541 = vmatpush1.bf16.msra.mxu0 0
    %542 = vmatprep.subr.bf16.mxu0 0
    %543 = vmatpush1.bf16.msra.mxu0 0
    %544 = vmatprep.subr.bf16.mxu0 0
    %545 = vmatpush1.bf16.msra.mxu0 0
    %546 = vmatprep.subr.bf16.mxu0 0
    %547 = vmatpush1.bf16.msra.mxu0 0
    %548 = vmatprep.subr.bf16.mxu0 0
    %549 = vmatpush1.bf16.msra.mxu0 0
    %550 = vmatprep.subr.bf16.mxu0 0
    %551 = vmatpush1.bf16.msra.mxu0 0
    %552 = vmatprep.subr.bf16.mxu0 0
    %553 = vmatpush1.bf16.msra.mxu0 0
    %554 = vmatprep.subr.bf16.mxu0 0
    %555 = vmatpush1.bf16.msra.mxu0 0
    %556 = vmatprep.subr.bf16.mxu0 0
    %557 = vmatpush1.bf16.msra.mxu0 0
    %558 = vmatprep.mubr.bf16.mxu0 0
    %559 = vmatmul.mubr.bf16.gmra.mrb[0].mxu0 %v399
    %v560 = vpop.f32.mrb[0].mxu0
    %v561 = vadd.f32 0.0, %v560
    %v562 = vpop.f32.mrb[0].mxu0
    %v563 = vpop.f32.mrb[0].mxu0
    %v564 = vadd.f32 0.0, %v563
    %v565 = vpop.f32.mrb[0].mxu0
    %566 = vdwg.mxu0
    %v567 = vpack.c.bf16 %v509, %v508
    %v568 = vpack.c.bf16 %v564, %v561
    %v570 = vsel %vm487, %v567, 0
    %572 = vmatprep.subr.bf16.mxu0 0
    %573 = vmatpush1.bf16.msra.mxu0 %v568
    %574 = vmatprep.subr.bf16.mxu0 0
    %575 = vmatpush1.bf16.msra.mxu0 0
    %576 = vmatprep.subr.bf16.mxu0 0
    %577 = vmatpush1.bf16.msra.mxu0 0
    %578 = vmatprep.subr.bf16.mxu0 0
    %579 = vmatpush1.bf16.msra.mxu0 0
    %580 = vmatprep.subr.bf16.mxu0 0
    %581 = vmatpush1.bf16.msra.mxu0 0
    %582 = vmatprep.subr.bf16.mxu0 0
    %583 = vmatpush1.bf16.msra.mxu0 0
    %584 = vmatprep.subr.bf16.mxu0 0
    %585 = vmatpush1.bf16.msra.mxu0 0
    %586 = vmatprep.subr.bf16.mxu0 0
    %587 = vmatpush1.bf16.msra.mxu0 0
    %588 = vmatprep.subr.bf16.mxu0 0
    %589 = vmatpush1.bf16.msra.mxu0 0
    %590 = vmatprep.subr.bf16.mxu0 0
    %591 = vmatpush1.bf16.msra.mxu0 0
    %592 = vmatprep.subr.bf16.mxu0 0
    %593 = vmatpush1.bf16.msra.mxu0 0
    %594 = vmatprep.subr.bf16.mxu0 0
    %595 = vmatpush1.bf16.msra.mxu0 0
    %596 = vmatprep.subr.bf16.mxu0 0
    %597 = vmatpush1.bf16.msra.mxu0 0
    %598 = vmatprep.subr.bf16.mxu0 0
    %599 = vmatpush1.bf16.msra.mxu0 0
    %600 = vmatprep.subr.bf16.mxu0 0
    %601 = vmatpush1.bf16.msra.mxu0 0
    %602 = vmatprep.subr.bf16.mxu0 0
    %603 = vmatpush1.bf16.msra.mxu0 0
    %604 = vmatprep.mubr.bf16.mxu0 0
    %605 = vmatmul.mubr.bf16.gmra.mrb[0].mxu0 %v570
    %v606 = vpop.f32.mrb[0].mxu0
    %v607 = vadd.f32 0.0, %v606
    %v608 = vpop.f32.mrb[0].mxu0
    %v609 = vpop.f32.mrb[0].mxu0
    %v610 = vadd.f32 0.0, %v609
    %v611 = vpop.f32.mrb[0].mxu0
    %612 = vdwg.mxu0
    %v613 = vadd.f32 %v379, %v607
    %v614 = vadd.f32 %v380, %v610
    %v615 = vsel %vm151, %v613, 0.0
    %616 = vadd.xlane.f32.xlu0 %v615
    %v617 = vpop.xlane.xlu0 %616
    %v618 = vsel %vm151, %v614, 0.0
    %619 = vadd.xlane.f32.xlu0 %v618
    %v620 = vpop.xlane.xlu0 %619
    %v621 = vmul.f32 %v617, %v346
    %v622 = vmul.f32 %v620, %v346
    %v623 = vsub.f32 %v613, %v621
    %v624 = vsub.f32 %v614, %v622
    %v625 = vmul.f32 %v623, %v623
    %v626 = vmul.f32 %v624, %v624
    %v627 = vsel %vm151, %v625, 0.0
    %628 = vadd.xlane.f32.xlu0 %v627
    %v629 = vpop.xlane.xlu0 %628
    %v630 = vsel %vm151, %v626, 0.0
    %631 = vadd.xlane.f32.xlu0 %v630
    %v632 = vpop.xlane.xlu0 %631
    %v633 = vmul.f32 %v629, %v346
    %v634 = vmul.f32 %v632, %v346
    %v635 = vadd.f32 %v633, 1e-05
    %v636 = vadd.f32 %v634, 1e-05
    %v637 = vrsqrt.pop %v635
    %v638 = vrsqrt.pop %v636
    %v639 = vmul.f32 %v623, %v637
    %v640 = vmul.f32 %v624, %v638
    %v641 = vld [vmem:[#allocation2 + $0xd8] sm:$0x1]
    %v642 = vlaneseq
    %v643 = vshrl.u32 %v642, 7
    %v644 = vsub.s32 0, %v643
    %v645 = vrot.slane %v641, %v644
    %v646 = vmul.f32 %v639, %v645
    %v647 = vmul.f32 %v640, %v645
    %v648 = vld [vmem:[#allocation2 + $0xe0] sm:$0x1]
    %v649 = vlaneseq
    %v650 = vshrl.u32 %v649, 7
    %v651 = vsub.s32 0, %v650
    %v652 = vrot.slane %v648, %v651
    %v653 = vadd.f32 %v646, %v652
    %v654 = vadd.f32 %v647, %v652
    %v655 = vld [vmem:[#allocation4 + $0xc8] sm:$0xf]
    %v656 = vld [vmem:[#allocation4 + $0xcc] sm:$0xf]
    %v657 = vld [vmem:[#allocation4 + $0xd0] sm:$0xf]
    %v658 = vld [vmem:[#allocation4 + $0xd4] sm:$0xf]
    %v659 = vpack.c.bf16 %v654, %v653
    %v660 = vld [vmem:[#allocation2 + $0xc8] sm:$0x1]
    %v661 = vlaneseq
    %v662 = vshrl.u32 %v661, 7
    %v663 = vsub.s32 0, %v662
    %v664 = vrot.slane %v660, %v663
    %v669 = vunpack.c.l.b16 %v655
    %v670 = vunpack.c.l.b16 %v656
    %v671 = vunpack.c.l.b16 %v657
    %v672 = vunpack.c.l.b16 %v658
    %v673 = vpack.c.b16 %v670, %v669
    %v674 = vpack.c.b16 %v672, %v671
    %v678 = vsel %vm151, %v659, 0
    %680 = vmatprep.subr.bf16.mxu0 0
    %681 = vmatpush1.bf16.msra.mxu0 %v673
    %682 = vmatprep.subr.bf16.mxu0 0
    %683 = vmatpush1.bf16.msra.mxu0 %v674
    %684 = vmatprep.subr.bf16.mxu0 0
    %685 = vmatpush1.bf16.msra.mxu0 0
    %686 = vmatprep.subr.bf16.mxu0 0
    %687 = vmatpush1.bf16.msra.mxu0 0
    %688 = vmatprep.subr.bf16.mxu0 0
    %689 = vmatpush1.bf16.msra.mxu0 0
    %690 = vmatprep.subr.bf16.mxu0 0
    %691 = vmatpush1.bf16.msra.mxu0 0
    %692 = vmatprep.subr.bf16.mxu0 0
    %693 = vmatpush1.bf16.msra.mxu0 0
    %694 = vmatprep.subr.bf16.mxu0 0
    %695 = vmatpush1.bf16.msra.mxu0 0
    %696 = vmatprep.subr.bf16.mxu0 0
    %697 = vmatpush1.bf16.msra.mxu0 0
    %698 = vmatprep.subr.bf16.mxu0 0
    %699 = vmatpush1.bf16.msra.mxu0 0
    %700 = vmatprep.subr.bf16.mxu0 0
    %701 = vmatpush1.bf16.msra.mxu0 0
    %702 = vmatprep.subr.bf16.mxu0 0
    %703 = vmatpush1.bf16.msra.mxu0 0
    %704 = vmatprep.subr.bf16.mxu0 0
    %705 = vmatpush1.bf16.msra.mxu0 0
    %706 = vmatprep.subr.bf16.mxu0 0
    %707 = vmatpush1.bf16.msra.mxu0 0
    %708 = vmatprep.subr.bf16.mxu0 0
    %709 = vmatpush1.bf16.msra.mxu0 0
    %710 = vmatprep.subr.bf16.mxu0 0
    %711 = vmatpush1.bf16.msra.mxu0 0
    %712 = vmatprep.mubr.bf16.mxu0 0
    %713 = vmatmul.mubr.bf16.gmra.mrb[0].mxu0 %v678
    %v714 = vpop.f32.mrb[0].mxu0
    %v715 = vadd.f32 %v664, %v714
    %v716 = vpop.f32.mrb[0].mxu0
    %v717 = vpop.f32.mrb[0].mxu0
    %v718 = vadd.f32 %v664, %v717
    %v719 = vpop.f32.mrb[0].mxu0
    %720 = vdwg.mxu0
    %v721 = vmax.f32 %v715, 0.0
    %v722 = vmax.f32 %v718, 0.0
    %v723 = vld [vmem:[#allocation4 + $0xd8] sm:$0xf]
    %v724 = vld [vmem:[#allocation4 + $0xdc] sm:$0xf]
    %v725 = vld [vmem:[#allocation4 + $0xe0] sm:$0xf]
    %v726 = vld [vmem:[#allocation4 + $0xe4] sm:$0xf]
    %v727 = vld [vmem:[#allocation4 + $0xe8] sm:$0xf]
    %v728 = vld [vmem:[#allocation4 + $0xec] sm:$0xf]
    %v729 = vld [vmem:[#allocation4 + $0xf0] sm:$0xf]
    %v730 = vld [vmem:[#allocation4 + $0xf4] sm:$0xf]
    %v731 = vpack.c.bf16 %v722, %v721
    %v732 = vld [vmem:[#allocation2 + $0xd0] sm:$0x1]
    %v733 = vlaneseq
    %v734 = vshrl.u32 %v733, 7
    %v735 = vsub.s32 0, %v734
    %v736 = vrot.slane %v732, %v735
    %v745 = vunpack.c.l.b16 %v723
    %v746 = vunpack.c.l.b16 %v724
    %v747 = vunpack.c.l.b16 %v725
    %v748 = vunpack.c.l.b16 %v726
    %v749 = vunpack.c.l.b16 %v727
    %v750 = vunpack.c.l.b16 %v728
    %v751 = vunpack.c.l.b16 %v729
    %v752 = vunpack.c.l.b16 %v730
    %v753 = vpack.c.b16 %v746, %v745
    %v754 = vpack.c.b16 %v748, %v747
    %v755 = vpack.c.b16 %v750, %v749
    %v756 = vpack.c.b16 %v752, %v751
    %vm761 = vcmask 523264
    %v763 = vsel %vm761, %v731, 0
    %765 = vmatprep.subr.bf16.mxu0 0
    %766 = vmatpush1.bf16.msra.mxu0 %v753
    %767 = vmatprep.subr.bf16.mxu0 0
    %768 = vmatpush1.bf16.msra.mxu0 %v754
    %769 = vmatprep.subr.bf16.mxu0 0
    %770 = vmatpush1.bf16.msra.mxu0 %v755
    %771 = vmatprep.subr.bf16.mxu0 0
    %772 = vmatpush1.bf16.msra.mxu0 %v756
    %773 = vmatprep.subr.bf16.mxu0 0
    %774 = vmatpush1.bf16.msra.mxu0 0
    %775 = vmatprep.subr.bf16.mxu0 0
    %776 = vmatpush1.bf16.msra.mxu0 0
    %777 = vmatprep.subr.bf16.mxu0 0
    %778 = vmatpush1.bf16.msra.mxu0 0
    %779 = vmatprep.subr.bf16.mxu0 0
    %780 = vmatpush1.bf16.msra.mxu0 0
    %781 = vmatprep.subr.bf16.mxu0 0
    %782 = vmatpush1.bf16.msra.mxu0 0
    %783 = vmatprep.subr.bf16.mxu0 0
    %784 = vmatpush1.bf16.msra.mxu0 0
    %785 = vmatprep.subr.bf16.mxu0 0
    %786 = vmatpush1.bf16.msra.mxu0 0
    %787 = vmatprep.subr.bf16.mxu0 0
    %788 = vmatpush1.bf16.msra.mxu0 0
    %789 = vmatprep.subr.bf16.mxu0 0
    %790 = vmatpush1.bf16.msra.mxu0 0
    %791 = vmatprep.subr.bf16.mxu0 0
    %792 = vmatpush1.bf16.msra.mxu0 0
    %793 = vmatprep.subr.bf16.mxu0 0
    %794 = vmatpush1.bf16.msra.mxu0 0
    %795 = vmatprep.subr.bf16.mxu0 0
    %796 = vmatpush1.bf16.msra.mxu0 0
    %797 = vmatprep.mubr.bf16.mxu0 0
    %798 = vmatmul.mubr.bf16.gmra.mrb[0].mxu0 %v763
    %v799 = vpop.f32.mrb[0].mxu0
    %v800 = vadd.f32 %v736, %v799
    %v801 = vpop.f32.mrb[0].mxu0
    %v802 = vpop.f32.mrb[0].mxu0
    %v803 = vadd.f32 %v736, %v802
    %v804 = vpop.f32.mrb[0].mxu0
    %805 = vdwg.mxu0
    %v806 = vadd.f32 %v653, %v800
    %v807 = vadd.f32 %v654, %v803
    %v808 = vsel %vm151, %v806, 0.0
    %809 = vadd.xlane.f32.xlu0 %v808
    %v810 = vpop.xlane.xlu0 %809
    %v811 = vsel %vm151, %v807, 0.0
    %812 = vadd.xlane.f32.xlu0 %v811
    %v813 = vpop.xlane.xlu0 %812
    %v814 = vmul.f32 %v810, %v346
    %v815 = vmul.f32 %v813, %v346
    %v816 = vsub.f32 %v806, %v814
    %v817 = vsub.f32 %v807, %v815
    %v818 = vmul.f32 %v816, %v816
    %v819 = vmul.f32 %v817, %v817
    %v820 = vsel %vm151, %v818, 0.0
    %821 = vadd.xlane.f32.xlu0 %v820
    %v822 = vpop.xlane.xlu0 %821
    %v823 = vsel %vm151, %v819, 0.0
    %824 = vadd.xlane.f32.xlu0 %v823
    %v825 = vpop.xlane.xlu0 %824
    %v826 = vmul.f32 %v822, %v346
    %v827 = vmul.f32 %v825, %v346
    %v828 = vadd.f32 %v826, 1e-05
    %v829 = vadd.f32 %v827, 1e-05
    %v830 = vrsqrt.pop %v828
    %v831 = vrsqrt.pop %v829
    %v832 = vmul.f32 %v816, %v830
    %v833 = vmul.f32 %v817, %v831
    %v834 = vld [vmem:[#allocation2 + $0xe8] sm:$0x1]
    %v835 = vlaneseq
    %v836 = vshrl.u32 %v835, 7
    %v837 = vsub.s32 0, %v836
    %v838 = vrot.slane %v834, %v837
    %v839 = vmul.f32 %v832, %v838
    %v840 = vmul.f32 %v833, %v838
    %v841 = vld [vmem:[#allocation2 + $0xf0] sm:$0x1]
    %v842 = vlaneseq
    %v843 = vshrl.u32 %v842, 7
    %v844 = vsub.s32 0, %v843
    %v845 = vrot.slane %v841, %v844
    %v846 = vadd.f32 %v839, %v845
    %v847 = vadd.f32 %v840, %v845
    %v848 = vld [vmem:[#allocation4 + $0x78] sm:$0xf]
    %v849 = vld [vmem:[#allocation4 + $0x7c] sm:$0xf]
    %v850 = vld [vmem:[#allocation4 + $0x80] sm:$0xf]
    %v851 = vld [vmem:[#allocation4 + $0x84] sm:$0xf]
    %v852 = vpack.c.bf16 %v847, %v846
    %v857 = vunpack.c.l.b16 %v848
    %v858 = vunpack.c.l.b16 %v849
    %v859 = vunpack.c.l.b16 %v850
    %v860 = vunpack.c.l.b16 %v851
    %v861 = vpack.c.b16 %v858, %v857
    %v862 = vpack.c.b16 %v860, %v859
    %v866 = vsel %vm151, %v852, 0
    %868 = vmatprep.subr.bf16.mxu0 0
    %869 = vmatpush1.bf16.msra.mxu0 %v861
    %870 = vmatprep.subr.bf16.mxu0 0
    %871 = vmatpush1.bf16.msra.mxu0 %v862
    %872 = vmatprep.subr.bf16.mxu0 0
    %873 = vmatpush1.bf16.msra.mxu0 0
    %874 = vmatprep.subr.bf16.mxu0 0
    %875 = vmatpush1.bf16.msra.mxu0 0
    %876 = vmatprep.subr.bf16.mxu0 0
    %877 = vmatpush1.bf16.msra.mxu0 0
    %878 = vmatprep.subr.bf16.mxu0 0
    %879 = vmatpush1.bf16.msra.mxu0 0
    %880 = vmatprep.subr.bf16.mxu0 0
    %881 = vmatpush1.bf16.msra.mxu0 0
    %882 = vmatprep.subr.bf16.mxu0 0
    %883 = vmatpush1.bf16.msra.mxu0 0
    %884 = vmatprep.subr.bf16.mxu0 0
    %885 = vmatpush1.bf16.msra.mxu0 0
    %886 = vmatprep.subr.bf16.mxu0 0
    %887 = vmatpush1.bf16.msra.mxu0 0
    %888 = vmatprep.subr.bf16.mxu0 0
    %889 = vmatpush1.bf16.msra.mxu0 0
    %890 = vmatprep.subr.bf16.mxu0 0
    %891 = vmatpush1.bf16.msra.mxu0 0
    %892 = vmatprep.subr.bf16.mxu0 0
    %893 = vmatpush1.bf16.msra.mxu0 0
    %894 = vmatprep.subr.bf16.mxu0 0
    %895 = vmatpush1.bf16.msra.mxu0 0
    %896 = vmatprep.subr.bf16.mxu0 0
    %897 = vmatpush1.bf16.msra.mxu0 0
    %898 = vmatprep.subr.bf16.mxu0 0
    %899 = vmatpush1.bf16.msra.mxu0 0
    %900 = vmatprep.mubr.bf16.mxu0 0
    %901 = vmatmul.mubr.bf16.gmra.mrb[0].mxu0 %v866
    %v902 = vpop.f32.mrb[0].mxu0
    %v903 = vadd.f32 0.0, %v902
    %v904 = vpop.f32.mrb[0].mxu0
    %v905 = vpop.f32.mrb[0].mxu0
    %v906 = vadd.f32 0.0, %v905
    %v907 = vpop.f32.mrb[0].mxu0
    %908 = vdwg.mxu0
    %v909 = vld [vmem:[#allocation2 + $0x98] sm:$0xff]
    %v910 = vld [vmem:[#allocation2 + $0xa0] sm:$0xff]
    %v911 = vmul.f32 %v903, %v909
    %v912 = vmul.f32 %v906, %v910
    %v913 = vld [vmem:[#allocation4 + $0x30] sm:$0xf]
    %v914 = vld [vmem:[#allocation4 + $0x34] sm:$0xf]
    %v915 = vld [vmem:[#allocation4 + $0x38] sm:$0xf]
    %v916 = vld [vmem:[#allocation4 + $0x3c] sm:$0xf]
    %v917 = vld [vmem:[#allocation4 + $0x40] sm:$0xf]
    %v918 = vld [vmem:[#allocation4 + $0x44] sm:$0xf]
    %v919 = vld [vmem:[#allocation4 + $0x48] sm:$0xf]
    %v920 = vld [vmem:[#allocation4 + $0x4c] sm:$0xf]
    %v921 = vld [vmem:[#allocation4 + $0x50] sm:$0xf]
    %v922 = vld [vmem:[#allocation4 + $0x54] sm:$0xf]
    %v923 = vld [vmem:[#allocation4 + $0x58] sm:$0xf]
    %v924 = vld [vmem:[#allocation4 + $0x5c] sm:$0xf]
    %v925 = vld [vmem:[#allocation4 + $0x60] sm:$0xf]
    %v926 = vld [vmem:[#allocation4 + $0x64] sm:$0xf]
    %v927 = vld [vmem:[#allocation4 + $0x68] sm:$0xf]
    %v928 = vld [vmem:[#allocation4 + $0x6c] sm:$0xf]
    %v929 = vpack.c.bf16 %v912, %v911
    %v946 = vunpack.c.l.b16 %v913
    %v947 = vunpack.c.l.b16 %v914
    %v948 = vunpack.c.l.b16 %v915
    %v949 = vunpack.c.l.b16 %v916
    %v950 = vunpack.c.l.b16 %v917
    %v951 = vunpack.c.l.b16 %v918
    %v952 = vunpack.c.l.b16 %v919
    %v953 = vunpack.c.l.b16 %v920
    %v954 = vunpack.c.l.b16 %v921
    %v955 = vunpack.c.l.b16 %v922
    %v956 = vunpack.c.l.b16 %v923
    %v957 = vunpack.c.l.b16 %v924
    %v958 = vunpack.c.l.b16 %v925
    %v959 = vunpack.c.l.b16 %v926
    %v960 = vunpack.c.l.b16 %v927
    %v961 = vunpack.c.l.b16 %v928
    %v962 = vpack.c.b16 %v947, %v946
    %v963 = vpack.c.b16 %v949, %v948
    %v964 = vpack.c.b16 %v951, %v950
    %v965 = vpack.c.b16 %v953, %v952
    %v966 = vpack.c.b16 %v955, %v954
    %v967 = vpack.c.b16 %v957, %v956
    %v968 = vpack.c.b16 %v959, %v958
    %v969 = vpack.c.b16 %v961, %v960
    %978 = vmatprep.subr.bf16.mxu0 0
    %979 = vmatpush1.bf16.msra.mxu0 %v962
    %980 = vmatprep.subr.bf16.mxu0 0
    %981 = vmatpush1.bf16.msra.mxu0 %v963
    %982 = vmatprep.subr.bf16.mxu0 0
    %983 = vmatpush1.bf16.msra.mxu0 %v964
    %984 = vmatprep.subr.bf16.mxu0 0
    %985 = vmatpush1.bf16.msra.mxu0 %v965
    %986 = vmatprep.subr.bf16.mxu0 0
    %987 = vmatpush1.bf16.msra.mxu0 %v966
    %988 = vmatprep.subr.bf16.mxu0 0
    %989 = vmatpush1.bf16.msra.mxu0 %v967
    %990 = vmatprep.subr.bf16.mxu0 0
    %991 = vmatpush1.bf16.msra.mxu0 %v968
    %992 = vmatprep.subr.bf16.mxu0 0
    %993 = vmatpush1.bf16.msra.mxu0 %v969
    %994 = vmatprep.subr.bf16.mxu0 0
    %995 = vmatpush1.bf16.msra.mxu0 0
    %996 = vmatprep.subr.bf16.mxu0 0
    %997 = vmatpush1.bf16.msra.mxu0 0
    %998 = vmatprep.subr.bf16.mxu0 0
    %999 = vmatpush1.bf16.msra.mxu0 0
    %1000 = vmatprep.subr.bf16.mxu0 0
    %1001 = vmatpush1.bf16.msra.mxu0 0
    %1002 = vmatprep.subr.bf16.mxu0 0
    %1003 = vmatpush1.bf16.msra.mxu0 0
    %1004 = vmatprep.subr.bf16.mxu0 0
    %1005 = vmatpush1.bf16.msra.mxu0 0
    %1006 = vmatprep.subr.bf16.mxu0 0
    %1007 = vmatpush1.bf16.msra.mxu0 0
    %1008 = vmatprep.subr.bf16.mxu0 0
    %1009 = vmatpush1.bf16.msra.mxu0 0
    %1010 = vmatprep.mubr.bf16.mxu0 0
    %1011 = vmatmul.mubr.bf16.gmra.mrb[0].mxu0 %v929
    %v1012 = vpop.f32.mrb[0].mxu0
    %v1013 = vadd.f32 0.0, %v1012
    %v1014 = vpop.f32.mrb[0].mxu0
    %v1015 = vpop.f32.mrb[0].mxu0
    %v1016 = vadd.f32 0.0, %v1015
    %v1017 = vpop.f32.mrb[0].mxu0
    %1018 = vdwg.mxu0
    %v1019 = vld [vmem:[#allocation4 + $0xa0] sm:$0x1]
    %v1020 = vpack.c.bf16 %v1016, %v1013
    %v1021 = vld [vmem:[#allocation2 + $0x50] sm:$0x1]
    %v1022 = vlaneseq
    %v1023 = vshrl.u32 %v1022, 7
    %v1024 = vsub.s32 0, %v1023
    %v1025 = vrot.slane %v1021, %v1024
    %v1027 = vsel %vm487, %v1019, 0
    %1029 = vmatprep.subr.bf16.mxu0 0
    %1030 = vmatpush1.bf16.msra.mxu0 %v1020
    %1031 = vmatprep.subr.bf16.mxu0 0
    %1032 = vmatpush1.bf16.msra.mxu0 0
    %1033 = vmatprep.subr.bf16.mxu0 0
    %1034 = vmatpush1.bf16.msra.mxu0 0
    %1035 = vmatprep.subr.bf16.mxu0 0
    %1036 = vmatpush1.bf16.msra.mxu0 0
    %1037 = vmatprep.subr.bf16.mxu0 0
    %1038 = vmatpush1.bf16.msra.mxu0 0
    %1039 = vmatprep.subr.bf16.mxu0 0
    %1040 = vmatpush1.bf16.msra.mxu0 0
    %1041 = vmatprep.subr.bf16.mxu0 0
    %1042 = vmatpush1.bf16.msra.mxu0 0
    %1043 = vmatprep.subr.bf16.mxu0 0
    %1044 = vmatpush1.bf16.msra.mxu0 0
    %1045 = vmatprep.subr.bf16.mxu0 0
    %1046 = vmatpush1.bf16.msra.mxu0 0
    %1047 = vmatprep.subr.bf16.mxu0 0
    %1048 = vmatpush1.bf16.msra.mxu0 0
    %1049 = vmatprep.subr.bf16.mxu0 0
    %1050 = vmatpush1.bf16.msra.mxu0 0
    %1051 = vmatprep.subr.bf16.mxu0 0
    %1052 = vmatpush1.bf16.msra.mxu0 0
    %1053 = vmatprep.subr.bf16.mxu0 0
    %1054 = vmatpush1.bf16.msra.mxu0 0
    %1055 = vmatprep.subr.bf16.mxu0 0
    %1056 = vmatpush1.bf16.msra.mxu0 0
    %1057 = vmatprep.subr.bf16.mxu0 0
    %1058 = vmatpush1.bf16.msra.mxu0 0
    %1059 = vmatprep.subr.bf16.mxu0 0
    %1060 = vmatpush1.bf16.msra.mxu0 0
    %1061 = vmatprep.mubr.bf16.mxu0 0
    %1062 = vmatmul.mubr.bf16.gmra.mrb[0].mxu0 %v1027
    %v1063 = vpop.f32.mrb[0].mxu0
    %v1064 = vadd.f32 %v1025, %v1063
    %v1065 = vpop.f32.mrb[0].mxu0
    %v1066 = vpop.f32.mrb[0].mxu0
    %v1067 = vpop.f32.mrb[0].mxu0
    %1068 = vdwg.mxu0
    %vm1069 = vcmask 123904
    %v1070 = vsel %vm1069, %v1064, -inf
    %1071 = vmax.xlane.f32.xlu0 %v1070
    %v1072 = vpop.xlane.xlu0 %1071
    %v1073 = vsub.f32 %v1064, %v1072
    %v1074 = vmul.f32 %v1073, 1.442695
    %v1075 = vpow.pop %v1074
    %v1076 = vsel %vm1069, %v1075, 0.0
    %1077 = vadd.xlane.f32.xlu0 %v1076
    %v1078 = vpop.xlane.xlu0 %1077
    %v1079 = vrcp.pop %v1078
    %v1080 = vmul.f32 %v1075, %v1079
    %v1081 = vpack.c.bf16 %v1080, %v1080
    %v1083 = vsel %vm291, %v1081, 0
    %1085 = vmatprep.subr.bf16.mxu0 0
    %1086 = vmatpush1.bf16.msra.mxu0 %v1083
    %1087 = vmatprep.subr.bf16.mxu0 0
    %1088 = vmatpush1.bf16.msra.mxu0 0
    %1089 = vmatprep.subr.bf16.mxu0 0
    %1090 = vmatpush1.bf16.msra.mxu0 0
    %1091 = vmatprep.subr.bf16.mxu0 0
    %1092 = vmatpush1.bf16.msra.mxu0 0
    %1093 = vmatprep.subr.bf16.mxu0 0
    %1094 = vmatpush1.bf16.msra.mxu0 0
    %1095 = vmatprep.subr.bf16.mxu0 0
    %1096 = vmatpush1.bf16.msra.mxu0 0
    %1097 = vmatprep.subr.bf16.mxu0 0
    %1098 = vmatpush1.bf16.msra.mxu0 0
    %1099 = vmatprep.subr.bf16.mxu0 0
    %1100 = vmatpush1.bf16.msra.mxu0 0
    %1101 = vmatprep.subr.bf16.mxu0 0
    %1102 = vmatpush1.bf16.msra.mxu0 0
    %1103 = vmatprep.subr.bf16.mxu0 0
    %1104 = vmatpush1.bf16.msra.mxu0 0
    %1105 = vmatprep.subr.bf16.mxu0 0
    %1106 = vmatpush1.bf16.msra.mxu0 0
    %1107 = vmatprep.subr.bf16.mxu0 0
    %1108 = vmatpush1.bf16.msra.mxu0 0
    %1109 = vmatprep.subr.bf16.mxu0 0
    %1110 = vmatpush1.bf16.msra.mxu0 0
    %1111 = vmatprep.subr.bf16.mxu0 0
    %1112 = vmatpush1.bf16.msra.mxu0 0
    %1113 = vmatprep.subr.bf16.mxu0 0
    %1114 = vmatpush1.bf16.msra.mxu0 0
    %1115 = vmatprep.subr.bf16.mxu0 0
    %1116 = vmatpush1.bf16.msra.mxu0 0
    %1117 = vmatprep.mubr.bf16.mxu0 0
    %1118 = vmatmul.mubr.bf16.gmra.mrb[0].mxu0 %v289
    %v1119 = vpop.f32.mrb[0].mxu0
    %v1120 = vadd.f32 0.0, %v1119
    %v1121 = vpop.f32.mrb[0].mxu0
    %v1122 = vpop.f32.mrb[0].mxu0
    %v1123 = vadd.f32 0.0, %v1122
    %v1124 = vpop.f32.mrb[0].mxu0
    %1125 = vdwg.mxu0
    %v1126 = vmul.f32 %v1120, %v60
    %v1127 = vmul.f32 %v1123, %v61
    %v1128 = vld [vmem:[#allocation4 + $0x70] sm:$0xf]
    %v1129 = vld [vmem:[#allocation4 + $0x74] sm:$0xf]
    %v1130 = vpack.c.bf16 %v1127, %v1126
    %v1131 = vld [vmem:[#allocation2 + $0x58] sm:$0x1]
    %v1132 = vlaneseq
    %v1133 = vshrl.u32 %v1132, 7
    %v1134 = vsub.s32 0, %v1133
    %v1135 = vrot.slane %v1131, %v1134
    %v1138 = vunpack.c.l.b16 %v1128
    %v1139 = vunpack.c.l.b16 %v1129
    %v1140 = vpack.c.b16 %v1139, %v1138
    %v1143 = vsel %vm487, %v1130, 0
    %1145 = vmatprep.subr.bf16.mxu0 0
    %1146 = vmatpush1.bf16.msra.mxu0 %v1140
    %1147 = vmatprep.subr.bf16.mxu0 0
    %1148 = vmatpush1.bf16.msra.mxu0 0
    %1149 = vmatprep.subr.bf16.mxu0 0
    %1150 = vmatpush1.bf16.msra.mxu0 0
    %1151 = vmatprep.subr.bf16.mxu0 0
    %1152 = vmatpush1.bf16.msra.mxu0 0
    %1153 = vmatprep.subr.bf16.mxu0 0
    %1154 = vmatpush1.bf16.msra.mxu0 0
    %1155 = vmatprep.subr.bf16.mxu0 0
    %1156 = vmatpush1.bf16.msra.mxu0 0
    %1157 = vmatprep.subr.bf16.mxu0 0
    %1158 = vmatpush1.bf16.msra.mxu0 0
    %1159 = vmatprep.subr.bf16.mxu0 0
    %1160 = vmatpush1.bf16.msra.mxu0 0
    %1161 = vmatprep.subr.bf16.mxu0 0
    %1162 = vmatpush1.bf16.msra.mxu0 0
    %1163 = vmatprep.subr.bf16.mxu0 0
    %1164 = vmatpush1.bf16.msra.mxu0 0
    %1165 = vmatprep.subr.bf16.mxu0 0
    %1166 = vmatpush1.bf16.msra.mxu0 0
    %1167 = vmatprep.subr.bf16.mxu0 0
    %1168 = vmatpush1.bf16.msra.mxu0 0
    %1169 = vmatprep.subr.bf16.mxu0 0
    %1170 = vmatpush1.bf16.msra.mxu0 0
    %1171 = vmatprep.subr.bf16.mxu0 0
    %1172 = vmatpush1.bf16.msra.mxu0 0
    %1173 = vmatprep.subr.bf16.mxu0 0
    %1174 = vmatpush1.bf16.msra.mxu0 0
    %1175 = vmatprep.subr.bf16.mxu0 0
    %1176 = vmatpush1.bf16.msra.mxu0 0
    %1177 = vmatprep.mubr.bf16.mxu0 0
    %1178 = vmatmul.mubr.bf16.gmra.mrb[0].mxu0 %v1143
    %v1179 = vpop.f32.mrb[0].mxu0
    %v1180 = vadd.f32 %v1135, %v1179
    %v1181 = vpop.f32.mrb[0].mxu0
    %v1182 = vpop.f32.mrb[0].mxu0
    %v1183 = vadd.f32 %v1135, %v1182
    %v1184 = vpop.f32.mrb[0].mxu0
    %1185 = vdwg.mxu0
    %v1186 = vld [vmem:[#allocation2 + $0x90] sm:$0x1]
    %v1187 = vlaneseq
    %v1188 = vshrl.u32 %v1187, 7
    %v1189 = vsub.s32 0, %v1188
    %v1190 = vrot.slane %v1186, %v1189
    %v1191 = vmul.f32 %v846, %v1190
    %v1192 = vmul.f32 %v847, %v1190
    %v1193 = vld [vmem:[#allocation4 + $0x88] sm:$0xf]
    %v1194 = vld [vmem:[#allocation4 + $0x8c] sm:$0xf]
    %v1195 = vpack.c.bf16 %v1183, %v1180
    %v1198 = vunpack.c.l.b16 %v1193
    %v1199 = vunpack.c.l.b16 %v1194
    %v1200 = vpack.c.b16 %v1199, %v1198
    %v1203 = vsel %vm487, %v1195, 0
    %1205 = vmatprep.subr.bf16.mxu0 0
    %1206 = vmatpush1.bf16.msra.mxu0 %v1200
    %1207 = vmatprep.subr.bf16.mxu0 0
    %1208 = vmatpush1.bf16.msra.mxu0 0
    %1209 = vmatprep.subr.bf16.mxu0 0
    %1210 = vmatpush1.bf16.msra.mxu0 0
    %1211 = vmatprep.subr.bf16.mxu0 0
    %1212 = vmatpush1.bf16.msra.mxu0 0
    %1213 = vmatprep.subr.bf16.mxu0 0
    %1214 = vmatpush1.bf16.msra.mxu0 0
    %1215 = vmatprep.subr.bf16.mxu0 0
    %1216 = vmatpush1.bf16.msra.mxu0 0
    %1217 = vmatprep.subr.bf16.mxu0 0
    %1218 = vmatpush1.bf16.msra.mxu0 0
    %1219 = vmatprep.subr.bf16.mxu0 0
    %1220 = vmatpush1.bf16.msra.mxu0 0
    %1221 = vmatprep.subr.bf16.mxu0 0
    %1222 = vmatpush1.bf16.msra.mxu0 0
    %1223 = vmatprep.subr.bf16.mxu0 0
    %1224 = vmatpush1.bf16.msra.mxu0 0
    %1225 = vmatprep.subr.bf16.mxu0 0
    %1226 = vmatpush1.bf16.msra.mxu0 0
    %1227 = vmatprep.subr.bf16.mxu0 0
    %1228 = vmatpush1.bf16.msra.mxu0 0
    %1229 = vmatprep.subr.bf16.mxu0 0
    %1230 = vmatpush1.bf16.msra.mxu0 0
    %1231 = vmatprep.subr.bf16.mxu0 0
    %1232 = vmatpush1.bf16.msra.mxu0 0
    %1233 = vmatprep.subr.bf16.mxu0 0
    %1234 = vmatpush1.bf16.msra.mxu0 0
    %1235 = vmatprep.subr.bf16.mxu0 0
    %1236 = vmatpush1.bf16.msra.mxu0 0
    %1237 = vmatprep.mubr.bf16.mxu0 0
    %1238 = vmatmul.mubr.bf16.gmra.mrb[0].mxu0 %v1203
    %v1239 = vpop.f32.mrb[0].mxu0
    %v1240 = vadd.f32 0.0, %v1239
    %v1241 = vpop.f32.mrb[0].mxu0
    %v1242 = vpop.f32.mrb[0].mxu0
    %v1243 = vadd.f32 0.0, %v1242
    %v1244 = vpop.f32.mrb[0].mxu0
    %1245 = vdwg.mxu0
    %v1246 = vadd.f32 %v1191, %v1240
    %v1247 = vadd.f32 %v1192, %v1243
    %v1248 = vld [vmem:[#allocation4 + $0xf8] sm:$0xf]
    %v1249 = vld [vmem:[#allocation4 + $0xfc] sm:$0xf]
    %v1250 = vld [vmem:[#allocation4 + $0x100] sm:$0xf]
    %v1251 = vld [vmem:[#allocation4 + $0x104] sm:$0xf]
    %v1252 = vpack.c.bf16 %v1247, %v1246
    %v1257 = vunpack.c.l.b16 %v1248
    %v1258 = vunpack.c.l.b16 %v1249
    %v1259 = vunpack.c.l.b16 %v1250
    %v1260 = vunpack.c.l.b16 %v1251
    %v1261 = vpack.c.b16 %v1258, %v1257
    %v1262 = vpack.c.b16 %v1260, %v1259
    %v1266 = vsel %vm151, %v1252, 0
    %1268 = vmatprep.subr.bf16.mxu0 0
    %1269 = vmatpush1.bf16.msra.mxu0 %v1261
    %1270 = vmatprep.subr.bf16.mxu0 0
    %1271 = vmatpush1.bf16.msra.mxu0 %v1262
    %1272 = vmatprep.subr.bf16.mxu0 0
    %1273 = vmatpush1.bf16.msra.mxu0 0
    %1274 = vmatprep.subr.bf16.mxu0 0
    %1275 = vmatpush1.bf16.msra.mxu0 0
    %1276 = vmatprep.subr.bf16.mxu0 0
    %1277 = vmatpush1.bf16.msra.mxu0 0
    %1278 = vmatprep.subr.bf16.mxu0 0
    %1279 = vmatpush1.bf16.msra.mxu0 0
    %1280 = vmatprep.subr.bf16.mxu0 0
    %1281 = vmatpush1.bf16.msra.mxu0 0
    %1282 = vmatprep.subr.bf16.mxu0 0
    %1283 = vmatpush1.bf16.msra.mxu0 0
    %1284 = vmatprep.subr.bf16.mxu0 0
    %1285 = vmatpush1.bf16.msra.mxu0 0
    %1286 = vmatprep.subr.bf16.mxu0 0
    %1287 = vmatpush1.bf16.msra.mxu0 0
    %1288 = vmatprep.subr.bf16.mxu0 0
    %1289 = vmatpush1.bf16.msra.mxu0 0
    %1290 = vmatprep.subr.bf16.mxu0 0
    %1291 = vmatpush1.bf16.msra.mxu0 0
    %1292 = vmatprep.subr.bf16.mxu0 0
    %1293 = vmatpush1.bf16.msra.mxu0 0
    %1294 = vmatprep.subr.bf16.mxu0 0
    %1295 = vmatpush1.bf16.msra.mxu0 0
    %1296 = vmatprep.subr.bf16.mxu0 0
    %1297 = vmatpush1.bf16.msra.mxu0 0
    %1298 = vmatprep.subr.bf16.mxu0 0
    %1299 = vmatpush1.bf16.msra.mxu0 0
    %1300 = vmatprep.mubr.bf16.mxu0 0
    %1301 = vmatmul.mubr.bf16.gmra.mrb[0].mxu0 %v1266
    %v1302 = vpop.f32.mrb[0].mxu0
    %v1303 = vadd.f32 0.0, %v1302
    %v1304 = vpop.f32.mrb[0].mxu0
    %v1305 = vpop.f32.mrb[0].mxu0
    %v1306 = vadd.f32 0.0, %v1305
    %v1307 = vpop.f32.mrb[0].mxu0
    %1308 = vdwg.mxu0
    %v1309 = vpack.c.bf16 %v1306, %v1303
    %v1311 = vsel %vm151, %v1309, 0
    %1313 = vmatprep.subr.bf16.mxu0 0
    %1314 = vmatpush1.bf16.xpose.msra.mxu0 %v1266
    %1315 = vmatprep.subr.bf16.mxu0 0
    %1316 = vmatpush1.bf16.xpose.msra.mxu0 0
    %1317 = vmatprep.subr.bf16.mxu0 0
    %1318 = vmatpush1.bf16.xpose.msra.mxu0 0
    %1319 = vmatprep.subr.bf16.mxu0 0
    %1320 = vmatpush1.bf16.xpose.msra.mxu0 0
    %1321 = vmatprep.subr.bf16.mxu0 0
    %1322 = vmatpush1.bf16.xpose.msra.mxu0 0
    %1323 = vmatprep.subr.bf16.mxu0 0
    %1324 = vmatpush1.bf16.xpose.msra.mxu0 0
    %1325 = vmatprep.subr.bf16.mxu0 0
    %1326 = vmatpush1.bf16.xpose.msra.mxu0 0
    %1327 = vmatprep.subr.bf16.mxu0 0
    %1328 = vmatpush1.bf16.xpose.msra.mxu0 0
    %1329 = vmatprep.subr.bf16.mxu0 0
    %1330 = vmatpush1.bf16.xpose.msra.mxu0 0
    %1331 = vmatprep.subr.bf16.mxu0 0
    %1332 = vmatpush1.bf16.xpose.msra.mxu0 0
    %1333 = vmatprep.subr.bf16.mxu0 0
    %1334 = vmatpush1.bf16.xpose.msra.mxu0 0
    %1335 = vmatprep.subr.bf16.mxu0 0
    %1336 = vmatpush1.bf16.xpose.msra.mxu0 0
    %1337 = vmatprep.subr.bf16.mxu0 0
    %1338 = vmatpush1.bf16.xpose.msra.mxu0 0
    %1339 = vmatprep.subr.bf16.mxu0 0
    %1340 = vmatpush1.bf16.xpose.msra.mxu0 0
    %1341 = vmatprep.subr.bf16.mxu0 0
    %1342 = vmatpush1.bf16.xpose.msra.mxu0 0
    %1343 = vmatprep.subr.bf16.mxu0 0
    %1344 = vmatpush1.bf16.xpose.msra.mxu0 0
    %1345 = vmatprep.mubr.bf16.mxu0 0
    %1346 = vmatmul.mubr.bf16.gmra.mrb[0].mxu0 %v1311
    %v1347 = vpop.f32.mrb[0].mxu0
    %v1348 = vadd.f32 %v63, %v1347
    %v1349 = vpop.f32.mrb[0].mxu0
    %v1350 = vpop.f32.mrb[0].mxu0
    %v1351 = vadd.f32 %v64, %v1350
    %v1352 = vpop.f32.mrb[0].mxu0
    %1353 = vdwg.mxu0
    %v1354 = vsel %vm487, %v1348, -inf
    %1355 = vmax.xlane.f32.xlu0 %v1354
    %v1356 = vpop.xlane.xlu0 %1355
    %v1357 = vsel %vm487, %v1351, -inf
    %1358 = vmax.xlane.f32.xlu0 %v1357
    %v1359 = vpop.xlane.xlu0 %1358
    %v1360 = vsub.f32 %v1348, %v1356
    %v1361 = vsub.f32 %v1351, %v1359
    %v1362 = vmul.f32 %v1360, 1.442695
    %v1363 = vpow.pop %v1362
    %v1364 = vmul.f32 %v1361, 1.442695
    %v1365 = vpow.pop %v1364
    %v1366 = vsel %vm487, %v1363, 0.0
    %1367 = vadd.xlane.f32.xlu0 %v1366
    %v1368 = vpop.xlane.xlu0 %1367
    %v1369 = vsel %vm487, %v1365, 0.0
    %1370 = vadd.xlane.f32.xlu0 %v1369
    %v1371 = vpop.xlane.xlu0 %1370
    %v1372 = vrcp.pop %v1368
    %v1373 = vrcp.pop %v1371
    %v1374 = vmul.f32 %v1363, %v1372
    %v1375 = vmul.f32 %v1365, %v1373
    %v1376 = vld [vmem:[#allocation4 + $0x108] sm:$0xf]
    %v1377 = vld [vmem:[#allocation4 + $0x10c] sm:$0xf]
    %v1378 = vld [vmem:[#allocation4 + $0x110] sm:$0xf]
    %v1379 = vld [vmem:[#allocation4 + $0x114] sm:$0xf]
    %v1384 = vunpack.c.l.b16 %v1376
    %v1385 = vunpack.c.l.b16 %v1377
    %v1386 = vunpack.c.l.b16 %v1378
    %v1387 = vunpack.c.l.b16 %v1379
    %v1388 = vpack.c.b16 %v1385, %v1384
    %v1389 = vpack.c.b16 %v1387, %v1386
    %1392 = vmatprep.subr.bf16.mxu0 0
    %1393 = vmatpush1.bf16.msra.mxu0 %v1388
    %1394 = vmatprep.subr.bf16.mxu0 0
    %1395 = vmatpush1.bf16.msra.mxu0 %v1389
    %1396 = vmatprep.subr.bf16.mxu0 0
    %1397 = vmatpush1.bf16.msra.mxu0 0
    %1398 = vmatprep.subr.bf16.mxu0 0
    %1399 = vmatpush1.bf16.msra.mxu0 0
    %1400 = vmatprep.subr.bf16.mxu0 0
    %1401 = vmatpush1.bf16.msra.mxu0 0
    %1402 = vmatprep.subr.bf16.mxu0 0
    %1403 = vmatpush1.bf16.msra.mxu0 0
    %1404 = vmatprep.subr.bf16.mxu0 0
    %1405 = vmatpush1.bf16.msra.mxu0 0
    %1406 = vmatprep.subr.bf16.mxu0 0
    %1407 = vmatpush1.bf16.msra.mxu0 0
    %1408 = vmatprep.subr.bf16.mxu0 0
    %1409 = vmatpush1.bf16.msra.mxu0 0
    %1410 = vmatprep.subr.bf16.mxu0 0
    %1411 = vmatpush1.bf16.msra.mxu0 0
    %1412 = vmatprep.subr.bf16.mxu0 0
    %1413 = vmatpush1.bf16.msra.mxu0 0
    %1414 = vmatprep.subr.bf16.mxu0 0
    %1415 = vmatpush1.bf16.msra.mxu0 0
    %1416 = vmatprep.subr.bf16.mxu0 0
    %1417 = vmatpush1.bf16.msra.mxu0 0
    %1418 = vmatprep.subr.bf16.mxu0 0
    %1419 = vmatpush1.bf16.msra.mxu0 0
    %1420 = vmatprep.subr.bf16.mxu0 0
    %1421 = vmatpush1.bf16.msra.mxu0 0
    %1422 = vmatprep.subr.bf16.mxu0 0
    %1423 = vmatpush1.bf16.msra.mxu0 0
    %1424 = vmatprep.mubr.bf16.mxu0 0
    %1425 = vmatmul.mubr.bf16.gmra.mrb[0].mxu0 %v1266
    %v1426 = vpop.f32.mrb[0].mxu0
    %v1427 = vadd.f32 0.0, %v1426
    %v1428 = vpop.f32.mrb[0].mxu0
    %v1429 = vpop.f32.mrb[0].mxu0
    %v1430 = vadd.f32 0.0, %v1429
    %v1431 = vpop.f32.mrb[0].mxu0
    %1432 = vdwg.mxu0
    %v1433 = vpack.c.bf16 %v1375, %v1374
    %v1434 = vpack.c.bf16 %v1430, %v1427
    %v1436 = vsel %vm487, %v1433, 0
    %1438 = vmatprep.subr.bf16.mxu0 0
    %1439 = vmatpush1.bf16.msra.mxu0 %v1434
    %1440 = vmatprep.subr.bf16.mxu0 0
    %1441 = vmatpush1.bf16.msra.mxu0 0
    %1442 = vmatprep.subr.bf16.mxu0 0
    %1443 = vmatpush1.bf16.msra.mxu0 0
    %1444 = vmatprep.subr.bf16.mxu0 0
    %1445 = vmatpush1.bf16.msra.mxu0 0
    %1446 = vmatprep.subr.bf16.mxu0 0
    %1447 = vmatpush1.bf16.msra.mxu0 0
    %1448 = vmatprep.subr.bf16.mxu0 0
    %1449 = vmatpush1.bf16.msra.mxu0 0
    %1450 = vmatprep.subr.bf16.mxu0 0
    %1451 = vmatpush1.bf16.msra.mxu0 0
    %1452 = vmatprep.subr.bf16.mxu0 0
    %1453 = vmatpush1.bf16.msra.mxu0 0
    %1454 = vmatprep.subr.bf16.mxu0 0
    %1455 = vmatpush1.bf16.msra.mxu0 0
    %1456 = vmatprep.subr.bf16.mxu0 0
    %1457 = vmatpush1.bf16.msra.mxu0 0
    %1458 = vmatprep.subr.bf16.mxu0 0
    %1459 = vmatpush1.bf16.msra.mxu0 0
    %1460 = vmatprep.subr.bf16.mxu0 0
    %1461 = vmatpush1.bf16.msra.mxu0 0
    %1462 = vmatprep.subr.bf16.mxu0 0
    %1463 = vmatpush1.bf16.msra.mxu0 0
    %1464 = vmatprep.subr.bf16.mxu0 0
    %1465 = vmatpush1.bf16.msra.mxu0 0
    %1466 = vmatprep.subr.bf16.mxu0 0
    %1467 = vmatpush1.bf16.msra.mxu0 0
    %1468 = vmatprep.subr.bf16.mxu0 0
    %1469 = vmatpush1.bf16.msra.mxu0 0
    %1470 = vmatprep.mubr.bf16.mxu0 0
    %1471 = vmatmul.mubr.bf16.gmra.mrb[0].mxu0 %v1436
    %v1472 = vpop.f32.mrb[0].mxu0
    %v1473 = vadd.f32 0.0, %v1472
    %v1474 = vpop.f32.mrb[0].mxu0
    %v1475 = vpop.f32.mrb[0].mxu0
    %v1476 = vadd.f32 0.0, %v1475
    %v1477 = vpop.f32.mrb[0].mxu0
    %1478 = vdwg.mxu0
    %v1479 = vadd.f32 %v1246, %v1473
    %v1480 = vadd.f32 %v1247, %v1476
    %v1481 = vsel %vm151, %v1479, 0.0
    %1482 = vadd.xlane.f32.xlu0 %v1481
    %v1483 = vpop.xlane.xlu0 %1482
    %v1484 = vsel %vm151, %v1480, 0.0
    %1485 = vadd.xlane.f32.xlu0 %v1484
    %v1486 = vpop.xlane.xlu0 %1485
    %v1487 = vmul.f32 %v1483, %v346
    %v1488 = vmul.f32 %v1486, %v346
    %v1489 = vsub.f32 %v1479, %v1487
    %v1490 = vsub.f32 %v1480, %v1488
    %v1491 = vmul.f32 %v1489, %v1489
    %v1492 = vmul.f32 %v1490, %v1490
    %v1493 = vsel %vm151, %v1491, 0.0
    %1494 = vadd.xlane.f32.xlu0 %v1493
    %v1495 = vpop.xlane.xlu0 %1494
    %v1496 = vsel %vm151, %v1492, 0.0
    %1497 = vadd.xlane.f32.xlu0 %v1496
    %v1498 = vpop.xlane.xlu0 %1497
    %v1499 = vmul.f32 %v1495, %v346
    %v1500 = vmul.f32 %v1498, %v346
    %v1501 = vadd.f32 %v1499, 1e-05
    %v1502 = vadd.f32 %v1500, 1e-05
    %v1503 = vrsqrt.pop %v1501
    %v1504 = vrsqrt.pop %v1502
    %v1505 = vmul.f32 %v1489, %v1503
    %v1506 = vmul.f32 %v1490, %v1504
    %v1507 = vld [vmem:[#allocation2 + $0x108] sm:$0x1]
    %v1508 = vlaneseq
    %v1509 = vshrl.u32 %v1508, 7
    %v1510 = vsub.s32 0, %v1509
    %v1511 = vrot.slane %v1507, %v1510
    %v1512 = vmul.f32 %v1505, %v1511
    %v1513 = vmul.f32 %v1506, %v1511
    %v1514 = vld [vmem:[#allocation2 + $0x110] sm:$0x1]
    %v1515 = vlaneseq
    %v1516 = vshrl.u32 %v1515, 7
    %v1517 = vsub.s32 0, %v1516
    %v1518 = vrot.slane %v1514, %v1517
    %v1519 = vadd.f32 %v1512, %v1518
    %v1520 = vadd.f32 %v1513, %v1518
    %v1521 = vld [vmem:[#allocation4 + $0x118] sm:$0xf]
    %v1522 = vld [vmem:[#allocation4 + $0x11c] sm:$0xf]
    %v1523 = vld [vmem:[#allocation4 + $0x120] sm:$0xf]
    %v1524 = vld [vmem:[#allocation4 + $0x124] sm:$0xf]
    %v1525 = vpack.c.bf16 %v1520, %v1519
    %v1526 = vld [vmem:[#allocation2 + $0xf8] sm:$0x1]
    %v1527 = vlaneseq
    %v1528 = vshrl.u32 %v1527, 7
    %v1529 = vsub.s32 0, %v1528
    %v1530 = vrot.slane %v1526, %v1529
    %v1535 = vunpack.c.l.b16 %v1521
    %v1536 = vunpack.c.l.b16 %v1522
    %v1537 = vunpack.c.l.b16 %v1523
    %v1538 = vunpack.c.l.b16 %v1524
    %v1539 = vpack.c.b16 %v1536, %v1535
    %v1540 = vpack.c.b16 %v1538, %v1537
    %v1544 = vsel %vm151, %v1525, 0
    %1546 = vmatprep.subr.bf16.mxu0 0
    %1547 = vmatpush1.bf16.msra.mxu0 %v1539
    %1548 = vmatprep.subr.bf16.mxu0 0
    %1549 = vmatpush1.bf16.msra.mxu0 %v1540
    %1550 = vmatprep.subr.bf16.mxu0 0
    %1551 = vmatpush1.bf16.msra.mxu0 0
    %1552 = vmatprep.subr.bf16.mxu0 0
    %1553 = vmatpush1.bf16.msra.mxu0 0
    %1554 = vmatprep.subr.bf16.mxu0 0
    %1555 = vmatpush1.bf16.msra.mxu0 0
    %1556 = vmatprep.subr.bf16.mxu0 0
    %1557 = vmatpush1.bf16.msra.mxu0 0
    %1558 = vmatprep.subr.bf16.mxu0 0
    %1559 = vmatpush1.bf16.msra.mxu0 0
    %1560 = vmatprep.subr.bf16.mxu0 0
    %1561 = vmatpush1.bf16.msra.mxu0 0
    %1562 = vmatprep.subr.bf16.mxu0 0
    %1563 = vmatpush1.bf16.msra.mxu0 0
    %1564 = vmatprep.subr.bf16.mxu0 0
    %1565 = vmatpush1.bf16.msra.mxu0 0
    %1566 = vmatprep.subr.bf16.mxu0 0
    %1567 = vmatpush1.bf16.msra.mxu0 0
    %1568 = vmatprep.subr.bf16.mxu0 0
    %1569 = vmatpush1.bf16.msra.mxu0 0
    %1570 = vmatprep.subr.bf16.mxu0 0
    %1571 = vmatpush1.bf16.msra.mxu0 0
    %1572 = vmatprep.subr.bf16.mxu0 0
    %1573 = vmatpush1.bf16.msra.mxu0 0
    %1574 = vmatprep.subr.bf16.mxu0 0
    %1575 = vmatpush1.bf16.msra.mxu0 0
    %1576 = vmatprep.subr.bf16.mxu0 0
    %1577 = vmatpush1.bf16.msra.mxu0 0
    %1578 = vmatprep.mubr.bf16.mxu0 0
    %1579 = vmatmul.mubr.bf16.gmra.mrb[0].mxu0 %v1544
    %v1580 = vpop.f32.mrb[0].mxu0
    %v1581 = vadd.f32 %v1530, %v1580
    %v1582 = vpop.f32.mrb[0].mxu0
    %v1583 = vpop.f32.mrb[0].mxu0
    %v1584 = vadd.f32 %v1530, %v1583
    %v1585 = vpop.f32.mrb[0].mxu0
    %1586 = vdwg.mxu0
    %v1587 = vmax.f32 %v1581, 0.0
    %v1588 = vmax.f32 %v1584, 0.0
    %v1589 = vld [vmem:[#allocation4 + $0x128] sm:$0xf]
    %v1590 = vld [vmem:[#allocation4 + $0x12c] sm:$0xf]
    %v1591 = vld [vmem:[#allocation4 + $0x130] sm:$0xf]
    %v1592 = vld [vmem:[#allocation4 + $0x134] sm:$0xf]
    %v1593 = vld [vmem:[#allocation4 + $0x138] sm:$0xf]
    %v1594 = vld [vmem:[#allocation4 + $0x13c] sm:$0xf]
    %v1595 = vld [vmem:[#allocation4 + $0x140] sm:$0xf]
    %v1596 = vld [vmem:[#allocation4 + $0x144] sm:$0xf]
    %v1597 = vpack.c.bf16 %v1588, %v1587
    %v1598 = vld [vmem:[#allocation2 + $0x100] sm:$0x1]
    %v1599 = vlaneseq
    %v1600 = vshrl.u32 %v1599, 7
    %v1601 = vsub.s32 0, %v1600
    %v1602 = vrot.slane %v1598, %v1601
    %v1611 = vunpack.c.l.b16 %v1589
    %v1612 = vunpack.c.l.b16 %v1590
    %v1613 = vunpack.c.l.b16 %v1591
    %v1614 = vunpack.c.l.b16 %v1592
    %v1615 = vunpack.c.l.b16 %v1593
    %v1616 = vunpack.c.l.b16 %v1594
    %v1617 = vunpack.c.l.b16 %v1595
    %v1618 = vunpack.c.l.b16 %v1596
    %v1619 = vpack.c.b16 %v1612, %v1611
    %v1620 = vpack.c.b16 %v1614, %v1613
    %v1621 = vpack.c.b16 %v1616, %v1615
    %v1622 = vpack.c.b16 %v1618, %v1617
    %v1628 = vsel %vm761, %v1597, 0
    %1630 = vmatprep.subr.bf16.mxu0 0
    %1631 = vmatpush1.bf16.msra.mxu0 %v1619
    %1632 = vmatprep.subr.bf16.mxu0 0
    %1633 = vmatpush1.bf16.msra.mxu0 %v1620
    %1634 = vmatprep.subr.bf16.mxu0 0
    %1635 = vmatpush1.bf16.msra.mxu0 %v1621
    %1636 = vmatprep.subr.bf16.mxu0 0
    %1637 = vmatpush1.bf16.msra.mxu0 %v1622
    %1638 = vmatprep.subr.bf16.mxu0 0
    %1639 = vmatpush1.bf16.msra.mxu0 0
    %1640 = vmatprep.subr.bf16.mxu0 0
    %1641 = vmatpush1.bf16.msra.mxu0 0
    %1642 = vmatprep.subr.bf16.mxu0 0
    %1643 = vmatpush1.bf16.msra.mxu0 0
    %1644 = vmatprep.subr.bf16.mxu0 0
    %1645 = vmatpush1.bf16.msra.mxu0 0
    %1646 = vmatprep.subr.bf16.mxu0 0
    %1647 = vmatpush1.bf16.msra.mxu0 0
    %1648 = vmatprep.subr.bf16.mxu0 0
    %1649 = vmatpush1.bf16.msra.mxu0 0
    %1650 = vmatprep.subr.bf16.mxu0 0
    %1651 = vmatpush1.bf16.msra.mxu0 0
    %1652 = vmatprep.subr.bf16.mxu0 0
    %1653 = vmatpush1.bf16.msra.mxu0 0
    %1654 = vmatprep.subr.bf16.mxu0 0
    %1655 = vmatpush1.bf16.msra.mxu0 0
    %1656 = vmatprep.subr.bf16.mxu0 0
    %1657 = vmatpush1.bf16.msra.mxu0 0
    %1658 = vmatprep.subr.bf16.mxu0 0
    %1659 = vmatpush1.bf16.msra.mxu0 0
    %1660 = vmatprep.subr.bf16.mxu0 0
    %1661 = vmatpush1.bf16.msra.mxu0 0
    %1662 = vmatprep.mubr.bf16.mxu0 0
    %1663 = vmatmul.mubr.bf16.gmra.mrb[0].mxu0 %v1628
    %v1664 = vpop.f32.mrb[0].mxu0
    %v1665 = vadd.f32 %v1602, %v1664
    %v1666 = vpop.f32.mrb[0].mxu0
    %v1667 = vpop.f32.mrb[0].mxu0
    %v1668 = vadd.f32 %v1602, %v1667
    %v1669 = vpop.f32.mrb[0].mxu0
    %1670 = vdwg.mxu0
    %v1671 = vadd.f32 %v1519, %v1665
    %v1672 = vadd.f32 %v1520, %v1668
    %v1673 = vsel %vm151, %v1671, 0.0
    %1674 = vadd.xlane.f32.xlu0 %v1673
    %v1675 = vpop.xlane.xlu0 %1674
    %v1676 = vsel %vm151, %v1672, 0.0
    %1677 = vadd.xlane.f32.xlu0 %v1676
    %v1678 = vpop.xlane.xlu0 %1677
    %v1679 = vmul.f32 %v1675, %v346
    %v1680 = vmul.f32 %v1678, %v346
    %v1681 = vsub.f32 %v1671, %v1679
    %v1682 = vsub.f32 %v1672, %v1680
    %v1683 = vmul.f32 %v1681, %v1681
    %v1684 = vmul.f32 %v1682, %v1682
    %v1685 = vsel %vm151, %v1683, 0.0
    %1686 = vadd.xlane.f32.xlu0 %v1685
    %v1687 = vpop.xlane.xlu0 %1686
    %v1688 = vsel %vm151, %v1684, 0.0
    %1689 = vadd.xlane.f32.xlu0 %v1688
    %v1690 = vpop.xlane.xlu0 %1689
    %v1691 = vmul.f32 %v1687, %v346
    %v1692 = vmul.f32 %v1690, %v346
    %v1693 = vadd.f32 %v1691, 1e-05
    %v1694 = vadd.f32 %v1692, 1e-05
    %v1695 = vrsqrt.pop %v1693
    %v1696 = vrsqrt.pop %v1694
    %v1697 = vmul.f32 %v1681, %v1695
    %v1698 = vmul.f32 %v1682, %v1696
    %v1699 = vld [vmem:[#allocation2 + $0x118] sm:$0x1]
    %v1700 = vlaneseq
    %v1701 = vshrl.u32 %v1700, 7
    %v1702 = vsub.s32 0, %v1701
    %v1703 = vrot.slane %v1699, %v1702
    %v1704 = vmul.f32 %v1697, %v1703
    %v1705 = vmul.f32 %v1698, %v1703
    %v1706 = vld [vmem:[#allocation2 + $0x120] sm:$0x1]
    %v1707 = vlaneseq
    %v1708 = vshrl.u32 %v1707, 7
    %v1709 = vsub.s32 0, %v1708
    %v1710 = vrot.slane %v1706, %v1709
    %v1711 = vadd.f32 %v1704, %v1710
    %v1712 = vadd.f32 %v1705, %v1710
    %v1713 = vpack.c.bf16 %v1712, %v1711
    %v1715 = vsel %vm151, %v1713, 0
    %1717 = vmatprep.subr.bf16.mxu0 0
    %1718 = vmatpush1.bf16.msra.mxu0 %v861
    %1719 = vmatprep.subr.bf16.mxu0 0
    %1720 = vmatpush1.bf16.msra.mxu0 %v862
    %1721 = vmatprep.subr.bf16.mxu0 0
    %1722 = vmatpush1.bf16.msra.mxu0 0
    %1723 = vmatprep.subr.bf16.mxu0 0
    %1724 = vmatpush1.bf16.msra.mxu0 0
    %1725 = vmatprep.subr.bf16.mxu0 0
    %1726 = vmatpush1.bf16.msra.mxu0 0
    %1727 = vmatprep.subr.bf16.mxu0 0
    %1728 = vmatpush1.bf16.msra.mxu0 0
    %1729 = vmatprep.subr.bf16.mxu0 0
    %1730 = vmatpush1.bf16.msra.mxu0 0
    %1731 = vmatprep.subr.bf16.mxu0 0
    %1732 = vmatpush1.bf16.msra.mxu0 0
    %1733 = vmatprep.subr.bf16.mxu0 0
    %1734 = vmatpush1.bf16.msra.mxu0 0
    %1735 = vmatprep.subr.bf16.mxu0 0
    %1736 = vmatpush1.bf16.msra.mxu0 0
    %1737 = vmatprep.subr.bf16.mxu0 0
    %1738 = vmatpush1.bf16.msra.mxu0 0
    %1739 = vmatprep.subr.bf16.mxu0 0
    %1740 = vmatpush1.bf16.msra.mxu0 0
    %1741 = vmatprep.subr.bf16.mxu0 0
    %1742 = vmatpush1.bf16.msra.mxu0 0
    %1743 = vmatprep.subr.bf16.mxu0 0
    %1744 = vmatpush1.bf16.msra.mxu0 0
    %1745 = vmatprep.subr.bf16.mxu0 0
    %1746 = vmatpush1.bf16.msra.mxu0 0
    %1747 = vmatprep.subr.bf16.mxu0 0
    %1748 = vmatpush1.bf16.msra.mxu0 0
    %1749 = vmatprep.mubr.bf16.mxu0 0
    %1750 = vmatmul.mubr.bf16.gmra.mrb[0].mxu0 %v1715
    %v1751 = vpop.f32.mrb[0].mxu0
    %v1752 = vadd.f32 0.0, %v1751
    %v1753 = vpop.f32.mrb[0].mxu0
    %v1754 = vpop.f32.mrb[0].mxu0
    %v1755 = vadd.f32 0.0, %v1754
    %v1756 = vpop.f32.mrb[0].mxu0
    %1757 = vdwg.mxu0
    %v1758 = vmul.f32 %v1752, %v909
    %v1759 = vmul.f32 %v1755, %v910
    %v1760 = vpack.c.bf16 %v1759, %v1758
    %1761 = vmatprep.subr.bf16.mxu0 0
    %1762 = vmatpush1.bf16.msra.mxu0 %v962
    %1763 = vmatprep.subr.bf16.mxu0 0
    %1764 = vmatpush1.bf16.msra.mxu0 %v963
    %1765 = vmatprep.subr.bf16.mxu0 0
    %1766 = vmatpush1.bf16.msra.mxu0 %v964
    %1767 = vmatprep.subr.bf16.mxu0 0
    %1768 = vmatpush1.bf16.msra.mxu0 %v965
    %1769 = vmatprep.subr.bf16.mxu0 0
    %1770 = vmatpush1.bf16.msra.mxu0 %v966
    %1771 = vmatprep.subr.bf16.mxu0 0
    %1772 = vmatpush1.bf16.msra.mxu0 %v967
    %1773 = vmatprep.subr.bf16.mxu0 0
    %1774 = vmatpush1.bf16.msra.mxu0 %v968
    %1775 = vmatprep.subr.bf16.mxu0 0
    %1776 = vmatpush1.bf16.msra.mxu0 %v969
    %1777 = vmatprep.subr.bf16.mxu0 0
    %1778 = vmatpush1.bf16.msra.mxu0 0
    %1779 = vmatprep.subr.bf16.mxu0 0
    %1780 = vmatpush1.bf16.msra.mxu0 0
    %1781 = vmatprep.subr.bf16.mxu0 0
    %1782 = vmatpush1.bf16.msra.mxu0 0
    %1783 = vmatprep.subr.bf16.mxu0 0
    %1784 = vmatpush1.bf16.msra.mxu0 0
    %1785 = vmatprep.subr.bf16.mxu0 0
    %1786 = vmatpush1.bf16.msra.mxu0 0
    %1787 = vmatprep.subr.bf16.mxu0 0
    %1788 = vmatpush1.bf16.msra.mxu0 0
    %1789 = vmatprep.subr.bf16.mxu0 0
    %1790 = vmatpush1.bf16.msra.mxu0 0
    %1791 = vmatprep.subr.bf16.mxu0 0
    %1792 = vmatpush1.bf16.msra.mxu0 0
    %1793 = vmatprep.mubr.bf16.mxu0 0
    %1794 = vmatmul.mubr.bf16.gmra.mrb[0].mxu0 %v1760
    %v1795 = vpop.f32.mrb[0].mxu0
    %v1796 = vadd.f32 0.0, %v1795
    %v1797 = vpop.f32.mrb[0].mxu0
    %v1798 = vpop.f32.mrb[0].mxu0
    %v1799 = vadd.f32 0.0, %v1798
    %v1800 = vpop.f32.mrb[0].mxu0
    %1801 = vdwg.mxu0
    %v1802 = vpack.c.bf16 %v1799, %v1796
    %1803 = vmatprep.subr.bf16.mxu0 0
    %1804 = vmatpush1.bf16.msra.mxu0 %v1802
    %1805 = vmatprep.subr.bf16.mxu0 0
    %1806 = vmatpush1.bf16.msra.mxu0 0
    %1807 = vmatprep.subr.bf16.mxu0 0
    %1808 = vmatpush1.bf16.msra.mxu0 0
    %1809 = vmatprep.subr.bf16.mxu0 0
    %1810 = vmatpush1.bf16.msra.mxu0 0
    %1811 = vmatprep.subr.bf16.mxu0 0
    %1812 = vmatpush1.bf16.msra.mxu0 0
    %1813 = vmatprep.subr.bf16.mxu0 0
    %1814 = vmatpush1.bf16.msra.mxu0 0
    %1815 = vmatprep.subr.bf16.mxu0 0
    %1816 = vmatpush1.bf16.msra.mxu0 0
    %1817 = vmatprep.subr.bf16.mxu0 0
    %1818 = vmatpush1.bf16.msra.mxu0 0
    %1819 = vmatprep.subr.bf16.mxu0 0
    %1820 = vmatpush1.bf16.msra.mxu0 0
    %1821 = vmatprep.subr.bf16.mxu0 0
    %1822 = vmatpush1.bf16.msra.mxu0 0
    %1823 = vmatprep.subr.bf16.mxu0 0
    %1824 = vmatpush1.bf16.msra.mxu0 0
    %1825 = vmatprep.subr.bf16.mxu0 0
    %1826 = vmatpush1.bf16.msra.mxu0 0
    %1827 = vmatprep.subr.bf16.mxu0 0
    %1828 = vmatpush1.bf16.msra.mxu0 0
    %1829 = vmatprep.subr.bf16.mxu0 0
    %1830 = vmatpush1.bf16.msra.mxu0 0
    %1831 = vmatprep.subr.bf16.mxu0 0
    %1832 = vmatpush1.bf16.msra.mxu0 0
    %1833 = vmatprep.subr.bf16.mxu0 0
    %1834 = vmatpush1.bf16.msra.mxu0 0
    %1835 = vmatprep.mubr.bf16.mxu0 0
    %1836 = vmatmul.mubr.bf16.gmra.mrb[0].mxu0 %v1027
    %v1837 = vpop.f32.mrb[0].mxu0
    %v1838 = vadd.f32 %v1025, %v1837
    %v1839 = vpop.f32.mrb[0].mxu0
    %v1840 = vpop.f32.mrb[0].mxu0
    %v1841 = vpop.f32.mrb[0].mxu0
    %1842 = vdwg.mxu0
    %v1843 = vsel %vm1069, %v1838, -inf
    %1844 = vmax.xlane.f32.xlu0 %v1843
    %v1845 = vpop.xlane.xlu0 %1844
    %v1846 = vsub.f32 %v1838, %v1845
    %v1847 = vmul.f32 %v1846, 1.442695
    %v1848 = vpow.pop %v1847
    %v1849 = vsel %vm1069, %v1848, 0.0
    %1850 = vadd.xlane.f32.xlu0 %v1849
    %v1851 = vpop.xlane.xlu0 %1850
    %v1852 = vrcp.pop %v1851
    %v1853 = vmul.f32 %v1848, %v1852
    %v1854 = vpack.c.bf16 %v1853, %v1853
    %v1856 = vsel %vm291, %v1854, 0
    %1858 = vmatprep.subr.bf16.mxu0 0
    %1859 = vmatpush1.bf16.msra.mxu0 %v1856
    %1860 = vmatprep.subr.bf16.mxu0 0
    %1861 = vmatpush1.bf16.msra.mxu0 0
    %1862 = vmatprep.subr.bf16.mxu0 0
    %1863 = vmatpush1.bf16.msra.mxu0 0
    %1864 = vmatprep.subr.bf16.mxu0 0
    %1865 = vmatpush1.bf16.msra.mxu0 0
    %1866 = vmatprep.subr.bf16.mxu0 0
    %1867 = vmatpush1.bf16.msra.mxu0 0
    %1868 = vmatprep.subr.bf16.mxu0 0
    %1869 = vmatpush1.bf16.msra.mxu0 0
    %1870 = vmatprep.subr.bf16.mxu0 0
    %1871 = vmatpush1.bf16.msra.mxu0 0
    %1872 = vmatprep.subr.bf16.mxu0 0
    %1873 = vmatpush1.bf16.msra.mxu0 0
    %1874 = vmatprep.subr.bf16.mxu0 0
    %1875 = vmatpush1.bf16.msra.mxu0 0
    %1876 = vmatprep.subr.bf16.mxu0 0
    %1877 = vmatpush1.bf16.msra.mxu0 0
    %1878 = vmatprep.subr.bf16.mxu0 0
    %1879 = vmatpush1.bf16.msra.mxu0 0
    %1880 = vmatprep.subr.bf16.mxu0 0
    %1881 = vmatpush1.bf16.msra.mxu0 0
    %1882 = vmatprep.subr.bf16.mxu0 0
    %1883 = vmatpush1.bf16.msra.mxu0 0
    %1884 = vmatprep.subr.bf16.mxu0 0
    %1885 = vmatpush1.bf16.msra.mxu0 0
    %1886 = vmatprep.subr.bf16.mxu0 0
    %1887 = vmatpush1.bf16.msra.mxu0 0
    %1888 = vmatprep.subr.bf16.mxu0 0
    %1889 = vmatpush1.bf16.msra.mxu0 0
    %1890 = vmatprep.mubr.bf16.mxu0 0
    %1891 = vmatmul.mubr.bf16.gmra.mrb[0].mxu0 %v289
    %v1892 = vpop.f32.mrb[0].mxu0
    %v1893 = vadd.f32 0.0, %v1892
    %v1894 = vpop.f32.mrb[0].mxu0
    %v1895 = vpop.f32.mrb[0].mxu0
    %v1896 = vadd.f32 0.0, %v1895
    %v1897 = vpop.f32.mrb[0].mxu0
    %1898 = vdwg.mxu0
    %v1899 = vmul.f32 %v1893, %v60
    %v1900 = vmul.f32 %v1896, %v61
    %v1901 = vpack.c.bf16 %v1900, %v1899
    %v1903 = vsel %vm487, %v1901, 0
    %1905 = vmatprep.subr.bf16.mxu0 0
    %1906 = vmatpush1.bf16.msra.mxu0 %v1140
    %1907 = vmatprep.subr.bf16.mxu0 0
    %1908 = vmatpush1.bf16.msra.mxu0 0
    %1909 = vmatprep.subr.bf16.mxu0 0
    %1910 = vmatpush1.bf16.msra.mxu0 0
    %1911 = vmatprep.subr.bf16.mxu0 0
    %1912 = vmatpush1.bf16.msra.mxu0 0
    %1913 = vmatprep.subr.bf16.mxu0 0
    %1914 = vmatpush1.bf16.msra.mxu0 0
    %1915 = vmatprep.subr.bf16.mxu0 0
    %1916 = vmatpush1.bf16.msra.mxu0 0
    %1917 = vmatprep.subr.bf16.mxu0 0
    %1918 = vmatpush1.bf16.msra.mxu0 0
    %1919 = vmatprep.subr.bf16.mxu0 0
    %1920 = vmatpush1.bf16.msra.mxu0 0
    %1921 = vmatprep.subr.bf16.mxu0 0
    %1922 = vmatpush1.bf16.msra.mxu0 0
    %1923 = vmatprep.subr.bf16.mxu0 0
    %1924 = vmatpush1.bf16.msra.mxu0 0
    %1925 = vmatprep.subr.bf16.mxu0 0
    %1926 = vmatpush1.bf16.msra.mxu0 0
    %1927 = vmatprep.subr.bf16.mxu0 0
    %1928 = vmatpush1.bf16.msra.mxu0 0
    %1929 = vmatprep.subr.bf16.mxu0 0
    %1930 = vmatpush1.bf16.msra.mxu0 0
    %1931 = vmatprep.subr.bf16.mxu0 0
    %1932 = vmatpush1.bf16.msra.mxu0 0
    %1933 = vmatprep.subr.bf16.mxu0 0
    %1934 = vmatpush1.bf16.msra.mxu0 0
    %1935 = vmatprep.subr.bf16.mxu0 0
    %1936 = vmatpush1.bf16.msra.mxu0 0
    %1937 = vmatprep.mubr.bf16.mxu0 0
    %1938 = vmatmul.mubr.bf16.gmra.mrb[0].mxu0 %v1903
    %v1939 = vpop.f32.mrb[0].mxu0
    %v1940 = vadd.f32 %v1135, %v1939
    %v1941 = vpop.f32.mrb[0].mxu0
    %v1942 = vpop.f32.mrb[0].mxu0
    %v1943 = vadd.f32 %v1135, %v1942
    %v1944 = vpop.f32.mrb[0].mxu0
    %1945 = vdwg.mxu0
    %v1946 = vmul.f32 %v1711, %v1190
    %v1947 = vmul.f32 %v1712, %v1190
    %v1948 = vpack.c.bf16 %v1943, %v1940
    %v1950 = vsel %vm487, %v1948, 0
    %1952 = vmatprep.subr.bf16.mxu0 0
    %1953 = vmatpush1.bf16.msra.mxu0 %v1200
    %1954 = vmatprep.subr.bf16.mxu0 0
    %1955 = vmatpush1.bf16.msra.mxu0 0
    %1956 = vmatprep.subr.bf16.mxu0 0
    %1957 = vmatpush1.bf16.msra.mxu0 0
    %1958 = vmatprep.subr.bf16.mxu0 0
    %1959 = vmatpush1.bf16.msra.mxu0 0
    %1960 = vmatprep.subr.bf16.mxu0 0
    %1961 = vmatpush1.bf16.msra.mxu0 0
    %1962 = vmatprep.subr.bf16.mxu0 0
    %1963 = vmatpush1.bf16.msra.mxu0 0
    %1964 = vmatprep.subr.bf16.mxu0 0
    %1965 = vmatpush1.bf16.msra.mxu0 0
    %1966 = vmatprep.subr.bf16.mxu0 0
    %1967 = vmatpush1.bf16.msra.mxu0 0
    %1968 = vmatprep.subr.bf16.mxu0 0
    %1969 = vmatpush1.bf16.msra.mxu0 0
    %1970 = vmatprep.subr.bf16.mxu0 0
    %1971 = vmatpush1.bf16.msra.mxu0 0
    %1972 = vmatprep.subr.bf16.mxu0 0
    %1973 = vmatpush1.bf16.msra.mxu0 0
    %1974 = vmatprep.subr.bf16.mxu0 0
    %1975 = vmatpush1.bf16.msra.mxu0 0
    %1976 = vmatprep.subr.bf16.mxu0 0
    %1977 = vmatpush1.bf16.msra.mxu0 0
    %1978 = vmatprep.subr.bf16.mxu0 0
    %1979 = vmatpush1.bf16.msra.mxu0 0
    %1980 = vmatprep.subr.bf16.mxu0 0
    %1981 = vmatpush1.bf16.msra.mxu0 0
    %1982 = vmatprep.subr.bf16.mxu0 0
    %1983 = vmatpush1.bf16.msra.mxu0 0
    %1984 = vmatprep.mubr.bf16.mxu0 0
    %1985 = vmatmul.mubr.bf16.gmra.mrb[0].mxu0 %v1950
    %v1986 = vpop.f32.mrb[0].mxu0
    %v1987 = vadd.f32 0.0, %v1986
    %v1988 = vpop.f32.mrb[0].mxu0
    %v1989 = vpop.f32.mrb[0].mxu0
    %v1990 = vadd.f32 0.0, %v1989
    %v1991 = vpop.f32.mrb[0].mxu0
    %1992 = vdwg.mxu0
    %v1993 = vadd.f32 %v1946, %v1987
    %v1994 = vadd.f32 %v1947, %v1990
    %v1995 = vpack.c.bf16 %v59, %v59
    %v1996 = vsel %vm487, %v1854, 0
    %v1999 = vsel %vm487, %v1995, 0
    %2001 = vmatprep.subr.bf16.mxu0 0
    %2002 = vmatpush1.bf16.xpose.msra.mxu0 %v1999
    %2003 = vmatprep.subr.bf16.mxu0 0
    %2004 = vmatpush1.bf16.xpose.msra.mxu0 0
    %2005 = vmatprep.subr.bf16.mxu0 0
    %2006 = vmatpush1.bf16.xpose.msra.mxu0 0
    %2007 = vmatprep.subr.bf16.mxu0 0
    %2008 = vmatpush1.bf16.xpose.msra.mxu0 0
    %2009 = vmatprep.subr.bf16.mxu0 0
    %2010 = vmatpush1.bf16.xpose.msra.mxu0 0
    %2011 = vmatprep.subr.bf16.mxu0 0
    %2012 = vmatpush1.bf16.xpose.msra.mxu0 0
    %2013 = vmatprep.subr.bf16.mxu0 0
    %2014 = vmatpush1.bf16.xpose.msra.mxu0 0
    %2015 = vmatprep.subr.bf16.mxu0 0
    %2016 = vmatpush1.bf16.xpose.msra.mxu0 0
    %2017 = vmatprep.subr.bf16.mxu0 0
    %2018 = vmatpush1.bf16.xpose.msra.mxu0 0
    %2019 = vmatprep.subr.bf16.mxu0 0
    %2020 = vmatpush1.bf16.xpose.msra.mxu0 0
    %2021 = vmatprep.subr.bf16.mxu0 0
    %2022 = vmatpush1.bf16.xpose.msra.mxu0 0
    %2023 = vmatprep.subr.bf16.mxu0 0
    %2024 = vmatpush1.bf16.xpose.msra.mxu0 0
    %2025 = vmatprep.subr.bf16.mxu0 0
    %2026 = vmatpush1.bf16.xpose.msra.mxu0 0
    %2027 = vmatprep.subr.bf16.mxu0 0
    %2028 = vmatpush1.bf16.xpose.msra.mxu0 0
    %2029 = vmatprep.subr.bf16.mxu0 0
    %2030 = vmatpush1.bf16.xpose.msra.mxu0 0
    %2031 = vmatprep.subr.bf16.mxu0 0
    %2032 = vmatpush1.bf16.xpose.msra.mxu0 0
    %2033 = vmatprep.mubr.bf16.mxu0 0
    %2034 = vmatmul.mubr.bf16.gmra.mrb[0].mxu0 %v1996
    %v2035 = vpop.f32.mrb[0].mxu0
    %v2036 = vadd.f32 0.0, %v2035
    %v2037 = vpop.f32.mrb[0].mxu0
    %v2038 = vpop.f32.mrb[0].mxu0
    %v2039 = vpop.f32.mrb[0].mxu0
    %2040 = vdwg.mxu0
    %v2041 = vld [vmem:[#allocation4 + $0x98] sm:$0xf]
    %v2042 = vld [vmem:[#allocation4 + $0x9c] sm:$0x3]
    %v2043 = vpack.c.bf16 %v2036, %v2036
    %v2046 = vunpack.c.l.b16 %v2041
    %v2047 = vunpack.c.l.b16 %v2042
    %v2048 = vpack.c.b16 %v2047, %v2046
    %v2050 = vsel %vm287, %v2048, 0
    %v2053 = vsel %vm291, %v2043, 0
    %2055 = vmatprep.subr.bf16.mxu0 0
    %2056 = vmatpush1.bf16.msra.mxu0 %v2053
    %2057 = vmatprep.subr.bf16.mxu0 0
    %2058 = vmatpush1.bf16.msra.mxu0 0
    %2059 = vmatprep.subr.bf16.mxu0 0
    %2060 = vmatpush1.bf16.msra.mxu0 0
    %2061 = vmatprep.subr.bf16.mxu0 0
    %2062 = vmatpush1.bf16.msra.mxu0 0
    %2063 = vmatprep.subr.bf16.mxu0 0
    %2064 = vmatpush1.bf16.msra.mxu0 0
    %2065 = vmatprep.subr.bf16.mxu0 0
    %2066 = vmatpush1.bf16.msra.mxu0 0
    %2067 = vmatprep.subr.bf16.mxu0 0
    %2068 = vmatpush1.bf16.msra.mxu0 0
    %2069 = vmatprep.subr.bf16.mxu0 0
    %2070 = vmatpush1.bf16.msra.mxu0 0
    %2071 = vmatprep.subr.bf16.mxu0 0
    %2072 = vmatpush1.bf16.msra.mxu0 0
    %2073 = vmatprep.subr.bf16.mxu0 0
    %2074 = vmatpush1.bf16.msra.mxu0 0
    %2075 = vmatprep.subr.bf16.mxu0 0
    %2076 = vmatpush1.bf16.msra.mxu0 0
    %2077 = vmatprep.subr.bf16.mxu0 0
    %2078 = vmatpush1.bf16.msra.mxu0 0
    %2079 = vmatprep.subr.bf16.mxu0 0
    %2080 = vmatpush1.bf16.msra.mxu0 0
    %2081 = vmatprep.subr.bf16.mxu0 0
    %2082 = vmatpush1.bf16.msra.mxu0 0
    %2083 = vmatprep.subr.bf16.mxu0 0
    %2084 = vmatpush1.bf16.msra.mxu0 0
    %2085 = vmatprep.subr.bf16.mxu0 0
    %2086 = vmatpush1.bf16.msra.mxu0 0
    %2087 = vmatprep.mubr.bf16.mxu0 0
    %2088 = vmatmul.mubr.bf16.gmra.mrb[0].mxu0 %v2050
    %v2089 = vpop.f32.mrb[0].mxu0
    %v2090 = vadd.f32 0.0, %v2089
    %v2091 = vpop.f32.mrb[0].mxu0
    %v2092 = vpop.f32.mrb[0].mxu0
    %v2093 = vadd.f32 0.0, %v2092
    %v2094 = vpop.f32.mrb[0].mxu0
    %2095 = vdwg.mxu0
    %v2096 = vld [vmem:[#allocation2 + $0xa8] sm:$0xff]
    %v2097 = vld [vmem:[#allocation2 + $0xb0] sm:$0xf]
    %v2098 = vmul.f32 %v2090, %v2096
    %v2099 = vmul.f32 %v2093, %v2097
    %vm2100 = vcmask 64512
    %v2101 = vsel %vm2100, %v2098, 0.0
    %2102 = vadd.xlane.f32.xlu0 %v2101
    %v2103 = vpop.xlane.xlu0 %2102
    %vm2104 = vcmask 60416
    %v2105 = vsel %vm2104, %v2099, 0.0
    %2106 = vadd.xlane.f32.xlu0 %v2105
    %v2107 = vpop.xlane.xlu0 %2106
    %v2108 = vld [vmem:[#allocation2 + $0xb8] sm:$0xff]
    %v2109 = vld [vmem:[#allocation2 + $0xc0] sm:$0xf]
    %v2110 = vsub.f32 %v2103, %v57
    %v2111 = vsub.f32 %v2107, %v58
    %v2112 = vmul.f32 %v2108, %v2110
    %v2113 = vmul.f32 %v2109, %v2111
    %v2114 = vld [vmem:[#allocation4 + $0x8] sm:$0x3]
    %v2115 = vpack.c.bf16 %v58, %v57
    %v2116 = vld [vmem:[#allocation2 + $0x18] sm:$0x1]
    %v2117 = vlaneseq
    %v2118 = vshrl.u32 %v2117, 7
    %v2119 = vsub.s32 0, %v2118
    %v2120 = vrot.slane %v2116, %v2119
    %v2122 = vsel %vm76, %v2115, 0
    %v2125 = vsel %vm80, %v2114, 0
    %2127 = vmatprep.subr.bf16.mxu0 0
    %2128 = vmatpush1.bf16.msra.mxu0 %v2125
    %2129 = vmatprep.subr.bf16.mxu0 0
    %2130 = vmatpush1.bf16.msra.mxu0 0
    %2131 = vmatprep.subr.bf16.mxu0 0
    %2132 = vmatpush1.bf16.msra.mxu0 0
    %2133 = vmatprep.subr.bf16.mxu0 0
    %2134 = vmatpush1.bf16.msra.mxu0 0
    %2135 = vmatprep.subr.bf16.mxu0 0
    %2136 = vmatpush1.bf16.msra.mxu0 0
    %2137 = vmatprep.subr.bf16.mxu0 0
    %2138 = vmatpush1.bf16.msra.mxu0 0
    %2139 = vmatprep.subr.bf16.mxu0 0
    %2140 = vmatpush1.bf16.msra.mxu0 0
    %2141 = vmatprep.subr.bf16.mxu0 0
    %2142 = vmatpush1.bf16.msra.mxu0 0
    %2143 = vmatprep.subr.bf16.mxu0 0
    %2144 = vmatpush1.bf16.msra.mxu0 0
    %2145 = vmatprep.subr.bf16.mxu0 0
    %2146 = vmatpush1.bf16.msra.mxu0 0
    %2147 = vmatprep.subr.bf16.mxu0 0
    %2148 = vmatpush1.bf16.msra.mxu0 0
    %2149 = vmatprep.subr.bf16.mxu0 0
    %2150 = vmatpush1.bf16.msra.mxu0 0
    %2151 = vmatprep.subr.bf16.mxu0 0
    %2152 = vmatpush1.bf16.msra.mxu0 0
    %2153 = vmatprep.subr.bf16.mxu0 0
    %2154 = vmatpush1.bf16.msra.mxu0 0
    %2155 = vmatprep.subr.bf16.mxu0 0
    %2156 = vmatpush1.bf16.msra.mxu0 0
    %2157 = vmatprep.subr.bf16.mxu0 0
    %2158 = vmatpush1.bf16.msra.mxu0 0
    %2159 = vmatprep.mubr.bf16.mxu0 0
    %2160 = vmatmul.mubr.bf16.gmra.mrb[0].mxu0 %v2122
    %v2161 = vpop.f32.mrb[0].mxu0
    %v2162 = vadd.f32 %v2120, %v2161
    %v2163 = vpop.f32.mrb[0].mxu0
    %v2164 = vpop.f32.mrb[0].mxu0
    %v2165 = vadd.f32 %v2120, %v2164
    %v2166 = vpop.f32.mrb[0].mxu0
    %2167 = vdwg.mxu0
    %v2168 = vld [vmem:[#allocation2 + $0x20] sm:$0x1]
    %2170 = vset.pattern.permute.xlu0 0
    %2171 = vperm.xlu0 %2170, %v2112
    %v2172 = vpop.permute.xlu0 %2171
    %2175 = vset.pattern.permute.xlu0 0
    %2176 = vperm.xlu0 %2175, %v2113
    %v2177 = vpop.permute.xlu0 %2176
    %v2179 = vlaneseq
    %v2180 = vshrl.u32 %v2179, 7
    %v2181 = vsub.s32 0, %v2180
    %v2182 = vrot.slane %v2168, %v2181
    %v2183 = vmul.f32 %v2172, %v2182
    %v2184 = vmul.f32 %v2177, %v2182
    %v2185 = vadd.f32 %v2162, %v2183
    %v2186 = vadd.f32 %v2165, %v2184
    %v2187 = vpack.c.bf16 %v2186, %v2185
    %v2189 = vsel %vm151, %v2187, 0
    %2191 = vmatprep.subr.bf16.mxu0 0
    %2192 = vmatpush1.bf16.msra.mxu0 %v147
    %2193 = vmatprep.subr.bf16.mxu0 0
    %2194 = vmatpush1.bf16.msra.mxu0 %v148
    %2195 = vmatprep.subr.bf16.mxu0 0
    %2196 = vmatpush1.bf16.msra.mxu0 0
    %2197 = vmatprep.subr.bf16.mxu0 0
    %2198 = vmatpush1.bf16.msra.mxu0 0
    %2199 = vmatprep.subr.bf16.mxu0 0
    %2200 = vmatpush1.bf16.msra.mxu0 0
    %2201 = vmatprep.subr.bf16.mxu0 0
    %2202 = vmatpush1.bf16.msra.mxu0 0
    %2203 = vmatprep.subr.bf16.mxu0 0
    %2204 = vmatpush1.bf16.msra.mxu0 0
    %2205 = vmatprep.subr.bf16.mxu0 0
    %2206 = vmatpush1.bf16.msra.mxu0 0
    %2207 = vmatprep.subr.bf16.mxu0 0
    %2208 = vmatpush1.bf16.msra.mxu0 0
    %2209 = vmatprep.subr.bf16.mxu0 0
    %2210 = vmatpush1.bf16.msra.mxu0 0
    %2211 = vmatprep.subr.bf16.mxu0 0
    %2212 = vmatpush1.bf16.msra.mxu0 0
    %2213 = vmatprep.subr.bf16.mxu0 0
    %2214 = vmatpush1.bf16.msra.mxu0 0
    %2215 = vmatprep.subr.bf16.mxu0 0
    %2216 = vmatpush1.bf16.msra.mxu0 0
    %2217 = vmatprep.subr.bf16.mxu0 0
    %2218 = vmatpush1.bf16.msra.mxu0 0
    %2219 = vmatprep.subr.bf16.mxu0 0
    %2220 = vmatpush1.bf16.msra.mxu0 0
    %2221 = vmatprep.subr.bf16.mxu0 0
    %2222 = vmatpush1.bf16.msra.mxu0 0
    %2223 = vmatprep.mubr.bf16.mxu0 0
    %2224 = vmatmul.mubr.bf16.gmra.mrb[0].mxu0 %v2189
    %v2225 = vpop.f32.mrb[0].mxu0
    %v2226 = vadd.f32 %v138, %v2225
    %v2227 = vpop.f32.mrb[0].mxu0
    %v2228 = vpop.f32.mrb[0].mxu0
    %v2229 = vadd.f32 %v138, %v2228
    %v2230 = vpop.f32.mrb[0].mxu0
    %2231 = vdwg.mxu0
    %v2232 = vsel %vm151, %v2226, -inf
    %2233 = vmax.xlane.f32.xlu0 %v2232
    %v2234 = vpop.xlane.xlu0 %2233
    %vm2235 = vcmask 257024
    %v2236 = vsel %vm2235, %v2229, -inf
    %2237 = vmax.xlane.f32.xlu0 %v2236
    %v2238 = vpop.xlane.xlu0 %2237
    %v2239 = vsub.f32 %v2226, %v2234
    %v2240 = vsub.f32 %v2229, %v2238
    %v2241 = vmul.f32 %v2239, 1.442695
    %v2242 = vpow.pop %v2241
    %v2243 = vmul.f32 %v2240, 1.442695
    %v2244 = vpow.pop %v2243
    %v2245 = vsel %vm151, %v2242, 0.0
    %2246 = vadd.xlane.f32.xlu0 %v2245
    %v2247 = vpop.xlane.xlu0 %2246
    %v2248 = vsel %vm2235, %v2244, 0.0
    %2249 = vadd.xlane.f32.xlu0 %v2248
    %v2250 = vpop.xlane.xlu0 %2249
    %v2251 = vrcp.pop %v2247
    %v2252 = vrcp.pop %v2250
    %v2253 = vmul.f32 %v2242, %v2251
    %v2254 = vmul.f32 %v2244, %v2252
    %2255 = vmatprep.subr.bf16.mxu0 0
    %2256 = vmatpush1.bf16.msra.mxu0 %v293
    %2257 = vmatprep.subr.bf16.mxu0 0
    %2258 = vmatpush1.bf16.msra.mxu0 0
    %2259 = vmatprep.subr.bf16.mxu0 0
    %2260 = vmatpush1.bf16.msra.mxu0 0
    %2261 = vmatprep.subr.bf16.mxu0 0
    %2262 = vmatpush1.bf16.msra.mxu0 0
    %2263 = vmatprep.subr.bf16.mxu0 0
    %2264 = vmatpush1.bf16.msra.mxu0 0
    %2265 = vmatprep.subr.bf16.mxu0 0
    %2266 = vmatpush1.bf16.msra.mxu0 0
    %2267 = vmatprep.subr.bf16.mxu0 0
    %2268 = vmatpush1.bf16.msra.mxu0 0
    %2269 = vmatprep.subr.bf16.mxu0 0
    %2270 = vmatpush1.bf16.msra.mxu0 0
    %2271 = vmatprep.subr.bf16.mxu0 0
    %2272 = vmatpush1.bf16.msra.mxu0 0
    %2273 = vmatprep.subr.bf16.mxu0 0
    %2274 = vmatpush1.bf16.msra.mxu0 0
    %2275 = vmatprep.subr.bf16.mxu0 0
    %2276 = vmatpush1.bf16.msra.mxu0 0
    %2277 = vmatprep.subr.bf16.mxu0 0
    %2278 = vmatpush1.bf16.msra.mxu0 0
    %2279 = vmatprep.subr.bf16.mxu0 0
    %2280 = vmatpush1.bf16.msra.mxu0 0
    %2281 = vmatprep.subr.bf16.mxu0 0
    %2282 = vmatpush1.bf16.msra.mxu0 0
    %2283 = vmatprep.subr.bf16.mxu0 0
    %2284 = vmatpush1.bf16.msra.mxu0 0
    %2285 = vmatprep.subr.bf16.mxu0 0
    %2286 = vmatpush1.bf16.msra.mxu0 0
    %2287 = vmatprep.mubr.bf16.mxu0 0
    %2288 = vmatmul.mubr.bf16.gmra.mrb[0].mxu0 %v2050
    %v2289 = vpop.f32.mrb[0].mxu0
    %v2290 = vadd.f32 0.0, %v2289
    %v2291 = vpop.f32.mrb[0].mxu0
    %v2292 = vpop.f32.mrb[0].mxu0
    %v2293 = vadd.f32 0.0, %v2292
    %v2294 = vpop.f32.mrb[0].mxu0
    %2295 = vdwg.mxu0
    %v2296 = vmul.f32 %v2253, %v2290
    %v2297 = vmul.f32 %v2254, %v2293
    %v2298 = vadd.f32 %v2185, %v2296
    %v2299 = vadd.f32 %v2186, %v2297
    %v2300 = vsel %vm151, %v2298, 0.0
    %2301 = vadd.xlane.f32.xlu0 %v2300
    %v2302 = vpop.xlane.xlu0 %2301
    %v2303 = vsel %vm2235, %v2299, 0.0
    %2304 = vadd.xlane.f32.xlu0 %v2303
    %v2305 = vpop.xlane.xlu0 %2304
    %v2306 = vmul.f32 %v2302, %v346
    %v2307 = vmul.f32 %v2305, %v346
    %v2308 = vsub.f32 %v2298, %v2306
    %v2309 = vsub.f32 %v2299, %v2307
    %v2310 = vmul.f32 %v2308, %v2308
    %v2311 = vmul.f32 %v2309, %v2309
    %v2312 = vsel %vm151, %v2310, 0.0
    %2313 = vadd.xlane.f32.xlu0 %v2312
    %v2314 = vpop.xlane.xlu0 %2313
    %v2315 = vsel %vm2235, %v2311, 0.0
    %2316 = vadd.xlane.f32.xlu0 %v2315
    %v2317 = vpop.xlane.xlu0 %2316
    %v2318 = vmul.f32 %v2314, %v346
    %v2319 = vmul.f32 %v2317, %v346
    %v2320 = vadd.f32 %v2318, 1e-05
    %v2321 = vadd.f32 %v2319, 1e-05
    %v2322 = vrsqrt.pop %v2320
    %v2323 = vrsqrt.pop %v2321
    %v2324 = vmul.f32 %v2308, %v2322
    %v2325 = vmul.f32 %v2309, %v2323
    %v2326 = vmul.f32 %v2324, %v371
    %v2327 = vmul.f32 %v2325, %v371
    %v2328 = vadd.f32 %v2326, %v378
    %v2329 = vadd.f32 %v2327, %v378
    %v2330 = vld [vmem:[#allocation4 + $0x148] sm:$0xf]
    %v2331 = vld [vmem:[#allocation4 + $0x14c] sm:$0xf]
    %v2332 = vld [vmem:[#allocation4 + $0x150] sm:$0xf]
    %v2333 = vld [vmem:[#allocation4 + $0x154] sm:$0xf]
    %v2334 = vpack.c.bf16 %v2329, %v2328
    %v2339 = vunpack.c.l.b16 %v2330
    %v2340 = vunpack.c.l.b16 %v2331
    %v2341 = vunpack.c.l.b16 %v2332
    %v2342 = vunpack.c.l.b16 %v2333
    %v2343 = vpack.c.b16 %v2340, %v2339
    %v2344 = vpack.c.b16 %v2342, %v2341
    %v2348 = vsel %vm151, %v2334, 0
    %2350 = vmatprep.subr.bf16.mxu0 0
    %2351 = vmatpush1.bf16.msra.mxu0 %v2343
    %2352 = vmatprep.subr.bf16.mxu0 0
    %2353 = vmatpush1.bf16.msra.mxu0 %v2344
    %2354 = vmatprep.subr.bf16.mxu0 0
    %2355 = vmatpush1.bf16.msra.mxu0 0
    %2356 = vmatprep.subr.bf16.mxu0 0
    %2357 = vmatpush1.bf16.msra.mxu0 0
    %2358 = vmatprep.subr.bf16.mxu0 0
    %2359 = vmatpush1.bf16.msra.mxu0 0
    %2360 = vmatprep.subr.bf16.mxu0 0
    %2361 = vmatpush1.bf16.msra.mxu0 0
    %2362 = vmatprep.subr.bf16.mxu0 0
    %2363 = vmatpush1.bf16.msra.mxu0 0
    %2364 = vmatprep.subr.bf16.mxu0 0
    %2365 = vmatpush1.bf16.msra.mxu0 0
    %2366 = vmatprep.subr.bf16.mxu0 0
    %2367 = vmatpush1.bf16.msra.mxu0 0
    %2368 = vmatprep.subr.bf16.mxu0 0
    %2369 = vmatpush1.bf16.msra.mxu0 0
    %2370 = vmatprep.subr.bf16.mxu0 0
    %2371 = vmatpush1.bf16.msra.mxu0 0
    %2372 = vmatprep.subr.bf16.mxu0 0
    %2373 = vmatpush1.bf16.msra.mxu0 0
    %2374 = vmatprep.subr.bf16.mxu0 0
    %2375 = vmatpush1.bf16.msra.mxu0 0
    %2376 = vmatprep.subr.bf16.mxu0 0
    %2377 = vmatpush1.bf16.msra.mxu0 0
    %2378 = vmatprep.subr.bf16.mxu0 0
    %2379 = vmatpush1.bf16.msra.mxu0 0
    %2380 = vmatprep.subr.bf16.mxu0 0
    %2381 = vmatpush1.bf16.msra.mxu0 0
    %2382 = vmatprep.mubr.bf16.mxu0 0
    %2383 = vmatmul.mubr.bf16.gmra.mrb[0].mxu0 %v2348
    %v2384 = vpop.f32.mrb[0].mxu0
    %v2385 = vadd.f32 0.0, %v2384
    %v2386 = vpop.f32.mrb[0].mxu0
    %v2387 = vpop.f32.mrb[0].mxu0
    %v2388 = vadd.f32 0.0, %v2387
    %v2389 = vpop.f32.mrb[0].mxu0
    %2390 = vdwg.mxu0
    %v2391 = vpack.c.bf16 %v2388, %v2385
    %v2393 = vsel %vm151, %v2391, 0
    %2395 = vmatprep.subr.bf16.mxu0 0
    %2396 = vmatpush1.bf16.xpose.msra.mxu0 %v2348
    %2397 = vmatprep.subr.bf16.mxu0 0
    %2398 = vmatpush1.bf16.xpose.msra.mxu0 0
    %2399 = vmatprep.subr.bf16.mxu0 0
    %2400 = vmatpush1.bf16.xpose.msra.mxu0 0
    %2401 = vmatprep.subr.bf16.mxu0 0
    %2402 = vmatpush1.bf16.xpose.msra.mxu0 0
    %2403 = vmatprep.subr.bf16.mxu0 0
    %2404 = vmatpush1.bf16.xpose.msra.mxu0 0
    %2405 = vmatprep.subr.bf16.mxu0 0
    %2406 = vmatpush1.bf16.xpose.msra.mxu0 0
    %2407 = vmatprep.subr.bf16.mxu0 0
    %2408 = vmatpush1.bf16.xpose.msra.mxu0 0
    %2409 = vmatprep.subr.bf16.mxu0 0
    %2410 = vmatpush1.bf16.xpose.msra.mxu0 0
    %2411 = vmatprep.subr.bf16.mxu0 0
    %2412 = vmatpush1.bf16.xpose.msra.mxu0 0
    %2413 = vmatprep.subr.bf16.mxu0 0
    %2414 = vmatpush1.bf16.xpose.msra.mxu0 0
    %2415 = vmatprep.subr.bf16.mxu0 0
    %2416 = vmatpush1.bf16.xpose.msra.mxu0 0
    %2417 = vmatprep.subr.bf16.mxu0 0
    %2418 = vmatpush1.bf16.xpose.msra.mxu0 0
    %2419 = vmatprep.subr.bf16.mxu0 0
    %2420 = vmatpush1.bf16.xpose.msra.mxu0 0
    %2421 = vmatprep.subr.bf16.mxu0 0
    %2422 = vmatpush1.bf16.xpose.msra.mxu0 0
    %2423 = vmatprep.subr.bf16.mxu0 0
    %2424 = vmatpush1.bf16.xpose.msra.mxu0 0
    %2425 = vmatprep.subr.bf16.mxu0 0
    %2426 = vmatpush1.bf16.xpose.msra.mxu0 0
    %2427 = vmatprep.mubr.bf16.mxu0 0
    %2428 = vmatmul.mubr.bf16.gmra.mrb[0].mxu0 %v2393
    %v2429 = vpop.f32.mrb[0].mxu0
    %v2430 = vadd.f32 %v65, %v2429
    %v2431 = vpop.f32.mrb[0].mxu0
    %v2432 = vpop.f32.mrb[0].mxu0
    %v2433 = vadd.f32 %v66, %v2432
    %v2434 = vpop.f32.mrb[0].mxu0
    %2435 = vdwg.mxu0
    %v2436 = vsel %vm231, %v2430, -inf
    %2437 = vmax.xlane.f32.xlu0 %v2436
    %v2438 = vpop.xlane.xlu0 %2437
    %vm2439 = vcmask 93184
    %v2440 = vsel %vm2439, %v2433, -inf
    %2441 = vmax.xlane.f32.xlu0 %v2440
    %v2442 = vpop.xlane.xlu0 %2441
    %v2443 = vsub.f32 %v2430, %v2438
    %v2444 = vsub.f32 %v2433, %v2442
    %v2445 = vmul.f32 %v2443, 1.442695
    %v2446 = vpow.pop %v2445
    %v2447 = vmul.f32 %v2444, 1.442695
    %v2448 = vpow.pop %v2447
    %v2449 = vsel %vm231, %v2446, 0.0
    %2450 = vadd.xlane.f32.xlu0 %v2449
    %v2451 = vpop.xlane.xlu0 %2450
    %v2452 = vsel %vm2439, %v2448, 0.0
    %2453 = vadd.xlane.f32.xlu0 %v2452
    %v2454 = vpop.xlane.xlu0 %2453
    %v2455 = vrcp.pop %v2451
    %v2456 = vrcp.pop %v2454
    %v2457 = vmul.f32 %v2446, %v2455
    %v2458 = vmul.f32 %v2448, %v2456
    %v2459 = vld [vmem:[#allocation4 + $0x158] sm:$0xf]
    %v2460 = vld [vmem:[#allocation4 + $0x15c] sm:$0xf]
    %v2461 = vld [vmem:[#allocation4 + $0x160] sm:$0xf]
    %v2462 = vld [vmem:[#allocation4 + $0x164] sm:$0xf]
    %v2467 = vunpack.c.l.b16 %v2459
    %v2468 = vunpack.c.l.b16 %v2460
    %v2469 = vunpack.c.l.b16 %v2461
    %v2470 = vunpack.c.l.b16 %v2462
    %v2471 = vpack.c.b16 %v2468, %v2467
    %v2472 = vpack.c.b16 %v2470, %v2469
    %2475 = vmatprep.subr.bf16.mxu0 0
    %2476 = vmatpush1.bf16.msra.mxu0 %v2471
    %2477 = vmatprep.subr.bf16.mxu0 0
    %2478 = vmatpush1.bf16.msra.mxu0 %v2472
    %2479 = vmatprep.subr.bf16.mxu0 0
    %2480 = vmatpush1.bf16.msra.mxu0 0
    %2481 = vmatprep.subr.bf16.mxu0 0
    %2482 = vmatpush1.bf16.msra.mxu0 0
    %2483 = vmatprep.subr.bf16.mxu0 0
    %2484 = vmatpush1.bf16.msra.mxu0 0
    %2485 = vmatprep.subr.bf16.mxu0 0
    %2486 = vmatpush1.bf16.msra.mxu0 0
    %2487 = vmatprep.subr.bf16.mxu0 0
    %2488 = vmatpush1.bf16.msra.mxu0 0
    %2489 = vmatprep.subr.bf16.mxu0 0
    %2490 = vmatpush1.bf16.msra.mxu0 0
    %2491 = vmatprep.subr.bf16.mxu0 0
    %2492 = vmatpush1.bf16.msra.mxu0 0
    %2493 = vmatprep.subr.bf16.mxu0 0
    %2494 = vmatpush1.bf16.msra.mxu0 0
    %2495 = vmatprep.subr.bf16.mxu0 0
    %2496 = vmatpush1.bf16.msra.mxu0 0
    %2497 = vmatprep.subr.bf16.mxu0 0
    %2498 = vmatpush1.bf16.msra.mxu0 0
    %2499 = vmatprep.subr.bf16.mxu0 0
    %2500 = vmatpush1.bf16.msra.mxu0 0
    %2501 = vmatprep.subr.bf16.mxu0 0
    %2502 = vmatpush1.bf16.msra.mxu0 0
    %2503 = vmatprep.subr.bf16.mxu0 0
    %2504 = vmatpush1.bf16.msra.mxu0 0
    %2505 = vmatprep.subr.bf16.mxu0 0
    %2506 = vmatpush1.bf16.msra.mxu0 0
    %2507 = vmatprep.mubr.bf16.mxu0 0
    %2508 = vmatmul.mubr.bf16.gmra.mrb[0].mxu0 %v2348
    %v2509 = vpop.f32.mrb[0].mxu0
    %v2510 = vadd.f32 0.0, %v2509
    %v2511 = vpop.f32.mrb[0].mxu0
    %v2512 = vpop.f32.mrb[0].mxu0
    %v2513 = vadd.f32 0.0, %v2512
    %v2514 = vpop.f32.mrb[0].mxu0
    %2515 = vdwg.mxu0
    %v2516 = vpack.c.bf16 %v2458, %v2457
    %v2517 = vpack.c.bf16 %v2513, %v2510
    %v2519 = vsel %vm231, %v2516, 0
    %v2522 = vsel %vm235, %v2517, 0
    %2524 = vmatprep.subr.bf16.mxu0 0
    %2525 = vmatpush1.bf16.msra.mxu0 %v2522
    %2526 = vmatprep.subr.bf16.mxu0 0
    %2527 = vmatpush1.bf16.msra.mxu0 0
    %2528 = vmatprep.subr.bf16.mxu0 0
    %2529 = vmatpush1.bf16.msra.mxu0 0
    %2530 = vmatprep.subr.bf16.mxu0 0
    %2531 = vmatpush1.bf16.msra.mxu0 0
    %2532 = vmatprep.subr.bf16.mxu0 0
    %2533 = vmatpush1.bf16.msra.mxu0 0
    %2534 = vmatprep.subr.bf16.mxu0 0
    %2535 = vmatpush1.bf16.msra.mxu0 0
    %2536 = vmatprep.subr.bf16.mxu0 0
    %2537 = vmatpush1.bf16.msra.mxu0 0
    %2538 = vmatprep.subr.bf16.mxu0 0
    %2539 = vmatpush1.bf16.msra.mxu0 0
    %2540 = vmatprep.subr.bf16.mxu0 0
    %2541 = vmatpush1.bf16.msra.mxu0 0
    %2542 = vmatprep.subr.bf16.mxu0 0
    %2543 = vmatpush1.bf16.msra.mxu0 0
    %2544 = vmatprep.subr.bf16.mxu0 0
    %2545 = vmatpush1.bf16.msra.mxu0 0
    %2546 = vmatprep.subr.bf16.mxu0 0
    %2547 = vmatpush1.bf16.msra.mxu0 0
    %2548 = vmatprep.subr.bf16.mxu0 0
    %2549 = vmatpush1.bf16.msra.mxu0 0
    %2550 = vmatprep.subr.bf16.mxu0 0
    %2551 = vmatpush1.bf16.msra.mxu0 0
    %2552 = vmatprep.subr.bf16.mxu0 0
    %2553 = vmatpush1.bf16.msra.mxu0 0
    %2554 = vmatprep.subr.bf16.mxu0 0
    %2555 = vmatpush1.bf16.msra.mxu0 0
    %2556 = vmatprep.mubr.bf16.mxu0 0
    %2557 = vmatmul.mubr.bf16.gmra.mrb[0].mxu0 %v2519
    %v2558 = vpop.f32.mrb[0].mxu0
    %v2559 = vadd.f32 0.0, %v2558
    %v2560 = vpop.f32.mrb[0].mxu0
    %v2561 = vpop.f32.mrb[0].mxu0
    %v2562 = vadd.f32 0.0, %v2561
    %v2563 = vpop.f32.mrb[0].mxu0
    %2564 = vdwg.mxu0
    %v2565 = vadd.f32 %v2328, %v2559
    %v2566 = vadd.f32 %v2329, %v2562
    %v2567 = vsel %vm151, %v2565, 0.0
    %2568 = vadd.xlane.f32.xlu0 %v2567
    %v2569 = vpop.xlane.xlu0 %2568
    %v2570 = vsel %vm2235, %v2566, 0.0
    %2571 = vadd.xlane.f32.xlu0 %v2570
    %v2572 = vpop.xlane.xlu0 %2571
    %v2573 = vmul.f32 %v2569, %v346
    %v2574 = vmul.f32 %v2572, %v346
    %v2575 = vsub.f32 %v2565, %v2573
    %v2576 = vsub.f32 %v2566, %v2574
    %v2577 = vmul.f32 %v2575, %v2575
    %v2578 = vmul.f32 %v2576, %v2576
    %v2579 = vsel %vm151, %v2577, 0.0
    %2580 = vadd.xlane.f32.xlu0 %v2579
    %v2581 = vpop.xlane.xlu0 %2580
    %v2582 = vsel %vm2235, %v2578, 0.0
    %2583 = vadd.xlane.f32.xlu0 %v2582
    %v2584 = vpop.xlane.xlu0 %2583
    %v2585 = vmul.f32 %v2581, %v346
    %v2586 = vmul.f32 %v2584, %v346
    %v2587 = vadd.f32 %v2585, 1e-05
    %v2588 = vadd.f32 %v2586, 1e-05
    %v2589 = vrsqrt.pop %v2587
    %v2590 = vrsqrt.pop %v2588
    %v2591 = vmul.f32 %v2575, %v2589
    %v2592 = vmul.f32 %v2576, %v2590
    %v2593 = vld [vmem:[#allocation2 + $0x138] sm:$0x1]
    %v2594 = vlaneseq
    %v2595 = vshrl.u32 %v2594, 7
    %v2596 = vsub.s32 0, %v2595
    %v2597 = vrot.slane %v2593, %v2596
    %v2598 = vmul.f32 %v2591, %v2597
    %v2599 = vmul.f32 %v2592, %v2597
    %v2600 = vld [vmem:[#allocation2 + $0x140] sm:$0x1]
    %v2601 = vlaneseq
    %v2602 = vshrl.u32 %v2601, 7
    %v2603 = vsub.s32 0, %v2602
    %v2604 = vrot.slane %v2600, %v2603
    %v2605 = vadd.f32 %v2598, %v2604
    %v2606 = vadd.f32 %v2599, %v2604
    %v2607 = vld [vmem:[#allocation4 + $0x168] sm:$0xf]
    %v2608 = vld [vmem:[#allocation4 + $0x16c] sm:$0xf]
    %v2609 = vld [vmem:[#allocation4 + $0x170] sm:$0xf]
    %v2610 = vld [vmem:[#allocation4 + $0x174] sm:$0xf]
    %v2611 = vpack.c.bf16 %v2606, %v2605
    %v2616 = vunpack.c.l.b16 %v2607
    %v2617 = vunpack.c.l.b16 %v2608
    %v2618 = vunpack.c.l.b16 %v2609
    %v2619 = vunpack.c.l.b16 %v2610
    %v2620 = vpack.c.b16 %v2617, %v2616
    %v2621 = vpack.c.b16 %v2619, %v2618
    %v2625 = vsel %vm151, %v2611, 0
    %2627 = vmatprep.subr.bf16.mxu0 0
    %2628 = vmatpush1.bf16.msra.mxu0 %v2620
    %2629 = vmatprep.subr.bf16.mxu0 0
    %2630 = vmatpush1.bf16.msra.mxu0 %v2621
    %2631 = vmatprep.subr.bf16.mxu0 0
    %2632 = vmatpush1.bf16.msra.mxu0 0
    %2633 = vmatprep.subr.bf16.mxu0 0
    %2634 = vmatpush1.bf16.msra.mxu0 0
    %2635 = vmatprep.subr.bf16.mxu0 0
    %2636 = vmatpush1.bf16.msra.mxu0 0
    %2637 = vmatprep.subr.bf16.mxu0 0
    %2638 = vmatpush1.bf16.msra.mxu0 0
    %2639 = vmatprep.subr.bf16.mxu0 0
    %2640 = vmatpush1.bf16.msra.mxu0 0
    %2641 = vmatprep.subr.bf16.mxu0 0
    %2642 = vmatpush1.bf16.msra.mxu0 0
    %2643 = vmatprep.subr.bf16.mxu0 0
    %2644 = vmatpush1.bf16.msra.mxu0 0
    %2645 = vmatprep.subr.bf16.mxu0 0
    %2646 = vmatpush1.bf16.msra.mxu0 0
    %2647 = vmatprep.subr.bf16.mxu0 0
    %2648 = vmatpush1.bf16.msra.mxu0 0
    %2649 = vmatprep.subr.bf16.mxu0 0
    %2650 = vmatpush1.bf16.msra.mxu0 0
    %2651 = vmatprep.subr.bf16.mxu0 0
    %2652 = vmatpush1.bf16.msra.mxu0 0
    %2653 = vmatprep.subr.bf16.mxu0 0
    %2654 = vmatpush1.bf16.msra.mxu0 0
    %2655 = vmatprep.subr.bf16.mxu0 0
    %2656 = vmatpush1.bf16.msra.mxu0 0
    %2657 = vmatprep.subr.bf16.mxu0 0
    %2658 = vmatpush1.bf16.msra.mxu0 0
    %2659 = vmatprep.mubr.bf16.mxu0 0
    %2660 = vmatmul.mubr.bf16.gmra.mrb[0].mxu0 %v2625
    %v2661 = vpop.f32.mrb[0].mxu0
    %v2662 = vadd.f32 0.0, %v2661
    %v2663 = vpop.f32.mrb[0].mxu0
    %v2664 = vpop.f32.mrb[0].mxu0
    %v2665 = vadd.f32 0.0, %v2664
    %v2666 = vpop.f32.mrb[0].mxu0
    %2667 = vdwg.mxu0
    %v2668 = vpack.c.bf16 %v2665, %v2662
    %v2669 = vpack.c.bf16 %v1994, %v1993
    %v2671 = vsel %vm151, %v2668, 0
    %v2674 = vsel %vm151, %v2669, 0
    %2676 = vmatprep.subr.bf16.mxu0 0
    %2677 = vmatpush1.bf16.xpose.msra.mxu0 %v2674
    %2678 = vmatprep.subr.bf16.mxu0 0
    %2679 = vmatpush1.bf16.xpose.msra.mxu0 0
    %2680 = vmatprep.subr.bf16.mxu0 0
    %2681 = vmatpush1.bf16.xpose.msra.mxu0 0
    %2682 = vmatprep.subr.bf16.mxu0 0
    %2683 = vmatpush1.bf16.xpose.msra.mxu0 0
    %2684 = vmatprep.subr.bf16.mxu0 0
    %2685 = vmatpush1.bf16.xpose.msra.mxu0 0
    %2686 = vmatprep.subr.bf16.mxu0 0
    %2687 = vmatpush1.bf16.xpose.msra.mxu0 0
    %2688 = vmatprep.subr.bf16.mxu0 0
    %2689 = vmatpush1.bf16.xpose.msra.mxu0 0
    %2690 = vmatprep.subr.bf16.mxu0 0
    %2691 = vmatpush1.bf16.xpose.msra.mxu0 0
    %2692 = vmatprep.subr.bf16.mxu0 0
    %2693 = vmatpush1.bf16.xpose.msra.mxu0 0
    %2694 = vmatprep.subr.bf16.mxu0 0
    %2695 = vmatpush1.bf16.xpose.msra.mxu0 0
    %2696 = vmatprep.subr.bf16.mxu0 0
    %2697 = vmatpush1.bf16.xpose.msra.mxu0 0
    %2698 = vmatprep.subr.bf16.mxu0 0
    %2699 = vmatpush1.bf16.xpose.msra.mxu0 0
    %2700 = vmatprep.subr.bf16.mxu0 0
    %2701 = vmatpush1.bf16.xpose.msra.mxu0 0
    %2702 = vmatprep.subr.bf16.mxu0 0
    %2703 = vmatpush1.bf16.xpose.msra.mxu0 0
    %2704 = vmatprep.subr.bf16.mxu0 0
    %2705 = vmatpush1.bf16.xpose.msra.mxu0 0
    %2706 = vmatprep.subr.bf16.mxu0 0
    %2707 = vmatpush1.bf16.xpose.msra.mxu0 0
    %2708 = vmatprep.mubr.bf16.mxu0 0
    %2709 = vmatmul.mubr.bf16.gmra.mrb[0].mxu0 %v2671
    %v2710 = vpop.f32.mrb[0].mxu0
    %v2711 = vadd.f32 %v67, %v2710
    %v2712 = vpop.f32.mrb[0].mxu0
    %v2713 = vpop.f32.mrb[0].mxu0
    %v2714 = vadd.f32 %v68, %v2713
    %v2715 = vpop.f32.mrb[0].mxu0
    %2716 = vdwg.mxu0
    %v2717 = vsel %vm487, %v2711, -inf
    %2718 = vmax.xlane.f32.xlu0 %v2717
    %v2719 = vpop.xlane.xlu0 %2718
    %vm2720 = vcmask 125952
    %v2721 = vsel %vm2720, %v2714, -inf
    %2722 = vmax.xlane.f32.xlu0 %v2721
    %v2723 = vpop.xlane.xlu0 %2722
    %v2724 = vsub.f32 %v2711, %v2719
    %v2725 = vsub.f32 %v2714, %v2723
    %v2726 = vmul.f32 %v2724, 1.442695
    %v2727 = vpow.pop %v2726
    %v2728 = vmul.f32 %v2725, 1.442695
    %v2729 = vpow.pop %v2728
    %v2730 = vsel %vm487, %v2727, 0.0
    %2731 = vadd.xlane.f32.xlu0 %v2730
    %v2732 = vpop.xlane.xlu0 %2731
    %v2733 = vsel %vm2720, %v2729, 0.0
    %2734 = vadd.xlane.f32.xlu0 %v2733
    %v2735 = vpop.xlane.xlu0 %2734
    %v2736 = vrcp.pop %v2732
    %v2737 = vrcp.pop %v2735
    %v2738 = vmul.f32 %v2727, %v2736
    %v2739 = vmul.f32 %v2729, %v2737
    %v2740 = vld [vmem:[#allocation4 + $0x178] sm:$0xf]
    %v2741 = vld [vmem:[#allocation4 + $0x17c] sm:$0xf]
    %v2742 = vld [vmem:[#allocation4 + $0x180] sm:$0xf]
    %v2743 = vld [vmem:[#allocation4 + $0x184] sm:$0xf]
    %v2748 = vunpack.c.l.b16 %v2740
    %v2749 = vunpack.c.l.b16 %v2741
    %v2750 = vunpack.c.l.b16 %v2742
    %v2751 = vunpack.c.l.b16 %v2743
    %v2752 = vpack.c.b16 %v2749, %v2748
    %v2753 = vpack.c.b16 %v2751, %v2750
    %2756 = vmatprep.subr.bf16.mxu0 0
    %2757 = vmatpush1.bf16.msra.mxu0 %v2752
    %2758 = vmatprep.subr.bf16.mxu0 0
    %2759 = vmatpush1.bf16.msra.mxu0 %v2753
    %2760 = vmatprep.subr.bf16.mxu0 0
    %2761 = vmatpush1.bf16.msra.mxu0 0
    %2762 = vmatprep.subr.bf16.mxu0 0
    %2763 = vmatpush1.bf16.msra.mxu0 0
    %2764 = vmatprep.subr.bf16.mxu0 0
    %2765 = vmatpush1.bf16.msra.mxu0 0
    %2766 = vmatprep.subr.bf16.mxu0 0
    %2767 = vmatpush1.bf16.msra.mxu0 0
    %2768 = vmatprep.subr.bf16.mxu0 0
    %2769 = vmatpush1.bf16.msra.mxu0 0
    %2770 = vmatprep.subr.bf16.mxu0 0
    %2771 = vmatpush1.bf16.msra.mxu0 0
    %2772 = vmatprep.subr.bf16.mxu0 0
    %2773 = vmatpush1.bf16.msra.mxu0 0
    %2774 = vmatprep.subr.bf16.mxu0 0
    %2775 = vmatpush1.bf16.msra.mxu0 0
    %2776 = vmatprep.subr.bf16.mxu0 0
    %2777 = vmatpush1.bf16.msra.mxu0 0
    %2778 = vmatprep.subr.bf16.mxu0 0
    %2779 = vmatpush1.bf16.msra.mxu0 0
    %2780 = vmatprep.subr.bf16.mxu0 0
    %2781 = vmatpush1.bf16.msra.mxu0 0
    %2782 = vmatprep.subr.bf16.mxu0 0
    %2783 = vmatpush1.bf16.msra.mxu0 0
    %2784 = vmatprep.subr.bf16.mxu0 0
    %2785 = vmatpush1.bf16.msra.mxu0 0
    %2786 = vmatprep.subr.bf16.mxu0 0
    %2787 = vmatpush1.bf16.msra.mxu0 0
    %2788 = vmatprep.mubr.bf16.mxu0 0
    %2789 = vmatmul.mubr.bf16.gmra.mrb[0].mxu0 %v2674
    %v2790 = vpop.f32.mrb[0].mxu0
    %v2791 = vadd.f32 0.0, %v2790
    %v2792 = vpop.f32.mrb[0].mxu0
    %v2793 = vpop.f32.mrb[0].mxu0
    %v2794 = vadd.f32 0.0, %v2793
    %v2795 = vpop.f32.mrb[0].mxu0
    %2796 = vdwg.mxu0
    %v2797 = vpack.c.bf16 %v2739, %v2738
    %v2798 = vpack.c.bf16 %v2794, %v2791
    %v2800 = vsel %vm487, %v2797, 0
    %2802 = vmatprep.subr.bf16.mxu0 0
    %2803 = vmatpush1.bf16.msra.mxu0 %v2798
    %2804 = vmatprep.subr.bf16.mxu0 0
    %2805 = vmatpush1.bf16.msra.mxu0 0
    %2806 = vmatprep.subr.bf16.mxu0 0
    %2807 = vmatpush1.bf16.msra.mxu0 0
    %2808 = vmatprep.subr.bf16.mxu0 0
    %2809 = vmatpush1.bf16.msra.mxu0 0
    %2810 = vmatprep.subr.bf16.mxu0 0
    %2811 = vmatpush1.bf16.msra.mxu0 0
    %2812 = vmatprep.subr.bf16.mxu0 0
    %2813 = vmatpush1.bf16.msra.mxu0 0
    %2814 = vmatprep.subr.bf16.mxu0 0
    %2815 = vmatpush1.bf16.msra.mxu0 0
    %2816 = vmatprep.subr.bf16.mxu0 0
    %2817 = vmatpush1.bf16.msra.mxu0 0
    %2818 = vmatprep.subr.bf16.mxu0 0
    %2819 = vmatpush1.bf16.msra.mxu0 0
    %2820 = vmatprep.subr.bf16.mxu0 0
    %2821 = vmatpush1.bf16.msra.mxu0 0
    %2822 = vmatprep.subr.bf16.mxu0 0
    %2823 = vmatpush1.bf16.msra.mxu0 0
    %2824 = vmatprep.subr.bf16.mxu0 0
    %2825 = vmatpush1.bf16.msra.mxu0 0
    %2826 = vmatprep.subr.bf16.mxu0 0
    %2827 = vmatpush1.bf16.msra.mxu0 0
    %2828 = vmatprep.subr.bf16.mxu0 0
    %2829 = vmatpush1.bf16.msra.mxu0 0
    %2830 = vmatprep.subr.bf16.mxu0 0
    %2831 = vmatpush1.bf16.msra.mxu0 0
    %2832 = vmatprep.subr.bf16.mxu0 0
    %2833 = vmatpush1.bf16.msra.mxu0 0
    %2834 = vmatprep.mubr.bf16.mxu0 0
    %2835 = vmatmul.mubr.bf16.gmra.mrb[0].mxu0 %v2800
    %v2836 = vpop.f32.mrb[0].mxu0
    %v2837 = vadd.f32 0.0, %v2836
    %v2838 = vpop.f32.mrb[0].mxu0
    %v2839 = vpop.f32.mrb[0].mxu0
    %v2840 = vadd.f32 0.0, %v2839
    %v2841 = vpop.f32.mrb[0].mxu0
    %2842 = vdwg.mxu0
    %v2843 = vadd.f32 %v2605, %v2837
    %v2844 = vadd.f32 %v2606, %v2840
    %v2845 = vsel %vm151, %v2843, 0.0
    %2846 = vadd.xlane.f32.xlu0 %v2845
    %v2847 = vpop.xlane.xlu0 %2846
    %v2848 = vsel %vm2235, %v2844, 0.0
    %2849 = vadd.xlane.f32.xlu0 %v2848
    %v2850 = vpop.xlane.xlu0 %2849
    %v2851 = vmul.f32 %v2847, %v346
    %v2852 = vmul.f32 %v2850, %v346
    %v2853 = vsub.f32 %v2843, %v2851
    %v2854 = vsub.f32 %v2844, %v2852
    %v2855 = vmul.f32 %v2853, %v2853
    %v2856 = vmul.f32 %v2854, %v2854
    %v2857 = vsel %vm151, %v2855, 0.0
    %2858 = vadd.xlane.f32.xlu0 %v2857
    %v2859 = vpop.xlane.xlu0 %2858
    %v2860 = vsel %vm2235, %v2856, 0.0
    %2861 = vadd.xlane.f32.xlu0 %v2860
    %v2862 = vpop.xlane.xlu0 %2861
    %v2863 = vmul.f32 %v2859, %v346
    %v2864 = vmul.f32 %v2862, %v346
    %v2865 = vadd.f32 %v2863, 1e-05
    %v2866 = vadd.f32 %v2864, 1e-05
    %v2867 = vrsqrt.pop %v2865
    %v2868 = vrsqrt.pop %v2866
    %v2869 = vmul.f32 %v2853, %v2867
    %v2870 = vmul.f32 %v2854, %v2868
    %v2871 = vld [vmem:[#allocation2 + $0x148] sm:$0x1]
    %v2872 = vlaneseq
    %v2873 = vshrl.u32 %v2872, 7
    %v2874 = vsub.s32 0, %v2873
    %v2875 = vrot.slane %v2871, %v2874
    %v2876 = vmul.f32 %v2869, %v2875
    %v2877 = vmul.f32 %v2870, %v2875
    %v2878 = vld [vmem:[#allocation2 + $0x150] sm:$0x1]
    %v2879 = vlaneseq
    %v2880 = vshrl.u32 %v2879, 7
    %v2881 = vsub.s32 0, %v2880
    %v2882 = vrot.slane %v2878, %v2881
    %v2883 = vadd.f32 %v2876, %v2882
    %v2884 = vadd.f32 %v2877, %v2882
    %v2885 = vld [vmem:[#allocation4 + $0x188] sm:$0xf]
    %v2886 = vld [vmem:[#allocation4 + $0x18c] sm:$0xf]
    %v2887 = vld [vmem:[#allocation4 + $0x190] sm:$0xf]
    %v2888 = vld [vmem:[#allocation4 + $0x194] sm:$0xf]
    %v2889 = vpack.c.bf16 %v2884, %v2883
    %v2890 = vld [vmem:[#allocation2 + $0x128] sm:$0x1]
    %v2891 = vlaneseq
    %v2892 = vshrl.u32 %v2891, 7
    %v2893 = vsub.s32 0, %v2892
    %v2894 = vrot.slane %v2890, %v2893
    %v2899 = vunpack.c.l.b16 %v2885
    %v2900 = vunpack.c.l.b16 %v2886
    %v2901 = vunpack.c.l.b16 %v2887
    %v2902 = vunpack.c.l.b16 %v2888
    %v2903 = vpack.c.b16 %v2900, %v2899
    %v2904 = vpack.c.b16 %v2902, %v2901
    %v2908 = vsel %vm151, %v2889, 0
    %2910 = vmatprep.subr.bf16.mxu0 0
    %2911 = vmatpush1.bf16.msra.mxu0 %v2903
    %2912 = vmatprep.subr.bf16.mxu0 0
    %2913 = vmatpush1.bf16.msra.mxu0 %v2904
    %2914 = vmatprep.subr.bf16.mxu0 0
    %2915 = vmatpush1.bf16.msra.mxu0 0
    %2916 = vmatprep.subr.bf16.mxu0 0
    %2917 = vmatpush1.bf16.msra.mxu0 0
    %2918 = vmatprep.subr.bf16.mxu0 0
    %2919 = vmatpush1.bf16.msra.mxu0 0
    %2920 = vmatprep.subr.bf16.mxu0 0
    %2921 = vmatpush1.bf16.msra.mxu0 0
    %2922 = vmatprep.subr.bf16.mxu0 0
    %2923 = vmatpush1.bf16.msra.mxu0 0
    %2924 = vmatprep.subr.bf16.mxu0 0
    %2925 = vmatpush1.bf16.msra.mxu0 0
    %2926 = vmatprep.subr.bf16.mxu0 0
    %2927 = vmatpush1.bf16.msra.mxu0 0
    %2928 = vmatprep.subr.bf16.mxu0 0
    %2929 = vmatpush1.bf16.msra.mxu0 0
    %2930 = vmatprep.subr.bf16.mxu0 0
    %2931 = vmatpush1.bf16.msra.mxu0 0
    %2932 = vmatprep.subr.bf16.mxu0 0
    %2933 = vmatpush1.bf16.msra.mxu0 0
    %2934 = vmatprep.subr.bf16.mxu0 0
    %2935 = vmatpush1.bf16.msra.mxu0 0
    %2936 = vmatprep.subr.bf16.mxu0 0
    %2937 = vmatpush1.bf16.msra.mxu0 0
    %2938 = vmatprep.subr.bf16.mxu0 0
    %2939 = vmatpush1.bf16.msra.mxu0 0
    %2940 = vmatprep.subr.bf16.mxu0 0
    %2941 = vmatpush1.bf16.msra.mxu0 0
    %2942 = vmatprep.mubr.bf16.mxu0 0
    %2943 = vmatmul.mubr.bf16.gmra.mrb[0].mxu0 %v2908
    %v2944 = vpop.f32.mrb[0].mxu0
    %v2945 = vadd.f32 %v2894, %v2944
    %v2946 = vpop.f32.mrb[0].mxu0
    %v2947 = vpop.f32.mrb[0].mxu0
    %v2948 = vadd.f32 %v2894, %v2947
    %v2949 = vpop.f32.mrb[0].mxu0
    %2950 = vdwg.mxu0
    %v2951 = vmax.f32 %v2945, 0.0
    %v2952 = vmax.f32 %v2948, 0.0
    %v2953 = vld [vmem:[#allocation4 + $0x198] sm:$0xf]
    %v2954 = vld [vmem:[#allocation4 + $0x19c] sm:$0xf]
    %v2955 = vld [vmem:[#allocation4 + $0x1a0] sm:$0xf]
    %v2956 = vld [vmem:[#allocation4 + $0x1a4] sm:$0xf]
    %v2957 = vld [vmem:[#allocation4 + $0x1a8] sm:$0xf]
    %v2958 = vld [vmem:[#allocation4 + $0x1ac] sm:$0xf]
    %v2959 = vld [vmem:[#allocation4 + $0x1b0] sm:$0xf]
    %v2960 = vld [vmem:[#allocation4 + $0x1b4] sm:$0xf]
    %v2961 = vpack.c.bf16 %v2952, %v2951
    %v2962 = vld [vmem:[#allocation2 + $0x130] sm:$0x1]
    %v2963 = vlaneseq
    %v2964 = vshrl.u32 %v2963, 7
    %v2965 = vsub.s32 0, %v2964
    %v2966 = vrot.slane %v2962, %v2965
    %v2975 = vunpack.c.l.b16 %v2953
    %v2976 = vunpack.c.l.b16 %v2954
    %v2977 = vunpack.c.l.b16 %v2955
    %v2978 = vunpack.c.l.b16 %v2956
    %v2979 = vunpack.c.l.b16 %v2957
    %v2980 = vunpack.c.l.b16 %v2958
    %v2981 = vunpack.c.l.b16 %v2959
    %v2982 = vunpack.c.l.b16 %v2960
    %v2983 = vpack.c.b16 %v2976, %v2975
    %v2984 = vpack.c.b16 %v2978, %v2977
    %v2985 = vpack.c.b16 %v2980, %v2979
    %v2986 = vpack.c.b16 %v2982, %v2981
    %v2992 = vsel %vm761, %v2961, 0
    %2994 = vmatprep.subr.bf16.mxu0 0
    %2995 = vmatpush1.bf16.msra.mxu0 %v2983
    %2996 = vmatprep.subr.bf16.mxu0 0
    %2997 = vmatpush1.bf16.msra.mxu0 %v2984
    %2998 = vmatprep.subr.bf16.mxu0 0
    %2999 = vmatpush1.bf16.msra.mxu0 %v2985
    %3000 = vmatprep.subr.bf16.mxu0 0
    %3001 = vmatpush1.bf16.msra.mxu0 %v2986
    %3002 = vmatprep.subr.bf16.mxu0 0
    %3003 = vmatpush1.bf16.msra.mxu0 0
    %3004 = vmatprep.subr.bf16.mxu0 0
    %3005 = vmatpush1.bf16.msra.mxu0 0
    %3006 = vmatprep.subr.bf16.mxu0 0
    %3007 = vmatpush1.bf16.msra.mxu0 0
    %3008 = vmatprep.subr.bf16.mxu0 0
    %3009 = vmatpush1.bf16.msra.mxu0 0
    %3010 = vmatprep.subr.bf16.mxu0 0
    %3011 = vmatpush1.bf16.msra.mxu0 0
    %3012 = vmatprep.subr.bf16.mxu0 0
    %3013 = vmatpush1.bf16.msra.mxu0 0
    %3014 = vmatprep.subr.bf16.mxu0 0
    %3015 = vmatpush1.bf16.msra.mxu0 0
    %3016 = vmatprep.subr.bf16.mxu0 0
    %3017 = vmatpush1.bf16.msra.mxu0 0
    %3018 = vmatprep.subr.bf16.mxu0 0
    %3019 = vmatpush1.bf16.msra.mxu0 0
    %3020 = vmatprep.subr.bf16.mxu0 0
    %3021 = vmatpush1.bf16.msra.mxu0 0
    %3022 = vmatprep.subr.bf16.mxu0 0
    %3023 = vmatpush1.bf16.msra.mxu0 0
    %3024 = vmatprep.subr.bf16.mxu0 0
    %3025 = vmatpush1.bf16.msra.mxu0 0
    %3026 = vmatprep.mubr.bf16.mxu0 0
    %3027 = vmatmul.mubr.bf16.gmra.mrb[0].mxu0 %v2992
    %v3028 = vpop.f32.mrb[0].mxu0
    %v3029 = vadd.f32 %v2966, %v3028
    %v3030 = vpop.f32.mrb[0].mxu0
    %v3031 = vpop.f32.mrb[0].mxu0
    %v3032 = vadd.f32 %v2966, %v3031
    %v3033 = vpop.f32.mrb[0].mxu0
    %3034 = vdwg.mxu0
    %v3035 = vadd.f32 %v2883, %v3029
    %v3036 = vadd.f32 %v2884, %v3032
    %v3037 = vsel %vm151, %v3035, 0.0
    %3038 = vadd.xlane.f32.xlu0 %v3037
    %v3039 = vpop.xlane.xlu0 %3038
    %v3040 = vsel %vm2235, %v3036, 0.0
    %3041 = vadd.xlane.f32.xlu0 %v3040
    %v3042 = vpop.xlane.xlu0 %3041
    %v3043 = vmul.f32 %v3039, %v346
    %v3044 = vmul.f32 %v3042, %v346
    %v3045 = vsub.f32 %v3035, %v3043
    %v3046 = vsub.f32 %v3036, %v3044
    %v3047 = vmul.f32 %v3045, %v3045
    %v3048 = vmul.f32 %v3046, %v3046
    %v3049 = vsel %vm151, %v3047, 0.0
    %3050 = vadd.xlane.f32.xlu0 %v3049
    %v3051 = vpop.xlane.xlu0 %3050
    %v3052 = vsel %vm2235, %v3048, 0.0
    %3053 = vadd.xlane.f32.xlu0 %v3052
    %v3054 = vpop.xlane.xlu0 %3053
    %v3055 = vmul.f32 %v3051, %v346
    %v3056 = vmul.f32 %v3054, %v346
    %v3057 = vadd.f32 %v3055, 1e-05
    %v3058 = vadd.f32 %v3056, 1e-05
    %v3059 = vrsqrt.pop %v3057
    %v3060 = vrsqrt.pop %v3058
    %v3061 = vmul.f32 %v3045, %v3059
    %v3062 = vmul.f32 %v3046, %v3060
    %v3063 = vld [vmem:[#allocation2 + $0x158] sm:$0x1]
    %v3064 = vlaneseq
    %v3065 = vshrl.u32 %v3064, 7
    %v3066 = vsub.s32 0, %v3065
    %v3067 = vrot.slane %v3063, %v3066
    %v3068 = vmul.f32 %v3061, %v3067
    %v3069 = vmul.f32 %v3062, %v3067
    %v3070 = vld [vmem:[#allocation2 + $0x160] sm:$0x1]
    %v3071 = vlaneseq
    %v3072 = vshrl.u32 %v3071, 7
    %v3073 = vsub.s32 0, %v3072
    %v3074 = vrot.slane %v3070, %v3073
    %v3075 = vadd.f32 %v3068, %v3074
    %v3076 = vadd.f32 %v3069, %v3074
    %v3077 = vld [vmem:[#allocation4 + $0x10] sm:$0x1]
    %v3078 = vpack.c.bf16 %v3076, %v3075
    %v3079 = vld [vmem:[#allocation2 + $0x28] sm:$0x1]
    %3081 = vset.pattern.permute.xlu0 0
    %3082 = vperm.xlu0 %3081, %v3079
    %v3083 = vpop.permute.xlu0 %3082
    %v3086 = vsel %vm151, %v3077, 0
    %v3089 = vsel %vm151, %v3078, 0
    %3091 = vmatprep.subr.bf16.mxu0 0
    %3092 = vmatpush1.bf16.xpose.msra.mxu0 %v3089
    %3093 = vmatprep.subr.bf16.mxu0 0
    %3094 = vmatpush1.bf16.xpose.msra.mxu0 0
    %3095 = vmatprep.subr.bf16.mxu0 0
    %3096 = vmatpush1.bf16.xpose.msra.mxu0 0
    %3097 = vmatprep.subr.bf16.mxu0 0
    %3098 = vmatpush1.bf16.xpose.msra.mxu0 0
    %3099 = vmatprep.subr.bf16.mxu0 0
    %3100 = vmatpush1.bf16.xpose.msra.mxu0 0
    %3101 = vmatprep.subr.bf16.mxu0 0
    %3102 = vmatpush1.bf16.xpose.msra.mxu0 0
    %3103 = vmatprep.subr.bf16.mxu0 0
    %3104 = vmatpush1.bf16.xpose.msra.mxu0 0
    %3105 = vmatprep.subr.bf16.mxu0 0
    %3106 = vmatpush1.bf16.xpose.msra.mxu0 0
    %3107 = vmatprep.subr.bf16.mxu0 0
    %3108 = vmatpush1.bf16.xpose.msra.mxu0 0
    %3109 = vmatprep.subr.bf16.mxu0 0
    %3110 = vmatpush1.bf16.xpose.msra.mxu0 0
    %3111 = vmatprep.subr.bf16.mxu0 0
    %3112 = vmatpush1.bf16.xpose.msra.mxu0 0
    %3113 = vmatprep.subr.bf16.mxu0 0
    %3114 = vmatpush1.bf16.xpose.msra.mxu0 0
    %3115 = vmatprep.subr.bf16.mxu0 0
    %3116 = vmatpush1.bf16.xpose.msra.mxu0 0
    %3117 = vmatprep.subr.bf16.mxu0 0
    %3118 = vmatpush1.bf16.xpose.msra.mxu0 0
    %3119 = vmatprep.subr.bf16.mxu0 0
    %3120 = vmatpush1.bf16.xpose.msra.mxu0 0
    %3121 = vmatprep.subr.bf16.mxu0 0
    %3122 = vmatpush1.bf16.xpose.msra.mxu0 0
    %3123 = vmatprep.mubr.bf16.mxu0 0
    %3124 = vmatmul.mubr.bf16.gmra.mrb[0].mxu0 %v3086
    %v3125 = vpop.f32.mrb[0].mxu0
    %v3126 = vadd.f32 %v3083, %v3125
    %v3127 = vpop.f32.mrb[0].mxu0
    %v3128 = vpop.f32.mrb[0].mxu0
    %v3129 = vpop.f32.mrb[0].mxu0
    %3130 = vdwg.mxu0
    %vm3131 = vcmask 90112
    %3132 = vst.msk [vmem:[%s7] sm:$0x1] %vm3131, %v3126
    // Predicated region
    $region38: #{_lambda_.1} parent=1 // pred_check
      _
    $region39: #{_lambda_.1} parent=1 // pred_check_branch
      %3134 = sbr.rel (0) target = $region41
    $region40: #{_lambda_.1} parent=1 // pred_region
      _
    $region41: #{_lambda_.1} parent=1 // pred_fallthru
      _
    // Predicated region
    $region42: #{_lambda_.1} parent=1 // pred_check
      _
    $region43: #{_lambda_.1} parent=1 // pred_check_branch
      %3136 = sbr.rel (0) target = $region45
    $region44: #{_lambda_.1} parent=1 // pred_region
      _
    $region45: #{_lambda_.1} parent=1 // pred_fallthru
      _
    %3137 = vsyncpa [#allocation3], 1
    %3138 = vsyncpa [#allocation5], 1

</llo_original>
